<compile_context>
chip_gen: v7x
topology: tpu7x:2x2x1
jax: 0.10.0
libtpu: 0.0.40
codegen_flags: <defaults>
</compile_context>

<pallas_src>
import functools

import jax
import jax.numpy as jnp
import numpy as np
from jax import lax
from jax.experimental import pallas as pl
from jax.experimental.pallas import tpu as pltpu

EPS = 1e-5                      # nn.BatchNorm2d eps (track_running_stats=False -> batch stats)
LANE = 128                      # TPU lane width: channel dim padded to a multiple of this
VMEM_LIMIT = 48 * 1024 * 1024   # safe on v5e/v6e (128 MiB) and v7x (64 MiB physical)


def _round_up(v, m):
    return (v + m - 1) // m * m


def _compiler_params():
    return pltpu.CompilerParams(dimension_semantics=("parallel",),
                                vmem_limit_bytes=VMEM_LIMIT)


# ---------------------------------------------------------------------------
# In-kernel helpers
# ---------------------------------------------------------------------------
def _partial_moments(acc):
    """Per-channel (sum, sum_sq) of a (rows, C) f32 tile -> (2, C)."""
    s1 = jnp.sum(acc, axis=0, keepdims=True)
    s2 = jnp.sum(acc * acc, axis=0, keepdims=True)
    return jnp.concatenate([s1, s2], axis=0)


def _write_padded(pad_ref, interior):
    """Write `interior` (h, w, c) into pad_ref (h+2, w+2, c) with a zero 1-px halo.

    Only the halo strips are zeroed — the interior is fully overwritten every grid
    step — which is far less vst work than clearing the whole scratch each step.
    """
    h, w, c = interior.shape
    zr = jnp.zeros((1, w + 2, c), pad_ref.dtype)
    zc = jnp.zeros((h, 1, c), pad_ref.dtype)
    pad_ref[0:1, :, :] = zr                       # top halo row
    pad_ref[h + 1:h + 2, :, :] = zr               # bottom halo row
    pad_ref[1:h + 1, 0:1, :] = zc                 # left halo column
    pad_ref[1:h + 1, w + 1:w + 2, :] = zc         # right halo column
    pad_ref[1:h + 1, 1:w + 1, :] = interior.astype(pad_ref.dtype)


def _conv3x3_im2col(pad_ref, w_ref, ho, wo, stride):
    """ONE MXU matmul: (ho*wo, 9*Cin) patch @ (9*Cin, Cout) weights -> f32 acc."""
    cin = pad_ref.shape[-1]
    cols = []
    for dy in range(3):
        for dx in range(3):
            if stride == 1:
                win = pad_ref[dy:dy + ho, dx:dx + wo, :]
            else:  # strided window read straight off the VMEM scratch
                win = pad_ref[pl.ds(dy, ho, stride), pl.ds(dx, wo, stride), :]
            cols.append(win.reshape(ho * wo, cin))
    patch = jnp.concatenate(cols, axis=-1).astype(w_ref.dtype)      # (ho*wo, 9*Cin)
    return jnp.dot(patch, w_ref[...], preferred_element_type=jnp.float32)


# ---------------------------------------------------------------------------
# Pallas kernels (grid over batch; all blocks lane-dense, channels padded to 128)
# ---------------------------------------------------------------------------
def _conv1_kernel(*refs, stride, has_proj):
    """conv1 (3x3, stride) [+ fused 1x1 projection shortcut] + partial BN moments."""
    if has_proj:
        x_ref, w1_ref, wsc_ref, y1_ref, ysc_ref, st_ref, pad_ref = refs
    else:
        x_ref, w1_ref, y1_ref, st_ref, pad_ref = refs
    _, h, w, _ = x_ref.shape
    _, ho, wo, co = y1_ref.shape

    x = x_ref[0]                                          # (h, w, Ci)
    _write_padded(pad_ref, x)                             # VMEM-only halo, no HBM pad

    acc = _conv3x3_im2col(pad_ref, w1_ref, ho, wo, stride)  # (ho*wo, Co) f32
    y1_ref[...] = acc.reshape(1, ho, wo, co).astype(y1_ref.dtype)
    moments = _partial_moments(acc)                       # (2, Co)

    if has_proj:                                          # 1x1 (strided) projection shortcut
        if stride == 1:
            xs = x
        else:
            xs = x_ref[0, pl.ds(0, ho, stride), pl.ds(0, wo, stride), :]
        acc_sc = jnp.dot(xs.reshape(ho * wo, xs.shape[-1]).astype(wsc_ref.dtype),
                         wsc_ref[...], preferred_element_type=jnp.float32)
        ysc_ref[...] = acc_sc.reshape(1, ho, wo, co).astype(ysc_ref.dtype)
        moments = jnp.concatenate([moments, _partial_moments(acc_sc)], axis=0)  # (4, Co)

    st_ref[0] = moments


def _conv2_kernel(y1_ref, ss1_ref, w2_ref, y2_ref, st2_ref, pad_ref):
    """Fused BN1 (folded scale/shift) + ReLU + conv2 (3x3 stride 1) + partial moments."""
    _, ho, wo, co = y1_ref.shape
    t = jnp.maximum(y1_ref[0].astype(jnp.float32) * ss1_ref[0:1, :] + ss1_ref[1:2, :], 0.0)
    _write_padded(pad_ref, t)
    acc = _conv3x3_im2col(pad_ref, w2_ref, ho, wo, 1)
    st2_ref[0] = _partial_moments(acc)
    y2_ref[...] = acc.reshape(1, ho, wo, co).astype(y2_ref.dtype)


def _bn_add_relu_kernel(*refs, has_proj):
    """out = relu(bn2(conv2_out) + shortcut); projection-BN folded, identity fast path."""
    if has_proj:
        y2_ref, sc_ref, ss2_ref, sssc_ref, out_ref = refs
    else:
        y2_ref, sc_ref, ss2_ref, out_ref = refs
    y = y2_ref[...].astype(jnp.float32) * ss2_ref[0:1, :] + ss2_ref[1:2, :]
    s = sc_ref[...].astype(jnp.float32)
    if has_proj:
        s = s * sssc_ref[0:1, :] + sssc_ref[1:2, :]
    out_ref[...] = jnp.maximum(y + s, 0.0)


# ---------------------------------------------------------------------------
# Wrapper: layout plumbing, channel padding, cross-tile BN stat folding
# ---------------------------------------------------------------------------
def _bn_fold(partial_moments, count, gamma, beta):
    """Fold batch-stat BN into stacked (2, C) [scale; shift]: y = x*scale + shift."""
    tot = jnp.sum(partial_moments.astype(jnp.float32), axis=0)        # (2, C)
    mean = tot[0] / count
    var = jnp.maximum(tot[1] / count - mean * mean, 0.0)              # E[x^2] - E[x]^2
    inv = lax.rsqrt(var + EPS)
    scale = inv if gamma is None else gamma.reshape(-1) * inv
    shift = -mean * scale if beta is None else beta.reshape(-1) - mean * scale
    return jnp.stack([scale, shift], axis=0).astype(jnp.float32)      # (2, C)


def basic_block_forward(x_nchw, params, *, stride, compute_dtype=jnp.float32):
    """BasicBlock.forward: relu(bn2(conv2(relu(bn1(conv1(x))))) + shortcut(x))."""
    in_planes = x_nchw.shape[1]
    planes = params["w1"].shape[-1]
    has_proj = (stride != 1) or (in_planes != planes)
    cdt = compute_dtype

    n, _, h, w = x_nchw.shape
    ho = (h - 1) // stride + 1
    wo = (w - 1) // stride + 1
    ci = _round_up(in_planes, LANE)
    co = _round_up(planes, LANE)
    count = n * ho * wo

    def padc(a, axis, new):
        cfg = [(0, 0)] * a.ndim
        cfg[axis] = (0, new - a.shape[axis])
        return jnp.pad(a, cfg)

    # NCHW -> NHWC; zero-pad channels to lane multiples (weights/gamma padded with
    # zeros so the extra channels stay exactly zero end-to-end and are sliced away).
    x_p = padc(jnp.transpose(x_nchw, (0, 2, 3, 1)).astype(jnp.float32), 3, ci).astype(cdt)
    w1p = padc(padc(params["w1"], 1, ci), 2, co).reshape(9 * ci, co).astype(cdt)
    w2p = padc(padc(params["w2"], 1, co), 2, co).reshape(9 * co, co).astype(cdt)
    g1 = padc(params["gamma1"].astype(jnp.float32), 1, co)
    b1 = padc(params["beta1"].astype(jnp.float32), 1, co)
    g2 = padc(params["gamma2"].astype(jnp.float32), 1, co)
    b2 = padc(params["beta2"].astype(jnp.float32), 1, co)

    blk4 = lambda hh, ww, cc: pl.BlockSpec((1, hh, ww, cc), lambda b: (b, 0, 0, 0))
    full = lambda arr: pl.BlockSpec(arr.shape, lambda b: (0,) * arr.ndim)
    stat_spec = lambda ns: pl.BlockSpec((1, ns, co), lambda b: (b, 0, 0))

    # ---- kernel 1: conv1 (+ fused 1x1 projection) + per-tile BN moments --------
    nstat = 4 if has_proj else 2
    ins = [x_p, w1p]
    in_specs = [blk4(h, w, ci), full(w1p)]
    out_shape = [jax.ShapeDtypeStruct((n, ho, wo, co), cdt)]
    out_specs = [blk4(ho, wo, co)]
    if has_proj:
        wscp = padc(padc(params["w_sc"], 0, ci), 1, co).astype(cdt)
        ins.append(wscp)
        in_specs.append(full(wscp))
        out_shape.append(jax.ShapeDtypeStruct((n, ho, wo, co), cdt))
        out_specs.append(blk4(ho, wo, co))
    out_shape.append(jax.ShapeDtypeStruct((n, nstat, co), jnp.float32))
    out_specs.append(stat_spec(nstat))

    res1 = pl.pallas_call(
        functools.partial(_conv1_kernel, stride=stride, has_proj=has_proj),
        grid=(n,),
        in_specs=in_specs,
        out_specs=tuple(out_specs),
        out_shape=tuple(out_shape),
        scratch_shapes=[pltpu.VMEM((h + 2, w + 2, ci), jnp.float32)],
        compiler_params=_compiler_params(),
    )(*ins)
    if has_proj:
        y1, ysc, st1 = res1
    else:
        y1, st1 = res1

    # ---- kernel 2: BN1+ReLU fused into conv2 + per-tile BN moments -------------
    ss1 = _bn_fold(st1[:, 0:2], count, g1, b1)                 # stacked (2, co)
    y2, st2 = pl.pallas_call(
        _conv2_kernel,
        grid=(n,),
        in_specs=[blk4(ho, wo, co), full(ss1), full(w2p)],
        out_specs=(blk4(ho, wo, co), stat_spec(2)),
        out_shape=(jax.ShapeDtypeStruct((n, ho, wo, co), cdt),
                   jax.ShapeDtypeStruct((n, 2, co), jnp.float32)),
        scratch_shapes=[pltpu.VMEM((ho + 2, wo + 2, co), jnp.float32)],
        compiler_params=_compiler_params(),
    )(y1, ss1, w2p)

    # ---- kernel 3: BN2 + shortcut add + ReLU ------------------------------------
    ss2 = _bn_fold(st2, count, g2, b2)
    if has_proj:
        sssc = _bn_fold(st1[:, 2:4], count, None, None)        # affine=False BN
        ins3 = [y2, ysc, ss2, sssc]
        in_specs3 = [blk4(ho, wo, co), blk4(ho, wo, co), full(ss2), full(sssc)]
    else:                       # identity shortcut (stride == 1, ci == co)
        ins3 = [y2, x_p, ss2]
        in_specs3 = [blk4(ho, wo, co), blk4(ho, wo, co), full(ss2)]
    out_p = pl.pallas_call(
        functools.partial(_bn_add_relu_kernel, has_proj=has_proj),
        grid=(n,),
        in_specs=in_specs3,
        out_specs=blk4(ho, wo, co),
        out_shape=jax.ShapeDtypeStruct((n, ho, wo, co), jnp.float32),
        compiler_params=_compiler_params(),
    )(*ins3)

    return jnp.transpose(out_p[..., :planes], (0, 3, 1, 2))   # NHWC(padded) -> NCHW


# ---------------------------------------------------------------------------
# Pure-JAX reference (verification only)
# ---------------------------------------------------------------------------
def _bn_ref(x, gamma, beta):
    mean = x.mean((0, 1, 2), keepdims=True)
    var = ((x - mean) ** 2).mean((0, 1, 2), keepdims=True)
    y = (x - mean) * lax.rsqrt(var + EPS)
    if gamma is not None:
        y = y * gamma.reshape(1, 1, 1, -1) + beta.reshape(1, 1, 1, -1)
    return y


def basic_block_ref(x_nchw, params, *, stride):
    x = jnp.transpose(x_nchw, (0, 2, 3, 1)).astype(jnp.float32)
    in_planes = x.shape[-1]
    planes = params["w1"].shape[-1]

    def conv3(x, w9, s):
        w = w9.reshape(3, 3, w9.shape[1], w9.shape[2])  # HWIO
        return lax.conv_general_dilated(
            x, w, (s, s), ((1, 1), (1, 1)),
            dimension_numbers=("NHWC", "HWIO", "NHWC"))

    out = jnp.maximum(_bn_ref(conv3(x, params["w1"], stride),
                              params["gamma1"][0], params["beta1"][0]), 0.0)
    out = _bn_ref(conv3(out, params["w2"], 1),
                  params["gamma2"][0], params["beta2"][0])
    if stride != 1 or in_planes != planes:
        sc = lax.conv_general_dilated(
            x, params["w_sc"].reshape(1, 1, in_planes, planes), (stride, stride),
            ((0, 0), (0, 0)), dimension_numbers=("NHWC", "HWIO", "NHWC"))
        sc = _bn_ref(sc, None, None)
    else:
        sc = x
    out = jnp.maximum(out + sc, 0.0)
    return jnp.transpose(out, (0, 3, 1, 2))


# ---------------------------------------------------------------------------
# Deterministic parameter init (shapes follow BasicBlock(in_planes, planes))
# ---------------------------------------------------------------------------
def init_params(key, in_planes, planes, stride):
    ks = jax.random.split(key, 7)
    scale1 = 1.0 / np.sqrt(9 * in_planes)
    scale2 = 1.0 / np.sqrt(9 * planes)
    params = {
        # conv weights stored as (9, Cin, Cout) == (kh*kw, Cin, Cout) in HWIO order
        "w1": jax.random.normal(ks[0], (9, in_planes, planes), jnp.float32) * scale1,
        "w2": jax.random.normal(ks[1], (9, planes, planes), jnp.float32) * scale2,
        "gamma1": 1.0 + 0.1 * jax.random.normal(ks[2], (1, planes), jnp.float32),
        "beta1": 0.1 * jax.random.normal(ks[3], (1, planes), jnp.float32),
        "gamma2": 1.0 + 0.1 * jax.random.normal(ks[4], (1, planes), jnp.float32),
        "beta2": 0.1 * jax.random.normal(ks[5], (1, planes), jnp.float32),
    }
    if stride != 1 or in_planes != planes:
        params["w_sc"] = jax.random.normal(
            ks[6], (in_planes, planes), jnp.float32) / np.sqrt(in_planes)
    return params


if __name__ == "__main__":
    key = jax.random.PRNGKey(0)
    k_x1, k_p1, k_x2, k_p2 = jax.random.split(key, 4)

    fwd = jax.jit(functools.partial(basic_block_forward, stride=1))

    # Case 1: BasicBlock(4, 4, stride=1) -> identity shortcut.
    x1 = jax.random.normal(k_x1, (2, 4, 16, 16), jnp.float32)   # NCHW
    p1 = init_params(k_p1, 4, 4, 1)
    out1 = jax.block_until_ready(fwd(x1, p1))
    ref1 = jax.block_until_ready(basic_block_ref(x1, p1, stride=1))
    np.testing.assert_allclose(np.asarray(out1), np.asarray(ref1), rtol=2e-4, atol=2e-4)
    assert out1.shape == (2, 4, 16, 16)

    # Case 2: BasicBlock(4, 8, stride=1) -> 1x1 projection shortcut (affine=False BN).
    x2 = jax.random.normal(k_x2, (2, 4, 16, 16), jnp.float32)
    p2 = init_params(k_p2, 4, 8, 1)
    out2 = jax.block_until_ready(fwd(x2, p2))
    ref2 = jax.block_until_ready(basic_block_ref(x2, p2, stride=1))
    np.testing.assert_allclose(np.asarray(out2), np.asarray(ref2), rtol=2e-4, atol=2e-4)
    assert out2.shape == (2, 8, 16, 16)

    # Case 3: bf16 MXU operands (v6e/v7x fast path); loose tolerance vs f32 reference.
    fwd_bf16 = jax.jit(functools.partial(basic_block_forward, stride=1,
                                         compute_dtype=jnp.bfloat16))
    out3 = jax.block_until_ready(fwd_bf16(x1, p1))
    np.testing.assert_allclose(np.asarray(out3), np.asarray(ref1), rtol=1e-1, atol=1e-1)

    print("KERNEL_OK")
</pallas_src>

<mosaic_0001>
module attributes {stable_mosaic.version = 11 : i64} {
  func.func @_bn_add_relu_kernel(%arg0: i32, %arg1: memref<1x16x16x128xf32, #tpu.memory_space<vmem>>, %arg2: memref<1x16x16x128xf32, #tpu.memory_space<vmem>>, %arg3: memref<2x128xf32, #tpu.memory_space<vmem>>, %arg4: memref<1x16x16x128xf32, #tpu.memory_space<vmem>>) attributes {dimension_semantics = [#tpu.dimension_semantics<parallel>], iteration_bounds = array<i64: 2>, scalar_prefetch = 0 : i64, scratch_operands = 0 : i64, tpu.core_type = #tpu.core_type<tc>, window_params = [{transform_indices = @transform_0, window_bounds = array<i64: 1, 16, 16, 128>}, {transform_indices = @transform_1, window_bounds = array<i64: 1, 16, 16, 128>}, {pipeline_mode = #tpu.pipeline_mode<synchronous>, transform_indices = @transform_2, window_bounds = array<i64: 2, 128>}, {transform_indices = @transform_3, window_bounds = array<i64: 1, 16, 16, 128>}]} {
    %c0 = arith.constant 0 : index
    %c0_0 = arith.constant 0 : index
    %c0_1 = arith.constant 0 : index
    %c0_2 = arith.constant 0 : index
    %0 = vector.load %arg1[%c0, %c0_0, %c0_1, %c0_2] : memref<1x16x16x128xf32, #tpu.memory_space<vmem>>, vector<1x16x16x128xf32>
    %c0_3 = arith.constant 0 : index
    %c0_4 = arith.constant 0 : index
    %1 = vector.load %arg3[%c0_3, %c0_4] : memref<2x128xf32, #tpu.memory_space<vmem>>, vector<1x128xf32>
    %2 = vector.shape_cast %1 : vector<1x128xf32> to vector<1x1x1x128xf32>
    %3 = vector.broadcast %2 : vector<1x1x1x128xf32> to vector<1x16x16x128xf32>
    %4 = arith.mulf %0, %3 : vector<1x16x16x128xf32>
    %c1 = arith.constant 1 : index
    %c0_5 = arith.constant 0 : index
    %5 = vector.load %arg3[%c1, %c0_5] : memref<2x128xf32, #tpu.memory_space<vmem>>, vector<1x128xf32>
    %6 = vector.shape_cast %5 : vector<1x128xf32> to vector<1x1x1x128xf32>
    %7 = vector.broadcast %6 : vector<1x1x1x128xf32> to vector<1x16x16x128xf32>
    %8 = arith.addf %4, %7 : vector<1x16x16x128xf32>
    %c0_6 = arith.constant 0 : index
    %c0_7 = arith.constant 0 : index
    %c0_8 = arith.constant 0 : index
    %c0_9 = arith.constant 0 : index
    %9 = vector.load %arg2[%c0_6, %c0_7, %c0_8, %c0_9] : memref<1x16x16x128xf32, #tpu.memory_space<vmem>>, vector<1x16x16x128xf32>
    %10 = arith.addf %8, %9 : vector<1x16x16x128xf32>
    %cst = arith.constant 0.000000e+00 : f32
    %11 = vector.broadcast %cst : f32 to vector<1x16x16x128xf32>
    %12 = arith.maximumf %10, %11 : vector<1x16x16x128xf32>
    %c0_10 = arith.constant 0 : index
    %c0_11 = arith.constant 0 : index
    %c0_12 = arith.constant 0 : index
    %c0_13 = arith.constant 0 : index
    %13 = vector.load %arg4[%c0_10, %c0_11, %c0_12, %c0_13] : memref<1x16x16x128xf32, #tpu.memory_space<vmem>>, vector<1x16x16x128xf32>
    tpu.vector_store %arg4[%c0_10, %c0_11, %c0_12, %c0_13], %12 {strides = array<i32>} : memref<1x16x16x128xf32, #tpu.memory_space<vmem>>, vector<1x16x16x128xf32>,
    return
  }
  func.func @transform_0(%arg0: i32) -> (i32, i32, i32, i32) {
    %c0_i32 = arith.constant 0 : i32
    %c0_i32_0 = arith.constant 0 : i32
    %c0_i32_1 = arith.constant 0 : i32
    %c0_i32_2 = arith.constant 0 : i32
    return %arg0, %c0_i32, %c0_i32_0, %c0_i32_1 : i32, i32, i32, i32
  }
  func.func @transform_1(%arg0: i32) -> (i32, i32, i32, i32) {
    %c0_i32 = arith.constant 0 : i32
    %c0_i32_0 = arith.constant 0 : i32
    %c0_i32_1 = arith.constant 0 : i32
    %c0_i32_2 = arith.constant 0 : i32
    return %arg0, %c0_i32, %c0_i32_0, %c0_i32_1 : i32, i32, i32, i32
  }
  func.func @transform_2(%arg0: i32) -> (i32, i32) {
    %c0_i32 = arith.constant 0 : i32
    %c0_i32_0 = arith.constant 0 : i32
    %c0_i32_1 = arith.constant 0 : i32
    return %c0_i32, %c0_i32_0 : i32, i32
  }
  func.func @transform_3(%arg0: i32) -> (i32, i32, i32, i32) {
    %c0_i32 = arith.constant 0 : i32
    %c0_i32_0 = arith.constant 0 : i32
    %c0_i32_1 = arith.constant 0 : i32
    %c0_i32_2 = arith.constant 0 : i32
    return %arg0, %c0_i32, %c0_i32_0, %c0_i32_1 : i32, i32, i32, i32
  }
}

module attributes {stable_mosaic.version = 11 : i64} {
  func.func @_conv2_kernel(%arg0: i32, %arg1: memref<1x16x16x128xf32, #tpu.memory_space<vmem>>, %arg2: memref<2x128xf32, #tpu.memory_space<vmem>>, %arg3: memref<1152x128xf32, #tpu.memory_space<vmem>>, %arg4: memref<1x16x16x128xf32, #tpu.memory_space<vmem>>, %arg5: memref<1x2x128xf32, #tpu.memory_space<vmem>>, %arg6: memref<18x18x128xf32, #tpu.memory_space<vmem>>) attributes {dimension_semantics = [#tpu.dimension_semantics<parallel>], iteration_bounds = array<i64: 2>, scalar_prefetch = 0 : i64, scratch_operands = 1 : i64, tpu.core_type = #tpu.core_type<tc>, window_params = [{transform_indices = @transform_0, window_bounds = array<i64: 1, 16, 16, 128>}, {pipeline_mode = #tpu.pipeline_mode<synchronous>, transform_indices = @transform_1, window_bounds = array<i64: 2, 128>}, {pipeline_mode = #tpu.pipeline_mode<synchronous>, transform_indices = @transform_2, window_bounds = array<i64: 1152, 128>}, {transform_indices = @transform_3, window_bounds = array<i64: 1, 16, 16, 128>}, {transform_indices = @transform_4, window_bounds = array<i64: 1, 2, 128>}]} {
    %c0 = arith.constant 0 : index
    %c0_0 = arith.constant 0 : index
    %c0_1 = arith.constant 0 : index
    %c0_2 = arith.constant 0 : index
    %0 = vector.load %arg1[%c0, %c0_0, %c0_1, %c0_2] : memref<1x16x16x128xf32, #tpu.memory_space<vmem>>, vector<1x16x16x128xf32>
    %1 = vector.shape_cast %0 : vector<1x16x16x128xf32> to vector<16x16x128xf32>
    %c0_3 = arith.constant 0 : index
    %c0_4 = arith.constant 0 : index
    %2 = vector.load %arg2[%c0_3, %c0_4] : memref<2x128xf32, #tpu.memory_space<vmem>>, vector<1x128xf32>
    %3 = vector.shape_cast %2 : vector<1x128xf32> to vector<1x1x128xf32>
    %4 = vector.broadcast %3 : vector<1x1x128xf32> to vector<16x16x128xf32>
    %5 = arith.mulf %1, %4 : vector<16x16x128xf32>
    %c1 = arith.constant 1 : index
    %c0_5 = arith.constant 0 : index
    %6 = vector.load %arg2[%c1, %c0_5] : memref<2x128xf32, #tpu.memory_space<vmem>>, vector<1x128xf32>
    %7 = vector.shape_cast %6 : vector<1x128xf32> to vector<1x1x128xf32>
    %8 = vector.broadcast %7 : vector<1x1x128xf32> to vector<16x16x128xf32>
    %9 = arith.addf %5, %8 : vector<16x16x128xf32>
    %cst = arith.constant 0.000000e+00 : f32
    %10 = vector.broadcast %cst : f32 to vector<16x16x128xf32>
    %11 = arith.maximumf %9, %10 : vector<16x16x128xf32>
    %cst_6 = arith.constant 0.000000e+00 : f32
    %12 = vector.broadcast %cst_6 : f32 to vector<1x18x128xf32>
    %cst_7 = arith.constant 0.000000e+00 : f32
    %13 = vector.broadcast %cst_7 : f32 to vector<16x1x128xf32>
    %c0_8 = arith.constant 0 : index
    %c0_9 = arith.constant 0 : index
    %c0_10 = arith.constant 0 : index
    %14 = vector.load %arg6[%c0_8, %c0_9, %c0_10] : memref<18x18x128xf32, #tpu.memory_space<vmem>>, vector<1x18x128xf32>
    tpu.vector_store %arg6[%c0_8, %c0_9, %c0_10], %12 {strides = array<i32>} : memref<18x18x128xf32, #tpu.memory_space<vmem>>, vector<1x18x128xf32>,
    %c17 = arith.constant 17 : index
    %c0_11 = arith.constant 0 : index
    %c0_12 = arith.constant 0 : index
    %15 = vector.load %arg6[%c17, %c0_11, %c0_12] : memref<18x18x128xf32, #tpu.memory_space<vmem>>, vector<1x18x128xf32>
    tpu.vector_store %arg6[%c17, %c0_11, %c0_12], %12 {strides = array<i32>} : memref<18x18x128xf32, #tpu.memory_space<vmem>>, vector<1x18x128xf32>,
    %c1_13 = arith.constant 1 : index
    %c0_14 = arith.constant 0 : index
    %c0_15 = arith.constant 0 : index
    %16 = vector.load %arg6[%c1_13, %c0_14, %c0_15] : memref<18x18x128xf32, #tpu.memory_space<vmem>>, vector<16x1x128xf32>
    tpu.vector_store %arg6[%c1_13, %c0_14, %c0_15], %13 {strides = array<i32>} : memref<18x18x128xf32, #tpu.memory_space<vmem>>, vector<16x1x128xf32>,
    %c1_16 = arith.constant 1 : index
    %c17_17 = arith.constant 17 : index
    %c0_18 = arith.constant 0 : index
    %17 = vector.load %arg6[%c1_16, %c17_17, %c0_18] : memref<18x18x128xf32, #tpu.memory_space<vmem>>, vector<16x1x128xf32>
    tpu.vector_store %arg6[%c1_16, %c17_17, %c0_18], %13 {strides = array<i32>} : memref<18x18x128xf32, #tpu.memory_space<vmem>>, vector<16x1x128xf32>,
    %c1_19 = arith.constant 1 : index
    %c1_20 = arith.constant 1 : index
    %c0_21 = arith.constant 0 : index
    %18 = vector.load %arg6[%c1_19, %c1_20, %c0_21] : memref<18x18x128xf32, #tpu.memory_space<vmem>>, vector<16x16x128xf32>
    tpu.vector_store %arg6[%c1_19, %c1_20, %c0_21], %11 {strides = array<i32>} : memref<18x18x128xf32, #tpu.memory_space<vmem>>, vector<16x16x128xf32>,
    %c0_22 = arith.constant 0 : index
    %c0_23 = arith.constant 0 : index
    %c0_24 = arith.constant 0 : index
    %19 = vector.load %arg6[%c0_22, %c0_23, %c0_24] : memref<18x18x128xf32, #tpu.memory_space<vmem>>, vector<16x16x128xf32>
    %20 = vector.shape_cast %19 : vector<16x16x128xf32> to vector<256x128xf32>
    %c0_25 = arith.constant 0 : index
    %c1_26 = arith.constant 1 : index
    %c0_27 = arith.constant 0 : index
    %21 = vector.load %arg6[%c0_25, %c1_26, %c0_27] : memref<18x18x128xf32, #tpu.memory_space<vmem>>, vector<16x16x128xf32>
    %22 = vector.shape_cast %21 : vector<16x16x128xf32> to vector<256x128xf32>
    %c0_28 = arith.constant 0 : index
    %c2 = arith.constant 2 : index
    %c0_29 = arith.constant 0 : index
    %23 = vector.load %arg6[%c0_28, %c2, %c0_29] : memref<18x18x128xf32, #tpu.memory_space<vmem>>, vector<16x16x128xf32>
    %24 = vector.shape_cast %23 : vector<16x16x128xf32> to vector<256x128xf32>
    %c1_30 = arith.constant 1 : index
    %c0_31 = arith.constant 0 : index
    %c0_32 = arith.constant 0 : index
    %25 = vector.load %arg6[%c1_30, %c0_31, %c0_32] : memref<18x18x128xf32, #tpu.memory_space<vmem>>, vector<16x16x128xf32>
    %26 = vector.shape_cast %25 : vector<16x16x128xf32> to vector<256x128xf32>
    %c1_33 = arith.constant 1 : index
    %c1_34 = arith.constant 1 : index
    %c0_35 = arith.constant 0 : index
    %27 = vector.load %arg6[%c1_33, %c1_34, %c0_35] : memref<18x18x128xf32, #tpu.memory_space<vmem>>, vector<16x16x128xf32>
    %28 = vector.shape_cast %27 : vector<16x16x128xf32> to vector<256x128xf32>
    %c1_36 = arith.constant 1 : index
    %c2_37 = arith.constant 2 : index
    %c0_38 = arith.constant 0 : index
    %29 = vector.load %arg6[%c1_36, %c2_37, %c0_38] : memref<18x18x128xf32, #tpu.memory_space<vmem>>, vector<16x16x128xf32>
    %30 = vector.shape_cast %29 : vector<16x16x128xf32> to vector<256x128xf32>
    %c2_39 = arith.constant 2 : index
    %c0_40 = arith.constant 0 : index
    %c0_41 = arith.constant 0 : index
    %31 = vector.load %arg6[%c2_39, %c0_40, %c0_41] : memref<18x18x128xf32, #tpu.memory_space<vmem>>, vector<16x16x128xf32>
    %32 = vector.shape_cast %31 : vector<16x16x128xf32> to vector<256x128xf32>
    %c2_42 = arith.constant 2 : index
    %c1_43 = arith.constant 1 : index
    %c0_44 = arith.constant 0 : index
    %33 = vector.load %arg6[%c2_42, %c1_43, %c0_44] : memref<18x18x128xf32, #tpu.memory_space<vmem>>, vector<16x16x128xf32>
    %34 = vector.shape_cast %33 : vector<16x16x128xf32> to vector<256x128xf32>
    %c2_45 = arith.constant 2 : index
    %c2_46 = arith.constant 2 : index
    %c0_47 = arith.constant 0 : index
    %35 = vector.load %arg6[%c2_45, %c2_46, %c0_47] : memref<18x18x128xf32, #tpu.memory_space<vmem>>, vector<16x16x128xf32>
    %36 = vector.shape_cast %35 : vector<16x16x128xf32> to vector<256x128xf32>
    %37 = tpu.concatenate %20, %22, %24, %26, %28, %30, %32, %34, %36 in 1 : vector<256x128xf32>, vector<256x128xf32>, vector<256x128xf32>, vector<256x128xf32>, vector<256x128xf32>, vector<256x128xf32>, vector<256x128xf32>, vector<256x128xf32>, vector<256x128xf32> -> vector<256x1152xf32>
    %c0_48 = arith.constant 0 : index
    %c0_49 = arith.constant 0 : index
    %38 = vector.load %arg3[%c0_48, %c0_49] : memref<1152x128xf32, #tpu.memory_space<vmem>>, vector<1152x128xf32>
    %cst_50 = arith.constant dense<0.000000e+00> : vector<256x128xf32>
    %39 = tpu.matmul %37, %38, %cst_50 {dimension_numbers = #tpu.dot_dimension_numbers<[1], [0], [0], [1], [0, 0, 1, 1], [], []>} : vector<256x1152xf32>, vector<1152x128xf32>, vector<256x128xf32> -> vector<256x128xf32>
    %cst_51 = arith.constant dense<0.000000e+00> : vector<128xf32>
    %40 = vector.multi_reduction <add>, %39, %cst_51 [0] : vector<256x128xf32> to vector<128xf32>
    %41 = vector.shape_cast %40 : vector<128xf32> to vector<1x128xf32>
    %42 = arith.mulf %39, %39 : vector<256x128xf32>
    %cst_52 = arith.constant dense<0.000000e+00> : vector<128xf32>
    %43 = vector.multi_reduction <add>, %42, %cst_52 [0] : vector<256x128xf32> to vector<128xf32>
    %44 = vector.shape_cast %43 : vector<128xf32> to vector<1x128xf32>
    %45 = tpu.concatenate %41, %44 in 0 : vector<1x128xf32>, vector<1x128xf32> -> vector<2x128xf32>
    %c0_53 = arith.constant 0 : index
    %c0_54 = arith.constant 0 : index
    %c0_55 = arith.constant 0 : index
    %46 = vector.load %arg5[%c0_53, %c0_54, %c0_55] : memref<1x2x128xf32, #tpu.memory_space<vmem>>, vector<1x2x128xf32>
    %47 = vector.shape_cast %46 : vector<1x2x128xf32> to vector<2x128xf32>
    %48 = vector.shape_cast %45 : vector<2x128xf32> to vector<1x2x128xf32>
    tpu.vector_store %arg5[%c0_53, %c0_54, %c0_55], %48 {strides = array<i32>} : memref<1x2x128xf32, #tpu.memory_space<vmem>>, vector<1x2x128xf32>,
    %49 = vector.shape_cast %39 : vector<256x128xf32> to vector<1x16x16x128xf32>
    %c0_56 = arith.constant 0 : index
    %c0_57 = arith.constant 0 : index
    %c0_58 = arith.constant 0 : index
    %c0_59 = arith.constant 0 : index
    %50 = vector.load %arg4[%c0_56, %c0_57, %c0_58, %c0_59] : memref<1x16x16x128xf32, #tpu.memory_space<vmem>>, vector<1x16x16x128xf32>
    tpu.vector_store %arg4[%c0_56, %c0_57, %c0_58, %c0_59], %49 {strides = array<i32>} : memref<1x16x16x128xf32, #tpu.memory_space<vmem>>, vector<1x16x16x128xf32>,
    return
  }
  func.func @transform_0(%arg0: i32) -> (i32, i32, i32, i32) {
    %c0_i32 = arith.constant 0 : i32
    %c0_i32_0 = arith.constant 0 : i32
    %c0_i32_1 = arith.constant 0 : i32
    %c0_i32_2 = arith.constant 0 : i32
    return %arg0, %c0_i32, %c0_i32_0, %c0_i32_1 : i32, i32, i32, i32
  }
  func.func @transform_1(%arg0: i32) -> (i32, i32) {
    %c0_i32 = arith.constant 0 : i32
    %c0_i32_0 = arith.constant 0 : i32
    %c0_i32_1 = arith.constant 0 : i32
    return %c0_i32, %c0_i32_0 : i32, i32
  }
  func.func @transform_2(%arg0: i32) -> (i32, i32) {
    %c0_i32 = arith.constant 0 : i32
    %c0_i32_0 = arith.constant 0 : i32
    %c0_i32_1 = arith.constant 0 : i32
    return %c0_i32, %c0_i32_0 : i32, i32
  }
  func.func @transform_3(%arg0: i32) -> (i32, i32, i32, i32) {
    %c0_i32 = arith.constant 0 : i32
    %c0_i32_0 = arith.constant 0 : i32
    %c0_i32_1 = arith.constant 0 : i32
    %c0_i32_2 = arith.constant 0 : i32
    return %arg0, %c0_i32, %c0_i32_0, %c0_i32_1 : i32, i32, i32, i32
  }
  func.func @transform_4(%arg0: i32) -> (i32, i32, i32) {
    %c0_i32 = arith.constant 0 : i32
    %c0_i32_0 = arith.constant 0 : i32
    %c0_i32_1 = arith.constant 0 : i32
    return %arg0, %c0_i32, %c0_i32_0 : i32, i32, i32
  }
}

module attributes {stable_mosaic.version = 11 : i64} {
  func.func @_conv1_kernel(%arg0: i32, %arg1: memref<1x16x16x128xf32, #tpu.memory_space<vmem>>, %arg2: memref<1152x128xf32, #tpu.memory_space<vmem>>, %arg3: memref<1x16x16x128xf32, #tpu.memory_space<vmem>>, %arg4: memref<1x2x128xf32, #tpu.memory_space<vmem>>, %arg5: memref<18x18x128xf32, #tpu.memory_space<vmem>>) attributes {dimension_semantics = [#tpu.dimension_semantics<parallel>], iteration_bounds = array<i64: 2>, scalar_prefetch = 0 : i64, scratch_operands = 1 : i64, tpu.core_type = #tpu.core_type<tc>, window_params = [{transform_indices = @transform_0, window_bounds = array<i64: 1, 16, 16, 128>}, {pipeline_mode = #tpu.pipeline_mode<synchronous>, transform_indices = @transform_1, window_bounds = array<i64: 1152, 128>}, {transform_indices = @transform_2, window_bounds = array<i64: 1, 16, 16, 128>}, {transform_indices = @transform_3, window_bounds = array<i64: 1, 2, 128>}]} {
    %c0 = arith.constant 0 : index
    %c0_0 = arith.constant 0 : index
    %c0_1 = arith.constant 0 : index
    %c0_2 = arith.constant 0 : index
    %0 = vector.load %arg1[%c0, %c0_0, %c0_1, %c0_2] : memref<1x16x16x128xf32, #tpu.memory_space<vmem>>, vector<1x16x16x128xf32>
    %1 = vector.shape_cast %0 : vector<1x16x16x128xf32> to vector<16x16x128xf32>
    %cst = arith.constant 0.000000e+00 : f32
    %2 = vector.broadcast %cst : f32 to vector<1x18x128xf32>
    %cst_3 = arith.constant 0.000000e+00 : f32
    %3 = vector.broadcast %cst_3 : f32 to vector<16x1x128xf32>
    %c0_4 = arith.constant 0 : index
    %c0_5 = arith.constant 0 : index
    %c0_6 = arith.constant 0 : index
    %4 = vector.load %arg5[%c0_4, %c0_5, %c0_6] : memref<18x18x128xf32, #tpu.memory_space<vmem>>, vector<1x18x128xf32>
    tpu.vector_store %arg5[%c0_4, %c0_5, %c0_6], %2 {strides = array<i32>} : memref<18x18x128xf32, #tpu.memory_space<vmem>>, vector<1x18x128xf32>,
    %c17 = arith.constant 17 : index
    %c0_7 = arith.constant 0 : index
    %c0_8 = arith.constant 0 : index
    %5 = vector.load %arg5[%c17, %c0_7, %c0_8] : memref<18x18x128xf32, #tpu.memory_space<vmem>>, vector<1x18x128xf32>
    tpu.vector_store %arg5[%c17, %c0_7, %c0_8], %2 {strides = array<i32>} : memref<18x18x128xf32, #tpu.memory_space<vmem>>, vector<1x18x128xf32>,
    %c1 = arith.constant 1 : index
    %c0_9 = arith.constant 0 : index
    %c0_10 = arith.constant 0 : index
    %6 = vector.load %arg5[%c1, %c0_9, %c0_10] : memref<18x18x128xf32, #tpu.memory_space<vmem>>, vector<16x1x128xf32>
    tpu.vector_store %arg5[%c1, %c0_9, %c0_10], %3 {strides = array<i32>} : memref<18x18x128xf32, #tpu.memory_space<vmem>>, vector<16x1x128xf32>,
    %c1_11 = arith.constant 1 : index
    %c17_12 = arith.constant 17 : index
    %c0_13 = arith.constant 0 : index
    %7 = vector.load %arg5[%c1_11, %c17_12, %c0_13] : memref<18x18x128xf32, #tpu.memory_space<vmem>>, vector<16x1x128xf32>
    tpu.vector_store %arg5[%c1_11, %c17_12, %c0_13], %3 {strides = array<i32>} : memref<18x18x128xf32, #tpu.memory_space<vmem>>, vector<16x1x128xf32>,
    %c1_14 = arith.constant 1 : index
    %c1_15 = arith.constant 1 : index
    %c0_16 = arith.constant 0 : index
    %8 = vector.load %arg5[%c1_14, %c1_15, %c0_16] : memref<18x18x128xf32, #tpu.memory_space<vmem>>, vector<16x16x128xf32>
    tpu.vector_store %arg5[%c1_14, %c1_15, %c0_16], %1 {strides = array<i32>} : memref<18x18x128xf32, #tpu.memory_space<vmem>>, vector<16x16x128xf32>,
    %c0_17 = arith.constant 0 : index
    %c0_18 = arith.constant 0 : index
    %c0_19 = arith.constant 0 : index
    %9 = vector.load %arg5[%c0_17, %c0_18, %c0_19] : memref<18x18x128xf32, #tpu.memory_space<vmem>>, vector<16x16x128xf32>
    %10 = vector.shape_cast %9 : vector<16x16x128xf32> to vector<256x128xf32>
    %c0_20 = arith.constant 0 : index
    %c1_21 = arith.constant 1 : index
    %c0_22 = arith.constant 0 : index
    %11 = vector.load %arg5[%c0_20, %c1_21, %c0_22] : memref<18x18x128xf32, #tpu.memory_space<vmem>>, vector<16x16x128xf32>
    %12 = vector.shape_cast %11 : vector<16x16x128xf32> to vector<256x128xf32>
    %c0_23 = arith.constant 0 : index
    %c2 = arith.constant 2 : index
    %c0_24 = arith.constant 0 : index
    %13 = vector.load %arg5[%c0_23, %c2, %c0_24] : memref<18x18x128xf32, #tpu.memory_space<vmem>>, vector<16x16x128xf32>
    %14 = vector.shape_cast %13 : vector<16x16x128xf32> to vector<256x128xf32>
    %c1_25 = arith.constant 1 : index
    %c0_26 = arith.constant 0 : index
    %c0_27 = arith.constant 0 : index
    %15 = vector.load %arg5[%c1_25, %c0_26, %c0_27] : memref<18x18x128xf32, #tpu.memory_space<vmem>>, vector<16x16x128xf32>
    %16 = vector.shape_cast %15 : vector<16x16x128xf32> to vector<256x128xf32>
    %c1_28 = arith.constant 1 : index
    %c1_29 = arith.constant 1 : index
    %c0_30 = arith.constant 0 : index
    %17 = vector.load %arg5[%c1_28, %c1_29, %c0_30] : memref<18x18x128xf32, #tpu.memory_space<vmem>>, vector<16x16x128xf32>
    %18 = vector.shape_cast %17 : vector<16x16x128xf32> to vector<256x128xf32>
    %c1_31 = arith.constant 1 : index
    %c2_32 = arith.constant 2 : index
    %c0_33 = arith.constant 0 : index
    %19 = vector.load %arg5[%c1_31, %c2_32, %c0_33] : memref<18x18x128xf32, #tpu.memory_space<vmem>>, vector<16x16x128xf32>
    %20 = vector.shape_cast %19 : vector<16x16x128xf32> to vector<256x128xf32>
    %c2_34 = arith.constant 2 : index
    %c0_35 = arith.constant 0 : index
    %c0_36 = arith.constant 0 : index
    %21 = vector.load %arg5[%c2_34, %c0_35, %c0_36] : memref<18x18x128xf32, #tpu.memory_space<vmem>>, vector<16x16x128xf32>
    %22 = vector.shape_cast %21 : vector<16x16x128xf32> to vector<256x128xf32>
    %c2_37 = arith.constant 2 : index
    %c1_38 = arith.constant 1 : index
    %c0_39 = arith.constant 0 : index
    %23 = vector.load %arg5[%c2_37, %c1_38, %c0_39] : memref<18x18x128xf32, #tpu.memory_space<vmem>>, vector<16x16x128xf32>
    %24 = vector.shape_cast %23 : vector<16x16x128xf32> to vector<256x128xf32>
    %c2_40 = arith.constant 2 : index
    %c2_41 = arith.constant 2 : index
    %c0_42 = arith.constant 0 : index
    %25 = vector.load %arg5[%c2_40, %c2_41, %c0_42] : memref<18x18x128xf32, #tpu.memory_space<vmem>>, vector<16x16x128xf32>
    %26 = vector.shape_cast %25 : vector<16x16x128xf32> to vector<256x128xf32>
    %27 = tpu.concatenate %10, %12, %14, %16, %18, %20, %22, %24, %26 in 1 : vector<256x128xf32>, vector<256x128xf32>, vector<256x128xf32>, vector<256x128xf32>, vector<256x128xf32>, vector<256x128xf32>, vector<256x128xf32>, vector<256x128xf32>, vector<256x128xf32> -> vector<256x1152xf32>
    %c0_43 = arith.constant 0 : index
    %c0_44 = arith.constant 0 : index
    %28 = vector.load %arg2[%c0_43, %c0_44] : memref<1152x128xf32, #tpu.memory_space<vmem>>, vector<1152x128xf32>
    %cst_45 = arith.constant dense<0.000000e+00> : vector<256x128xf32>
    %29 = tpu.matmul %27, %28, %cst_45 {dimension_numbers = #tpu.dot_dimension_numbers<[1], [0], [0], [1], [0, 0, 1, 1], [], []>} : vector<256x1152xf32>, vector<1152x128xf32>, vector<256x128xf32> -> vector<256x128xf32>
    %30 = vector.shape_cast %29 : vector<256x128xf32> to vector<1x16x16x128xf32>
    %c0_46 = arith.constant 0 : index
    %c0_47 = arith.constant 0 : index
    %c0_48 = arith.constant 0 : index
    %c0_49 = arith.constant 0 : index
    %31 = vector.load %arg3[%c0_46, %c0_47, %c0_48, %c0_49] : memref<1x16x16x128xf32, #tpu.memory_space<vmem>>, vector<1x16x16x128xf32>
    tpu.vector_store %arg3[%c0_46, %c0_47, %c0_48, %c0_49], %30 {strides = array<i32>} : memref<1x16x16x128xf32, #tpu.memory_space<vmem>>, vector<1x16x16x128xf32>,
    %cst_50 = arith.constant dense<0.000000e+00> : vector<128xf32>
    %32 = vector.multi_reduction <add>, %29, %cst_50 [0] : vector<256x128xf32> to vector<128xf32>
    %33 = vector.shape_cast %32 : vector<128xf32> to vector<1x128xf32>
    %34 = arith.mulf %29, %29 : vector<256x128xf32>
    %cst_51 = arith.constant dense<0.000000e+00> : vector<128xf32>
    %35 = vector.multi_reduction <add>, %34, %cst_51 [0] : vector<256x128xf32> to vector<128xf32>
    %36 = vector.shape_cast %35 : vector<128xf32> to vector<1x128xf32>
    %37 = tpu.concatenate %33, %36 in 0 : vector<1x128xf32>, vector<1x128xf32> -> vector<2x128xf32>
    %c0_52 = arith.constant 0 : index
    %c0_53 = arith.constant 0 : index
    %c0_54 = arith.constant 0 : index
    %38 = vector.load %arg4[%c0_52, %c0_53, %c0_54] : memref<1x2x128xf32, #tpu.memory_space<vmem>>, vector<1x2x128xf32>
    %39 = vector.shape_cast %38 : vector<1x2x128xf32> to vector<2x128xf32>
    %40 = vector.shape_cast %37 : vector<2x128xf32> to vector<1x2x128xf32>
    tpu.vector_store %arg4[%c0_52, %c0_53, %c0_54], %40 {strides = array<i32>} : memref<1x2x128xf32, #tpu.memory_space<vmem>>, vector<1x2x128xf32>,
    return
  }
  func.func @transform_0(%arg0: i32) -> (i32, i32, i32, i32) {
    %c0_i32 = arith.constant 0 : i32
    %c0_i32_0 = arith.constant 0 : i32
    %c0_i32_1 = arith.constant 0 : i32
    %c0_i32_2 = arith.constant 0 : i32
    return %arg0, %c0_i32, %c0_i32_0, %c0_i32_1 : i32, i32, i32, i32
  }
  func.func @transform_1(%arg0: i32) -> (i32, i32) {
    %c0_i32 = arith.constant 0 : i32
    %c0_i32_0 = arith.constant 0 : i32
    %c0_i32_1 = arith.constant 0 : i32
    return %c0_i32, %c0_i32_0 : i32, i32
  }
  func.func @transform_2(%arg0: i32) -> (i32, i32, i32, i32) {
    %c0_i32 = arith.constant 0 : i32
    %c0_i32_0 = arith.constant 0 : i32
    %c0_i32_1 = arith.constant 0 : i32
    %c0_i32_2 = arith.constant 0 : i32
    return %arg0, %c0_i32, %c0_i32_0, %c0_i32_1 : i32, i32, i32, i32
  }
  func.func @transform_3(%arg0: i32) -> (i32, i32, i32) {
    %c0_i32 = arith.constant 0 : i32
    %c0_i32_0 = arith.constant 0 : i32
    %c0_i32_1 = arith.constant 0 : i32
    return %arg0, %c0_i32, %c0_i32_0 : i32, i32, i32
  }
}

</mosaic_0001>

<llo_original>
// kernel: basic_block_forward.5
$region0: #{basic_block_forward.5}
  #allocation0 [shape = 'u32[]', space=smem, size = 0x4, offset = 0x4, fixed_abs, tag = 'smem constant byte address 0x4 - core index']
  #allocation1 [shape = 'u32[144,128]{1,0:T(1,128)}', space=vmem, size = 0x12000, scoped, tag = 'internal scratch']
  %s0 = inlined_call_operand.vmem [shape: f32[2,16,16,128], index: 0, kind: input, shape index: {}]
  %s1 = inlined_call_operand.vmem [shape: f32[2,16,16,128], index: 1, kind: input, shape index: {}]
  %s2 = inlined_call_operand.vmem [shape: f32[2,128], index: 2, kind: input, shape index: {}]
  %s3 = inlined_call_operand.vmem [shape: f32[2,16,16,128], index: 3, kind: output, shape index: {}]
  %s4 = sld [smem:[#allocation0]]
  $region45: #{basic_block_forward.5} parent=0
    _
  %s6 = ssub.s32 1, %s4
  %s7 = scalar_select 0, %s6, %s4
  loop: start=0, step=1, limit=4
  $region2: #{basic_block_forward.5} parent=0 // loop_pre_header
    _
  $region3: #{basic_block_forward.5} parent=0 // loop_header
    %s9 = sphi 0, %s13
    %p10 = scmp.ge.s32.totalorder %s9, 4
    %s19 = sphi 0, %s21
    %s22 = sphi 0, %s19
    %s23 = sphi 0, %s22
    %s39 = sphi 0, %s23
    %s45 = sphi 0, %s47
    %s48 = sphi 0, %s45
    %s49 = sphi 0, %s48
    %s65 = sphi 0, %s49
    %s69 = sphi 0, %s69
    %s71 = sphi 0, %s69
    %s72 = sphi 0, %s71
    %s86 = sphi 0, %s72
    %s92 = sphi 0, %s94
    %s95 = sphi 0, %s92
    %s96 = sphi 0, %s95
    %s112 = sphi 0, %s96
  $region4: #{basic_block_forward.5} parent=0 // loop_header_branch
    %12 = sbr.rel (%p10) target = $region8
  $region5: #{basic_block_forward.5} parent=0 // loop_body
    %s14 = ssub.s32 %s9, 1
    %s15 = ssub.s32 %s9, 2
    %s16 = sadd.s32 %s9, 1
    %s17 = ssub.s32 %s9, %s16
    %p18 = scmp.eq.s32.totalorder %s17, 0
    %s20 = sadd.s32 %s19, 1
    %s21 = scalar_select %p18, %s19, %s20
    %p24 = pneg %p18
    %p25 = scmp.eq.s32.totalorder %s9, 1
    %p26 = por %p24, %p25
    %p27 = scmp.ne.s32.totalorder %s19, %s22
    %p28 = scmp.eq.s32.totalorder %s9, 0
    %p29 = por %p27, %p28
    %p30 = scmp.ne.s32.totalorder %s19, %s22
    %p31 = scmp.eq.s32.totalorder %s14, 1
    %p32 = por %p30, %p31
    %p33 = scmp.ne.s32.totalorder %s22, %s23
    %p34 = scmp.eq.s32.totalorder %s14, 0
    %p35 = por %p33, %p34
    %p36 = scmp.ne.s32.totalorder %s22, %s23
    %p37 = scmp.eq.s32.totalorder %s15, 1
    %p38 = por %p36, %p37
    %p40 = scmp.ne.s32.totalorder %s23, %s39
    %p41 = scmp.eq.s32.totalorder %s15, 0
    %p42 = por %p40, %p41
    %s43 = ssub.s32 %s9, %s16
    %p44 = scmp.eq.s32.totalorder %s43, 0
    %s46 = sadd.s32 %s45, 1
    %s47 = scalar_select %p44, %s45, %s46
    %p50 = pneg %p44
    %p51 = scmp.eq.s32.totalorder %s9, 1
    %p52 = por %p50, %p51
    %p53 = scmp.ne.s32.totalorder %s45, %s48
    %p54 = scmp.eq.s32.totalorder %s9, 0
    %p55 = por %p53, %p54
    %p56 = scmp.ne.s32.totalorder %s45, %s48
    %p57 = scmp.eq.s32.totalorder %s14, 1
    %p58 = por %p56, %p57
    %p59 = scmp.ne.s32.totalorder %s48, %s49
    %p60 = scmp.eq.s32.totalorder %s14, 0
    %p61 = por %p59, %p60
    %p62 = scmp.ne.s32.totalorder %s48, %s49
    %p63 = scmp.eq.s32.totalorder %s15, 1
    %p64 = por %p62, %p63
    %p66 = scmp.ne.s32.totalorder %s49, %s65
    %p67 = scmp.eq.s32.totalorder %s15, 0
    %p68 = por %p66, %p67
    %s70 = sadd.s32 %s69, 1
    %p73 = scmp.eq.s32.totalorder %s9, 1
    %p74 = scmp.ne.s32.totalorder %s69, %s71
    %p75 = scmp.eq.s32.totalorder %s9, 0
    %p76 = por %p74, %p75
    %p77 = scmp.ne.s32.totalorder %s69, %s71
    %p78 = scmp.eq.s32.totalorder %s14, 1
    %p79 = por %p77, %p78
    %p80 = scmp.ne.s32.totalorder %s71, %s72
    %p81 = scmp.eq.s32.totalorder %s14, 0
    %p82 = por %p80, %p81
    %p83 = scmp.ne.s32.totalorder %s71, %s72
    %p84 = scmp.eq.s32.totalorder %s15, 1
    %p85 = por %p83, %p84
    %p87 = scmp.ne.s32.totalorder %s72, %s86
    %p88 = scmp.eq.s32.totalorder %s15, 0
    %p89 = por %p87, %p88
    %s90 = ssub.s32 %s9, %s16
    %p91 = scmp.eq.s32.totalorder %s90, 0
    %s93 = sadd.s32 %s92, 1
    %s94 = scalar_select %p91, %s92, %s93
    %p97 = pneg %p91
    %p98 = scmp.eq.s32.totalorder %s9, 1
    %p99 = por %p97, %p98
    %p100 = scmp.ne.s32.totalorder %s92, %s95
    %p101 = scmp.eq.s32.totalorder %s9, 0
    %p102 = por %p100, %p101
    %p103 = scmp.ne.s32.totalorder %s92, %s95
    %p104 = scmp.eq.s32.totalorder %s14, 1
    %p105 = por %p103, %p104
    %p106 = scmp.ne.s32.totalorder %s95, %s96
    %p107 = scmp.eq.s32.totalorder %s14, 0
    %p108 = por %p106, %p107
    %p109 = scmp.ne.s32.totalorder %s95, %s96
    %p110 = scmp.eq.s32.totalorder %s15, 1
    %p111 = por %p109, %p110
    %p113 = scmp.ne.s32.totalorder %s96, %s112
    %p114 = scmp.eq.s32.totalorder %s15, 0
    %p115 = por %p113, %p114
    %p116 = scmp.le.s32.totalorder 1, %s9
    %p117 = scmp.lt.s32.totalorder %s9, 3
    %p118 = pnand %p116, %p117
    %p119 = pneg %p118
    // Predicated region
    $region9: #{basic_block_forward.5} parent=5 // pred_check
      _
    $region10: #{basic_block_forward.5} parent=5 // pred_check_branch
      %121 = sbr.rel (%p118) target = $region12
    $region11: #{basic_block_forward.5} parent=5 // pred_region
      %s122 = ssub.s32 %s9, 1
      // Predicated region
      $region13: #{basic_block_forward.5} parent=11 // pred_check
        %p123 = pneg %p82
      $region14: #{basic_block_forward.5} parent=11 // pred_check_branch
        %125 = sbr.rel (%p123) target = $region16
      $region15: #{basic_block_forward.5} parent=11 // pred_region
        _
      $region16: #{basic_block_forward.5} parent=11 // pred_fallthru
        _
    $region12: #{basic_block_forward.5} parent=5 // pred_fallthru
      _
    %p126 = scmp.lt.s32.totalorder %s9, 2
    // Predicated region
    $region17: #{basic_block_forward.5} parent=5 // pred_check
      %p127 = pneg %p126
    $region18: #{basic_block_forward.5} parent=5 // pred_check_branch
      %129 = sbr.rel (%p127) target = $region20
    $region19: #{basic_block_forward.5} parent=5 // pred_region
      // Predicated region
      $region21: #{basic_block_forward.5} parent=19 // pred_check
        %p130 = pneg %p29
      $region22: #{basic_block_forward.5} parent=19 // pred_check_branch
        %132 = sbr.rel (%p130) target = $region24
      $region23: #{basic_block_forward.5} parent=19 // pred_region
        %p133 = scmp.lt.s32.totalorder %s9, 1
        %s134 = scalar_select %p133, %s9, 1
        %s135 = smul.addr %s134, 32
        %s136 = smul.addr %s135, 8
        %s137 = scalar_lea.vmem %s0, %s136
      $region24: #{basic_block_forward.5} parent=19 // pred_fallthru
        _
      // Predicated region
      $region25: #{basic_block_forward.5} parent=19 // pred_check
        %p138 = pneg %p55
      $region26: #{basic_block_forward.5} parent=19 // pred_check_branch
        %140 = sbr.rel (%p138) target = $region28
      $region27: #{basic_block_forward.5} parent=19 // pred_region
        %p141 = scmp.lt.s32.totalorder %s9, 1
        %s142 = scalar_select %p141, %s9, 1
        %s143 = smul.addr %s142, 32
        %s144 = smul.addr %s143, 8
        %s145 = scalar_lea.vmem %s1, %s144
      $region28: #{basic_block_forward.5} parent=19 // pred_fallthru
        _
    $region20: #{basic_block_forward.5} parent=5 // pred_fallthru
      _
    %p146 = scmp.le.s32.totalorder 1, %s9
    %p147 = scmp.lt.s32.totalorder %s9, 3
    %p148 = pnand %p146, %p147
    %p149 = pneg %p148
    // Predicated region
    $region29: #{basic_block_forward.5} parent=5 // pred_check
      _
    $region30: #{basic_block_forward.5} parent=5 // pred_check_branch
      %151 = sbr.rel (%p148) target = $region32
    $region31: #{basic_block_forward.5} parent=5 // pred_region
      %s152 = ssub.s32 %s9, 1
      %p153 = scmp.lt.s32.totalorder %s14, 1
      %s154 = scalar_select %p153, %s14, 1
      %s155 = smul.addr %s154, 32
      %s156 = smul.addr %s155, 8
      %s157 = scalar_lea.vmem %s0, %s156
      %p158 = pneg %p35
      %p159 = pneg %p32
      %p160 = scmp.lt.s32.totalorder %s14, 1
      %s161 = scalar_select %p160, %s14, 1
      %s162 = smul.addr %s161, 32
      %s163 = smul.addr %s162, 8
      %s164 = scalar_lea.vmem %s1, %s163
      %p165 = pneg %p61
      %p166 = pneg %p58
      %p167 = pneg %p82
      %p168 = pneg %p79
      %p169 = pneg %p108
      %p170 = pneg %p105
      %p171 = scmp.lt.s32.totalorder %s14, 1
      %s172 = scalar_select %p171, %s14, 1
      %s173 = smul.addr %s172, 32
      %s174 = smul.addr %s173, 8
      %s175 = scalar_lea.vmem %s3, %s174
      %p176 = scmp.lt.s32.totalorder %s14, 1
      %s177 = scalar_select %p176, %s14, 1
      %s178 = smul.addr %s177, 32
      %s179 = smul.addr %s178, 8
      %s180 = scalar_lea.vmem %s0, %s179
      %p181 = scmp.lt.s32.totalorder %s14, 1
      %s182 = scalar_select %p181, %s14, 1
      %s183 = smul.addr %s182, 32
      %s184 = smul.addr %s183, 8
      %s185 = scalar_lea.vmem %s1, %s184
      %p186 = scmp.lt.s32.totalorder %s14, 1
      %s187 = scalar_select %p186, %s14, 1
      %s188 = smul.addr %s187, 32
      %s189 = smul.addr %s188, 8
      %s190 = scalar_lea.vmem %s3, %s189
      %v191 = vld [vmem:[%s180] sm:$0xff]
      %v192 = vld [vmem:[%s180 + $0x8] sm:$0xff]
      %v193 = vld [vmem:[%s180 + $0x10] sm:$0xff]
      %v194 = vld [vmem:[%s180 + $0x18] sm:$0xff]
      %v195 = vld [vmem:[%s180 + $0x20] sm:$0xff]
      %v196 = vld [vmem:[%s180 + $0x28] sm:$0xff]
      %v197 = vld [vmem:[%s180 + $0x30] sm:$0xff]
      %v198 = vld [vmem:[%s180 + $0x38] sm:$0xff]
      %v199 = vld [vmem:[%s180 + $0x40] sm:$0xff]
      %v200 = vld [vmem:[%s180 + $0x48] sm:$0xff]
      %v201 = vld [vmem:[%s180 + $0x50] sm:$0xff]
      %v202 = vld [vmem:[%s180 + $0x58] sm:$0xff]
      %v203 = vld [vmem:[%s180 + $0x60] sm:$0xff]
      %v204 = vld [vmem:[%s180 + $0x68] sm:$0xff]
      %v205 = vld [vmem:[%s180 + $0x70] sm:$0xff]
      %v206 = vld [vmem:[%s180 + $0x78] sm:$0xff]
      %v207 = vld [vmem:[%s180 + $0x80] sm:$0xff]
      %v208 = vld [vmem:[%s180 + $0x88] sm:$0xff]
      %v209 = vld [vmem:[%s180 + $0x90] sm:$0xff]
      %v210 = vld [vmem:[%s180 + $0x98] sm:$0xff]
      %v211 = vld [vmem:[%s180 + $0xa0] sm:$0xff]
      %v212 = vld [vmem:[%s180 + $0xa8] sm:$0xff]
      %v213 = vld [vmem:[%s180 + $0xb0] sm:$0xff]
      %v214 = vld [vmem:[%s180 + $0xb8] sm:$0xff]
      %v215 = vld [vmem:[%s180 + $0xc0] sm:$0xff]
      %v216 = vld [vmem:[%s180 + $0xc8] sm:$0xff]
      %v217 = vld [vmem:[%s180 + $0xd0] sm:$0xff]
      %v218 = vld [vmem:[%s180 + $0xd8] sm:$0xff]
      %v219 = vld [vmem:[%s180 + $0xe0] sm:$0xff]
      %v220 = vld [vmem:[%s180 + $0xe8] sm:$0xff]
      %v221 = vld [vmem:[%s180 + $0xf0] sm:$0xff]
      %v222 = vld [vmem:[%s180 + $0xf8] sm:$0xff]
      %v223 = vld [vmem:[%s2] sm:$0x1]
      %v224 = vlaneseq
      %v225 = vshrl.u32 %v224, 7
      %v226 = vsub.s32 0, %v225
      %v227 = vrot.slane %v223, %v226
      %v228 = vmul.f32 %v191, %v227
      %v229 = vmul.f32 %v192, %v227
      %v230 = vmul.f32 %v193, %v227
      %v231 = vmul.f32 %v194, %v227
      %v232 = vmul.f32 %v195, %v227
      %v233 = vmul.f32 %v196, %v227
      %v234 = vmul.f32 %v197, %v227
      %v235 = vmul.f32 %v198, %v227
      %v236 = vmul.f32 %v199, %v227
      %v237 = vmul.f32 %v200, %v227
      %v238 = vmul.f32 %v201, %v227
      %v239 = vmul.f32 %v202, %v227
      %v240 = vmul.f32 %v203, %v227
      %v241 = vmul.f32 %v204, %v227
      %v242 = vmul.f32 %v205, %v227
      %v243 = vmul.f32 %v206, %v227
      %v244 = vmul.f32 %v207, %v227
      %v245 = vmul.f32 %v208, %v227
      %v246 = vmul.f32 %v209, %v227
      %v247 = vmul.f32 %v210, %v227
      %v248 = vmul.f32 %v211, %v227
      %v249 = vmul.f32 %v212, %v227
      %v250 = vmul.f32 %v213, %v227
      %v251 = vmul.f32 %v214, %v227
      %v252 = vmul.f32 %v215, %v227
      %v253 = vmul.f32 %v216, %v227
      %v254 = vmul.f32 %v217, %v227
      %v255 = vmul.f32 %v218, %v227
      %v256 = vmul.f32 %v219, %v227
      %v257 = vmul.f32 %v220, %v227
      %v258 = vmul.f32 %v221, %v227
      %v259 = vmul.f32 %v222, %v227
      %v260 = vld [vmem:[%s2 + $0x1] sm:$0x1]
      %v261 = vlaneseq
      %v262 = vshrl.u32 %v261, 7
      %v263 = vsub.s32 0, %v262
      %v264 = vrot.slane %v260, %v263
      %v265 = vadd.f32 %v228, %v264
      %v266 = vadd.f32 %v229, %v264
      %v267 = vadd.f32 %v230, %v264
      %v268 = vadd.f32 %v231, %v264
      %v269 = vadd.f32 %v232, %v264
      %v270 = vadd.f32 %v233, %v264
      %v271 = vadd.f32 %v234, %v264
      %v272 = vadd.f32 %v235, %v264
      %v273 = vadd.f32 %v236, %v264
      %v274 = vadd.f32 %v237, %v264
      %v275 = vadd.f32 %v238, %v264
      %v276 = vadd.f32 %v239, %v264
      %v277 = vadd.f32 %v240, %v264
      %v278 = vadd.f32 %v241, %v264
      %v279 = vadd.f32 %v242, %v264
      %v280 = vadd.f32 %v243, %v264
      %v281 = vadd.f32 %v244, %v264
      %v282 = vadd.f32 %v245, %v264
      %v283 = vadd.f32 %v246, %v264
      %v284 = vadd.f32 %v247, %v264
      %v285 = vadd.f32 %v248, %v264
      %v286 = vadd.f32 %v249, %v264
      %v287 = vadd.f32 %v250, %v264
      %v288 = vadd.f32 %v251, %v264
      %v289 = vadd.f32 %v252, %v264
      %v290 = vadd.f32 %v253, %v264
      %v291 = vadd.f32 %v254, %v264
      %v292 = vadd.f32 %v255, %v264
      %v293 = vadd.f32 %v256, %v264
      %v294 = vadd.f32 %v257, %v264
      %v295 = vadd.f32 %v258, %v264
      %v296 = vadd.f32 %v259, %v264
      %v297 = vld [vmem:[%s185] sm:$0xff]
      %v298 = vld [vmem:[%s185 + $0x8] sm:$0xff]
      %v299 = vld [vmem:[%s185 + $0x10] sm:$0xff]
      %v300 = vld [vmem:[%s185 + $0x18] sm:$0xff]
      %v301 = vld [vmem:[%s185 + $0x20] sm:$0xff]
      %v302 = vld [vmem:[%s185 + $0x28] sm:$0xff]
      %v303 = vld [vmem:[%s185 + $0x30] sm:$0xff]
      %v304 = vld [vmem:[%s185 + $0x38] sm:$0xff]
      %v305 = vld [vmem:[%s185 + $0x40] sm:$0xff]
      %v306 = vld [vmem:[%s185 + $0x48] sm:$0xff]
      %v307 = vld [vmem:[%s185 + $0x50] sm:$0xff]
      %v308 = vld [vmem:[%s185 + $0x58] sm:$0xff]
      %v309 = vld [vmem:[%s185 + $0x60] sm:$0xff]
      %v310 = vld [vmem:[%s185 + $0x68] sm:$0xff]
      %v311 = vld [vmem:[%s185 + $0x70] sm:$0xff]
      %v312 = vld [vmem:[%s185 + $0x78] sm:$0xff]
      %v313 = vld [vmem:[%s185 + $0x80] sm:$0xff]
      %v314 = vld [vmem:[%s185 + $0x88] sm:$0xff]
      %v315 = vld [vmem:[%s185 + $0x90] sm:$0xff]
      %v316 = vld [vmem:[%s185 + $0x98] sm:$0xff]
      %v317 = vld [vmem:[%s185 + $0xa0] sm:$0xff]
      %v318 = vld [vmem:[%s185 + $0xa8] sm:$0xff]
      %v319 = vld [vmem:[%s185 + $0xb0] sm:$0xff]
      %v320 = vld [vmem:[%s185 + $0xb8] sm:$0xff]
      %v321 = vld [vmem:[%s185 + $0xc0] sm:$0xff]
      %v322 = vld [vmem:[%s185 + $0xc8] sm:$0xff]
      %v323 = vld [vmem:[%s185 + $0xd0] sm:$0xff]
      %v324 = vld [vmem:[%s185 + $0xd8] sm:$0xff]
      %v325 = vld [vmem:[%s185 + $0xe0] sm:$0xff]
      %v326 = vld [vmem:[%s185 + $0xe8] sm:$0xff]
      %v327 = vld [vmem:[%s185 + $0xf0] sm:$0xff]
      %v328 = vld [vmem:[%s185 + $0xf8] sm:$0xff]
      %v329 = vadd.f32 %v265, %v297
      %v330 = vadd.f32 %v266, %v298
      %v331 = vadd.f32 %v267, %v299
      %v332 = vadd.f32 %v268, %v300
      %v333 = vadd.f32 %v269, %v301
      %v334 = vadd.f32 %v270, %v302
      %v335 = vadd.f32 %v271, %v303
      %v336 = vadd.f32 %v272, %v304
      %v337 = vadd.f32 %v273, %v305
      %v338 = vadd.f32 %v274, %v306
      %v339 = vadd.f32 %v275, %v307
      %v340 = vadd.f32 %v276, %v308
      %v341 = vadd.f32 %v277, %v309
      %v342 = vadd.f32 %v278, %v310
      %v343 = vadd.f32 %v279, %v311
      %v344 = vadd.f32 %v280, %v312
      %v345 = vadd.f32 %v281, %v313
      %v346 = vadd.f32 %v282, %v314
      %v347 = vadd.f32 %v283, %v315
      %v348 = vadd.f32 %v284, %v316
      %v349 = vadd.f32 %v285, %v317
      %v350 = vadd.f32 %v286, %v318
      %v351 = vadd.f32 %v287, %v319
      %v352 = vadd.f32 %v288, %v320
      %v353 = vadd.f32 %v289, %v321
      %v354 = vadd.f32 %v290, %v322
      %v355 = vadd.f32 %v291, %v323
      %v356 = vadd.f32 %v292, %v324
      %v357 = vadd.f32 %v293, %v325
      %v358 = vadd.f32 %v294, %v326
      %v359 = vadd.f32 %v295, %v327
      %v360 = vadd.f32 %v296, %v328
      %v361 = vmax.f32 %v329, 0.0
      %v362 = vmax.f32 %v330, 0.0
      %v363 = vmax.f32 %v331, 0.0
      %v364 = vmax.f32 %v332, 0.0
      %v365 = vmax.f32 %v333, 0.0
      %v366 = vmax.f32 %v334, 0.0
      %v367 = vmax.f32 %v335, 0.0
      %v368 = vmax.f32 %v336, 0.0
      %v369 = vmax.f32 %v337, 0.0
      %v370 = vmax.f32 %v338, 0.0
      %v371 = vmax.f32 %v339, 0.0
      %v372 = vmax.f32 %v340, 0.0
      %v373 = vmax.f32 %v341, 0.0
      %v374 = vmax.f32 %v342, 0.0
      %v375 = vmax.f32 %v343, 0.0
      %v376 = vmax.f32 %v344, 0.0
      %v377 = vmax.f32 %v345, 0.0
      %v378 = vmax.f32 %v346, 0.0
      %v379 = vmax.f32 %v347, 0.0
      %v380 = vmax.f32 %v348, 0.0
      %v381 = vmax.f32 %v349, 0.0
      %v382 = vmax.f32 %v350, 0.0
      %v383 = vmax.f32 %v351, 0.0
      %v384 = vmax.f32 %v352, 0.0
      %v385 = vmax.f32 %v353, 0.0
      %v386 = vmax.f32 %v354, 0.0
      %v387 = vmax.f32 %v355, 0.0
      %v388 = vmax.f32 %v356, 0.0
      %v389 = vmax.f32 %v357, 0.0
      %v390 = vmax.f32 %v358, 0.0
      %v391 = vmax.f32 %v359, 0.0
      %v392 = vmax.f32 %v360, 0.0
      %393 = vst [vmem:[%s190] sm:$0xff] %v361
      %394 = vst [vmem:[%s190 + $0x8] sm:$0xff] %v362
      %395 = vst [vmem:[%s190 + $0x10] sm:$0xff] %v363
      %396 = vst [vmem:[%s190 + $0x18] sm:$0xff] %v364
      %397 = vst [vmem:[%s190 + $0x20] sm:$0xff] %v365
      %398 = vst [vmem:[%s190 + $0x28] sm:$0xff] %v366
      %399 = vst [vmem:[%s190 + $0x30] sm:$0xff] %v367
      %400 = vst [vmem:[%s190 + $0x38] sm:$0xff] %v368
      %401 = vst [vmem:[%s190 + $0x40] sm:$0xff] %v369
      %402 = vst [vmem:[%s190 + $0x48] sm:$0xff] %v370
      %403 = vst [vmem:[%s190 + $0x50] sm:$0xff] %v371
      %404 = vst [vmem:[%s190 + $0x58] sm:$0xff] %v372
      %405 = vst [vmem:[%s190 + $0x60] sm:$0xff] %v373
      %406 = vst [vmem:[%s190 + $0x68] sm:$0xff] %v374
      %407 = vst [vmem:[%s190 + $0x70] sm:$0xff] %v375
      %408 = vst [vmem:[%s190 + $0x78] sm:$0xff] %v376
      %409 = vst [vmem:[%s190 + $0x80] sm:$0xff] %v377
      %410 = vst [vmem:[%s190 + $0x88] sm:$0xff] %v378
      %411 = vst [vmem:[%s190 + $0x90] sm:$0xff] %v379
      %412 = vst [vmem:[%s190 + $0x98] sm:$0xff] %v380
      %413 = vst [vmem:[%s190 + $0xa0] sm:$0xff] %v381
      %414 = vst [vmem:[%s190 + $0xa8] sm:$0xff] %v382
      %415 = vst [vmem:[%s190 + $0xb0] sm:$0xff] %v383
      %416 = vst [vmem:[%s190 + $0xb8] sm:$0xff] %v384
      %417 = vst [vmem:[%s190 + $0xc0] sm:$0xff] %v385
      %418 = vst [vmem:[%s190 + $0xc8] sm:$0xff] %v386
      %419 = vst [vmem:[%s190 + $0xd0] sm:$0xff] %v387
      %420 = vst [vmem:[%s190 + $0xd8] sm:$0xff] %v388
      %421 = vst [vmem:[%s190 + $0xe0] sm:$0xff] %v389
      %422 = vst [vmem:[%s190 + $0xe8] sm:$0xff] %v390
      %423 = vst [vmem:[%s190 + $0xf0] sm:$0xff] %v391
      %424 = vst [vmem:[%s190 + $0xf8] sm:$0xff] %v392
      %p425 = scmp.lt.s32.totalorder %s14, 1
      %s426 = scalar_select %p425, %s14, 1
      %s427 = smul.addr %s426, 32
      %s428 = smul.addr %s427, 8
      %s429 = scalar_lea.vmem %s3, %s428
      // Predicated region
      $region33: #{basic_block_forward.5} parent=31 // pred_check
        %p430 = pneg %p105
      $region34: #{basic_block_forward.5} parent=31 // pred_check_branch
        %432 = sbr.rel (%p430) target = $region36
      $region35: #{basic_block_forward.5} parent=31 // pred_region
        _
      $region36: #{basic_block_forward.5} parent=31 // pred_fallthru
        _
    $region32: #{basic_block_forward.5} parent=5 // pred_fallthru
      _
    %p433 = scmp.le.s32.totalorder 2, %s9
    // Predicated region
    $region37: #{basic_block_forward.5} parent=5 // pred_check
      %p434 = pneg %p433
    $region38: #{basic_block_forward.5} parent=5 // pred_check_branch
      %436 = sbr.rel (%p434) target = $region40
    $region39: #{basic_block_forward.5} parent=5 // pred_region
      %s437 = ssub.s32 %s9, 2
      // Predicated region
      $region41: #{basic_block_forward.5} parent=39 // pred_check
        %p438 = pneg %p111
      $region42: #{basic_block_forward.5} parent=39 // pred_check_branch
        %440 = sbr.rel (%p438) target = $region44
      $region43: #{basic_block_forward.5} parent=39 // pred_region
        %p441 = scmp.lt.s32.totalorder %s15, 1
        %s442 = scalar_select %p441, %s15, 1
        %s443 = smul.addr %s442, 32
        %s444 = smul.addr %s443, 8
        %s445 = scalar_lea.vmem %s3, %s444
      $region44: #{basic_block_forward.5} parent=39 // pred_fallthru
        _
    $region40: #{basic_block_forward.5} parent=5 // pred_fallthru
      _
  $region6: #{basic_block_forward.5} parent=0 // loop_footer
    %s13 = sadd.s32 1, %s9
  $region7: #{basic_block_forward.5} parent=0 // loop_footer_branch
    %8 = sbr.rel target = $region3
  $region8: #{basic_block_forward.5} parent=0 // loop_exit
    _

// kernel: basic_block_forward.4
$region0: #{basic_block_forward.4}
  #allocation0 [shape = 'u32[]', space=smem, size = 0x4, offset = 0x4, fixed_abs, tag = 'smem constant byte address 0x4 - core index']
  #allocation1 [shape = 'u32[144,128]{1,0:T(1,128)}', space=vmem, size = 0x12000, scoped, tag = 'internal scratch']
  #allocation2 [shape = 'f32[18,18,128]{2,1,0:T(8,128)}', space=vmem, size = 0x36000, scoped, tag = 'scratch operand']
  %s0 = inlined_call_operand.vmem [shape: f32[2,16,16,128], index: 0, kind: input, shape index: {}]
  %s1 = inlined_call_operand.vmem [shape: f32[2,128], index: 1, kind: input, shape index: {}]
  %s2 = inlined_call_operand.vmem [shape: f32[1152,128], index: 2, kind: input, shape index: {}]
  %s3 = inlined_call_operand.vmem [shape: f32[2,16,16,128], index: 3, kind: output, shape index: {0}]
  %s4 = inlined_call_operand.vmem [shape: f32[2,2,128], index: 4, kind: output, shape index: {1}]
  %5 = xla_tuple %s3, %s4
  %s6 = sld [smem:[#allocation0]]
  $region53: #{basic_block_forward.4} parent=0
    _
  %s8 = ssub.s32 1, %s6
  %s9 = scalar_select 0, %s8, %s6
  loop: start=0, step=1, limit=4
  $region2: #{basic_block_forward.4} parent=0 // loop_pre_header
    _
  $region3: #{basic_block_forward.4} parent=0 // loop_header
    %s11 = sphi 0, %s15
    %p12 = scmp.ge.s32.totalorder %s11, 4
    %s21 = sphi 0, %s23
    %s24 = sphi 0, %s21
    %s25 = sphi 0, %s24
    %s41 = sphi 0, %s25
    %s45 = sphi 0, %s45
    %s47 = sphi 0, %s45
    %s48 = sphi 0, %s47
    %s62 = sphi 0, %s48
    %s66 = sphi 0, %s66
    %s68 = sphi 0, %s66
    %s69 = sphi 0, %s68
    %s83 = sphi 0, %s69
    %s89 = sphi 0, %s91
    %s92 = sphi 0, %s89
    %s93 = sphi 0, %s92
    %s109 = sphi 0, %s93
    %s115 = sphi 0, %s117
    %s118 = sphi 0, %s115
    %s119 = sphi 0, %s118
    %s135 = sphi 0, %s119
  $region4: #{basic_block_forward.4} parent=0 // loop_header_branch
    %14 = sbr.rel (%p12) target = $region8
  $region5: #{basic_block_forward.4} parent=0 // loop_body
    %s16 = ssub.s32 %s11, 1
    %s17 = ssub.s32 %s11, 2
    %s18 = sadd.s32 %s11, 1
    %s19 = ssub.s32 %s11, %s18
    %p20 = scmp.eq.s32.totalorder %s19, 0
    %s22 = sadd.s32 %s21, 1
    %s23 = scalar_select %p20, %s21, %s22
    %p26 = pneg %p20
    %p27 = scmp.eq.s32.totalorder %s11, 1
    %p28 = por %p26, %p27
    %p29 = scmp.ne.s32.totalorder %s21, %s24
    %p30 = scmp.eq.s32.totalorder %s11, 0
    %p31 = por %p29, %p30
    %p32 = scmp.ne.s32.totalorder %s21, %s24
    %p33 = scmp.eq.s32.totalorder %s16, 1
    %p34 = por %p32, %p33
    %p35 = scmp.ne.s32.totalorder %s24, %s25
    %p36 = scmp.eq.s32.totalorder %s16, 0
    %p37 = por %p35, %p36
    %p38 = scmp.ne.s32.totalorder %s24, %s25
    %p39 = scmp.eq.s32.totalorder %s17, 1
    %p40 = por %p38, %p39
    %p42 = scmp.ne.s32.totalorder %s25, %s41
    %p43 = scmp.eq.s32.totalorder %s17, 0
    %p44 = por %p42, %p43
    %s46 = sadd.s32 %s45, 1
    %p49 = scmp.eq.s32.totalorder %s11, 1
    %p50 = scmp.ne.s32.totalorder %s45, %s47
    %p51 = scmp.eq.s32.totalorder %s11, 0
    %p52 = por %p50, %p51
    %p53 = scmp.ne.s32.totalorder %s45, %s47
    %p54 = scmp.eq.s32.totalorder %s16, 1
    %p55 = por %p53, %p54
    %p56 = scmp.ne.s32.totalorder %s47, %s48
    %p57 = scmp.eq.s32.totalorder %s16, 0
    %p58 = por %p56, %p57
    %p59 = scmp.ne.s32.totalorder %s47, %s48
    %p60 = scmp.eq.s32.totalorder %s17, 1
    %p61 = por %p59, %p60
    %p63 = scmp.ne.s32.totalorder %s48, %s62
    %p64 = scmp.eq.s32.totalorder %s17, 0
    %p65 = por %p63, %p64
    %s67 = sadd.s32 %s66, 1
    %p70 = scmp.eq.s32.totalorder %s11, 1
    %p71 = scmp.ne.s32.totalorder %s66, %s68
    %p72 = scmp.eq.s32.totalorder %s11, 0
    %p73 = por %p71, %p72
    %p74 = scmp.ne.s32.totalorder %s66, %s68
    %p75 = scmp.eq.s32.totalorder %s16, 1
    %p76 = por %p74, %p75
    %p77 = scmp.ne.s32.totalorder %s68, %s69
    %p78 = scmp.eq.s32.totalorder %s16, 0
    %p79 = por %p77, %p78
    %p80 = scmp.ne.s32.totalorder %s68, %s69
    %p81 = scmp.eq.s32.totalorder %s17, 1
    %p82 = por %p80, %p81
    %p84 = scmp.ne.s32.totalorder %s69, %s83
    %p85 = scmp.eq.s32.totalorder %s17, 0
    %p86 = por %p84, %p85
    %s87 = ssub.s32 %s11, %s18
    %p88 = scmp.eq.s32.totalorder %s87, 0
    %s90 = sadd.s32 %s89, 1
    %s91 = scalar_select %p88, %s89, %s90
    %p94 = pneg %p88
    %p95 = scmp.eq.s32.totalorder %s11, 1
    %p96 = por %p94, %p95
    %p97 = scmp.ne.s32.totalorder %s89, %s92
    %p98 = scmp.eq.s32.totalorder %s11, 0
    %p99 = por %p97, %p98
    %p100 = scmp.ne.s32.totalorder %s89, %s92
    %p101 = scmp.eq.s32.totalorder %s16, 1
    %p102 = por %p100, %p101
    %p103 = scmp.ne.s32.totalorder %s92, %s93
    %p104 = scmp.eq.s32.totalorder %s16, 0
    %p105 = por %p103, %p104
    %p106 = scmp.ne.s32.totalorder %s92, %s93
    %p107 = scmp.eq.s32.totalorder %s17, 1
    %p108 = por %p106, %p107
    %p110 = scmp.ne.s32.totalorder %s93, %s109
    %p111 = scmp.eq.s32.totalorder %s17, 0
    %p112 = por %p110, %p111
    %s113 = ssub.s32 %s11, %s18
    %p114 = scmp.eq.s32.totalorder %s113, 0
    %s116 = sadd.s32 %s115, 1
    %s117 = scalar_select %p114, %s115, %s116
    %p120 = pneg %p114
    %p121 = scmp.eq.s32.totalorder %s11, 1
    %p122 = por %p120, %p121
    %p123 = scmp.ne.s32.totalorder %s115, %s118
    %p124 = scmp.eq.s32.totalorder %s11, 0
    %p125 = por %p123, %p124
    %p126 = scmp.ne.s32.totalorder %s115, %s118
    %p127 = scmp.eq.s32.totalorder %s16, 1
    %p128 = por %p126, %p127
    %p129 = scmp.ne.s32.totalorder %s118, %s119
    %p130 = scmp.eq.s32.totalorder %s16, 0
    %p131 = por %p129, %p130
    %p132 = scmp.ne.s32.totalorder %s118, %s119
    %p133 = scmp.eq.s32.totalorder %s17, 1
    %p134 = por %p132, %p133
    %p136 = scmp.ne.s32.totalorder %s119, %s135
    %p137 = scmp.eq.s32.totalorder %s17, 0
    %p138 = por %p136, %p137
    %p139 = scmp.le.s32.totalorder 1, %s11
    %p140 = scmp.lt.s32.totalorder %s11, 3
    %p141 = pnand %p139, %p140
    %p142 = pneg %p141
    // Predicated region
    $region9: #{basic_block_forward.4} parent=5 // pred_check
      _
    $region10: #{basic_block_forward.4} parent=5 // pred_check_branch
      %144 = sbr.rel (%p141) target = $region12
    $region11: #{basic_block_forward.4} parent=5 // pred_region
      %s145 = ssub.s32 %s11, 1
      // Predicated region
      $region13: #{basic_block_forward.4} parent=11 // pred_check
        %p146 = pneg %p58
      $region14: #{basic_block_forward.4} parent=11 // pred_check_branch
        %148 = sbr.rel (%p146) target = $region16
      $region15: #{basic_block_forward.4} parent=11 // pred_region
        _
      $region16: #{basic_block_forward.4} parent=11 // pred_fallthru
        _
      // Predicated region
      $region17: #{basic_block_forward.4} parent=11 // pred_check
        %p149 = pneg %p79
      $region18: #{basic_block_forward.4} parent=11 // pred_check_branch
        %151 = sbr.rel (%p149) target = $region20
      $region19: #{basic_block_forward.4} parent=11 // pred_region
        _
      $region20: #{basic_block_forward.4} parent=11 // pred_fallthru
        _
    $region12: #{basic_block_forward.4} parent=5 // pred_fallthru
      _
    %p152 = scmp.lt.s32.totalorder %s11, 2
    // Predicated region
    $region21: #{basic_block_forward.4} parent=5 // pred_check
      %p153 = pneg %p152
    $region22: #{basic_block_forward.4} parent=5 // pred_check_branch
      %155 = sbr.rel (%p153) target = $region24
    $region23: #{basic_block_forward.4} parent=5 // pred_region
      // Predicated region
      $region25: #{basic_block_forward.4} parent=23 // pred_check
        %p156 = pneg %p31
      $region26: #{basic_block_forward.4} parent=23 // pred_check_branch
        %158 = sbr.rel (%p156) target = $region28
      $region27: #{basic_block_forward.4} parent=23 // pred_region
        %p159 = scmp.lt.s32.totalorder %s11, 1
        %s160 = scalar_select %p159, %s11, 1
        %s161 = smul.addr %s160, 32
        %s162 = smul.addr %s161, 8
        %s163 = scalar_lea.vmem %s0, %s162
      $region28: #{basic_block_forward.4} parent=23 // pred_fallthru
        _
    $region24: #{basic_block_forward.4} parent=5 // pred_fallthru
      _
    %p164 = scmp.le.s32.totalorder 1, %s11
    %p165 = scmp.lt.s32.totalorder %s11, 3
    %p166 = pnand %p164, %p165
    %p167 = pneg %p166
    // Predicated region
    $region29: #{basic_block_forward.4} parent=5 // pred_check
      _
    $region30: #{basic_block_forward.4} parent=5 // pred_check_branch
      %169 = sbr.rel (%p166) target = $region32
    $region31: #{basic_block_forward.4} parent=5 // pred_region
      %s170 = ssub.s32 %s11, 1
      %p171 = scmp.lt.s32.totalorder %s16, 1
      %s172 = scalar_select %p171, %s16, 1
      %s173 = smul.addr %s172, 32
      %s174 = smul.addr %s173, 8
      %s175 = scalar_lea.vmem %s0, %s174
      %p176 = pneg %p37
      %p177 = pneg %p34
      %p178 = pneg %p58
      %p179 = pneg %p55
      %p180 = pneg %p79
      %p181 = pneg %p76
      %p182 = pneg %p105
      %p183 = pneg %p102
      %p184 = scmp.lt.s32.totalorder %s16, 1
      %s185 = scalar_select %p184, %s16, 1
      %s186 = smul.addr %s185, 32
      %s187 = smul.addr %s186, 8
      %s188 = scalar_lea.vmem %s3, %s187
      %p189 = pneg %p131
      %p190 = pneg %p128
      %p191 = scmp.lt.s32.totalorder %s16, 1
      %s192 = scalar_select %p191, %s16, 1
      %s193 = smul.addr %s192, 2
      %s194 = scalar_lea.vmem %s4, %s193
      %p195 = scmp.lt.s32.totalorder %s16, 1
      %s196 = scalar_select %p195, %s16, 1
      %s197 = smul.addr %s196, 32
      %s198 = smul.addr %s197, 8
      %s199 = scalar_lea.vmem %s0, %s198
      %p200 = scmp.lt.s32.totalorder %s16, 1
      %s201 = scalar_select %p200, %s16, 1
      %s202 = smul.addr %s201, 32
      %s203 = smul.addr %s202, 8
      %s204 = scalar_lea.vmem %s3, %s203
      %p205 = scmp.lt.s32.totalorder %s16, 1
      %s206 = scalar_select %p205, %s16, 1
      %s207 = smul.addr %s206, 2
      %s208 = scalar_lea.vmem %s4, %s207
      %v209 = vld [vmem:[%s199] sm:$0xff]
      %v210 = vld [vmem:[%s199 + $0x8] sm:$0xff]
      %v211 = vld [vmem:[%s199 + $0x10] sm:$0xff]
      %v212 = vld [vmem:[%s199 + $0x18] sm:$0xff]
      %v213 = vld [vmem:[%s199 + $0x20] sm:$0xff]
      %v214 = vld [vmem:[%s199 + $0x28] sm:$0xff]
      %v215 = vld [vmem:[%s199 + $0x30] sm:$0xff]
      %v216 = vld [vmem:[%s199 + $0x38] sm:$0xff]
      %v217 = vld [vmem:[%s199 + $0x40] sm:$0xff]
      %v218 = vld [vmem:[%s199 + $0x48] sm:$0xff]
      %v219 = vld [vmem:[%s199 + $0x50] sm:$0xff]
      %v220 = vld [vmem:[%s199 + $0x58] sm:$0xff]
      %v221 = vld [vmem:[%s199 + $0x60] sm:$0xff]
      %v222 = vld [vmem:[%s199 + $0x68] sm:$0xff]
      %v223 = vld [vmem:[%s199 + $0x70] sm:$0xff]
      %v224 = vld [vmem:[%s199 + $0x78] sm:$0xff]
      %v225 = vld [vmem:[%s199 + $0x80] sm:$0xff]
      %v226 = vld [vmem:[%s199 + $0x88] sm:$0xff]
      %v227 = vld [vmem:[%s199 + $0x90] sm:$0xff]
      %v228 = vld [vmem:[%s199 + $0x98] sm:$0xff]
      %v229 = vld [vmem:[%s199 + $0xa0] sm:$0xff]
      %v230 = vld [vmem:[%s199 + $0xa8] sm:$0xff]
      %v231 = vld [vmem:[%s199 + $0xb0] sm:$0xff]
      %v232 = vld [vmem:[%s199 + $0xb8] sm:$0xff]
      %v233 = vld [vmem:[%s199 + $0xc0] sm:$0xff]
      %v234 = vld [vmem:[%s199 + $0xc8] sm:$0xff]
      %v235 = vld [vmem:[%s199 + $0xd0] sm:$0xff]
      %v236 = vld [vmem:[%s199 + $0xd8] sm:$0xff]
      %v237 = vld [vmem:[%s199 + $0xe0] sm:$0xff]
      %v238 = vld [vmem:[%s199 + $0xe8] sm:$0xff]
      %v239 = vld [vmem:[%s199 + $0xf0] sm:$0xff]
      %v240 = vld [vmem:[%s199 + $0xf8] sm:$0xff]
      %v241 = vld [vmem:[%s1] sm:$0x1]
      %v242 = vlaneseq
      %v243 = vshrl.u32 %v242, 7
      %v244 = vsub.s32 0, %v243
      %v245 = vrot.slane %v241, %v244
      %v246 = vmul.f32 %v209, %v245
      %v247 = vmul.f32 %v210, %v245
      %v248 = vmul.f32 %v211, %v245
      %v249 = vmul.f32 %v212, %v245
      %v250 = vmul.f32 %v213, %v245
      %v251 = vmul.f32 %v214, %v245
      %v252 = vmul.f32 %v215, %v245
      %v253 = vmul.f32 %v216, %v245
      %v254 = vmul.f32 %v217, %v245
      %v255 = vmul.f32 %v218, %v245
      %v256 = vmul.f32 %v219, %v245
      %v257 = vmul.f32 %v220, %v245
      %v258 = vmul.f32 %v221, %v245
      %v259 = vmul.f32 %v222, %v245
      %v260 = vmul.f32 %v223, %v245
      %v261 = vmul.f32 %v224, %v245
      %v262 = vmul.f32 %v225, %v245
      %v263 = vmul.f32 %v226, %v245
      %v264 = vmul.f32 %v227, %v245
      %v265 = vmul.f32 %v228, %v245
      %v266 = vmul.f32 %v229, %v245
      %v267 = vmul.f32 %v230, %v245
      %v268 = vmul.f32 %v231, %v245
      %v269 = vmul.f32 %v232, %v245
      %v270 = vmul.f32 %v233, %v245
      %v271 = vmul.f32 %v234, %v245
      %v272 = vmul.f32 %v235, %v245
      %v273 = vmul.f32 %v236, %v245
      %v274 = vmul.f32 %v237, %v245
      %v275 = vmul.f32 %v238, %v245
      %v276 = vmul.f32 %v239, %v245
      %v277 = vmul.f32 %v240, %v245
      %v278 = vld [vmem:[%s1 + $0x1] sm:$0x1]
      %v279 = vlaneseq
      %v280 = vshrl.u32 %v279, 7
      %v281 = vsub.s32 0, %v280
      %v282 = vrot.slane %v278, %v281
      %v283 = vadd.f32 %v246, %v282
      %v284 = vadd.f32 %v247, %v282
      %v285 = vadd.f32 %v248, %v282
      %v286 = vadd.f32 %v249, %v282
      %v287 = vadd.f32 %v250, %v282
      %v288 = vadd.f32 %v251, %v282
      %v289 = vadd.f32 %v252, %v282
      %v290 = vadd.f32 %v253, %v282
      %v291 = vadd.f32 %v254, %v282
      %v292 = vadd.f32 %v255, %v282
      %v293 = vadd.f32 %v256, %v282
      %v294 = vadd.f32 %v257, %v282
      %v295 = vadd.f32 %v258, %v282
      %v296 = vadd.f32 %v259, %v282
      %v297 = vadd.f32 %v260, %v282
      %v298 = vadd.f32 %v261, %v282
      %v299 = vadd.f32 %v262, %v282
      %v300 = vadd.f32 %v263, %v282
      %v301 = vadd.f32 %v264, %v282
      %v302 = vadd.f32 %v265, %v282
      %v303 = vadd.f32 %v266, %v282
      %v304 = vadd.f32 %v267, %v282
      %v305 = vadd.f32 %v268, %v282
      %v306 = vadd.f32 %v269, %v282
      %v307 = vadd.f32 %v270, %v282
      %v308 = vadd.f32 %v271, %v282
      %v309 = vadd.f32 %v272, %v282
      %v310 = vadd.f32 %v273, %v282
      %v311 = vadd.f32 %v274, %v282
      %v312 = vadd.f32 %v275, %v282
      %v313 = vadd.f32 %v276, %v282
      %v314 = vadd.f32 %v277, %v282
      %v315 = vmax.f32 %v283, 0.0
      %v316 = vmax.f32 %v284, 0.0
      %v317 = vmax.f32 %v285, 0.0
      %v318 = vmax.f32 %v286, 0.0
      %v319 = vmax.f32 %v287, 0.0
      %v320 = vmax.f32 %v288, 0.0
      %v321 = vmax.f32 %v289, 0.0
      %v322 = vmax.f32 %v290, 0.0
      %v323 = vmax.f32 %v291, 0.0
      %v324 = vmax.f32 %v292, 0.0
      %v325 = vmax.f32 %v293, 0.0
      %v326 = vmax.f32 %v294, 0.0
      %v327 = vmax.f32 %v295, 0.0
      %v328 = vmax.f32 %v296, 0.0
      %v329 = vmax.f32 %v297, 0.0
      %v330 = vmax.f32 %v298, 0.0
      %v331 = vmax.f32 %v299, 0.0
      %v332 = vmax.f32 %v300, 0.0
      %v333 = vmax.f32 %v301, 0.0
      %v334 = vmax.f32 %v302, 0.0
      %v335 = vmax.f32 %v303, 0.0
      %v336 = vmax.f32 %v304, 0.0
      %v337 = vmax.f32 %v305, 0.0
      %v338 = vmax.f32 %v306, 0.0
      %v339 = vmax.f32 %v307, 0.0
      %v340 = vmax.f32 %v308, 0.0
      %v341 = vmax.f32 %v309, 0.0
      %v342 = vmax.f32 %v310, 0.0
      %v343 = vmax.f32 %v311, 0.0
      %v344 = vmax.f32 %v312, 0.0
      %v345 = vmax.f32 %v313, 0.0
      %v346 = vmax.f32 %v314, 0.0
      %347 = vst [vmem:[#allocation2] sm:$0xff] 0.0
      %348 = vst [vmem:[#allocation2 + $0x8] sm:$0xff] 0.0
      %349 = vst [vmem:[#allocation2 + $0x10] sm:$0x3] 0.0
      %s350 = scalar_lea.vmem [#allocation2], 408
      %351 = vst [vmem:[%s350] sm:$0xff] 0.0
      %352 = vst [vmem:[%s350 + $0x8] sm:$0xff] 0.0
      %353 = vst [vmem:[%s350 + $0x10] sm:$0x3] 0.0
      %s354 = scalar_lea.vmem [#allocation2], 24
      %355 = vst [vmem:[%s354] sm:$0x1] 0.0
      %356 = vst [vmem:[%s354 + $0x18] sm:$0x1] 0.0
      %357 = vst [vmem:[%s354 + $0x30] sm:$0x1] 0.0
      %358 = vst [vmem:[%s354 + $0x48] sm:$0x1] 0.0
      %359 = vst [vmem:[%s354 + $0x60] sm:$0x1] 0.0
      %360 = vst [vmem:[%s354 + $0x78] sm:$0x1] 0.0
      %361 = vst [vmem:[%s354 + $0x90] sm:$0x1] 0.0
      %362 = vst [vmem:[%s354 + $0xa8] sm:$0x1] 0.0
      %363 = vst [vmem:[%s354 + $0xc0] sm:$0x1] 0.0
      %364 = vst [vmem:[%s354 + $0xd8] sm:$0x1] 0.0
      %365 = vst [vmem:[%s354 + $0xf0] sm:$0x1] 0.0
      %366 = vst [vmem:[%s354 + $0x108] sm:$0x1] 0.0
      %367 = vst [vmem:[%s354 + $0x120] sm:$0x1] 0.0
      %368 = vst [vmem:[%s354 + $0x138] sm:$0x1] 0.0
      %369 = vst [vmem:[%s354 + $0x150] sm:$0x1] 0.0
      %370 = vst [vmem:[%s354 + $0x168] sm:$0x1] 0.0
      %371 = vst [vmem:[%s354 + $0x11] sm:$0x1] 0.0
      %372 = vst [vmem:[%s354 + $0x29] sm:$0x1] 0.0
      %373 = vst [vmem:[%s354 + $0x41] sm:$0x1] 0.0
      %374 = vst [vmem:[%s354 + $0x59] sm:$0x1] 0.0
      %375 = vst [vmem:[%s354 + $0x71] sm:$0x1] 0.0
      %376 = vst [vmem:[%s354 + $0x89] sm:$0x1] 0.0
      %377 = vst [vmem:[%s354 + $0xa1] sm:$0x1] 0.0
      %378 = vst [vmem:[%s354 + $0xb9] sm:$0x1] 0.0
      %379 = vst [vmem:[%s354 + $0xd1] sm:$0x1] 0.0
      %380 = vst [vmem:[%s354 + $0xe9] sm:$0x1] 0.0
      %381 = vst [vmem:[%s354 + $0x101] sm:$0x1] 0.0
      %382 = vst [vmem:[%s354 + $0x119] sm:$0x1] 0.0
      %383 = vst [vmem:[%s354 + $0x131] sm:$0x1] 0.0
      %384 = vst [vmem:[%s354 + $0x149] sm:$0x1] 0.0
      %385 = vst [vmem:[%s354 + $0x161] sm:$0x1] 0.0
      %386 = vst [vmem:[%s354 + $0x179] sm:$0x1] 0.0
      %387 = vst [vmem:[%s354 + $0x1] sm:$0xff] %v315
      %388 = vst [vmem:[%s354 + $0x9] sm:$0xff] %v316
      %389 = vst [vmem:[%s354 + $0x19] sm:$0xff] %v317
      %390 = vst [vmem:[%s354 + $0x21] sm:$0xff] %v318
      %391 = vst [vmem:[%s354 + $0x31] sm:$0xff] %v319
      %392 = vst [vmem:[%s354 + $0x39] sm:$0xff] %v320
      %393 = vst [vmem:[%s354 + $0x49] sm:$0xff] %v321
      %394 = vst [vmem:[%s354 + $0x51] sm:$0xff] %v322
      %395 = vst [vmem:[%s354 + $0x61] sm:$0xff] %v323
      %396 = vst [vmem:[%s354 + $0x69] sm:$0xff] %v324
      %397 = vst [vmem:[%s354 + $0x79] sm:$0xff] %v325
      %398 = vst [vmem:[%s354 + $0x81] sm:$0xff] %v326
      %399 = vst [vmem:[%s354 + $0x91] sm:$0xff] %v327
      %400 = vst [vmem:[%s354 + $0x99] sm:$0xff] %v328
      %401 = vst [vmem:[%s354 + $0xa9] sm:$0xff] %v329
      %402 = vst [vmem:[%s354 + $0xb1] sm:$0xff] %v330
      %403 = vst [vmem:[%s354 + $0xc1] sm:$0xff] %v331
      %404 = vst [vmem:[%s354 + $0xc9] sm:$0xff] %v332
      %405 = vst [vmem:[%s354 + $0xd9] sm:$0xff] %v333
      %406 = vst [vmem:[%s354 + $0xe1] sm:$0xff] %v334
      %407 = vst [vmem:[%s354 + $0xf1] sm:$0xff] %v335
      %408 = vst [vmem:[%s354 + $0xf9] sm:$0xff] %v336
      %409 = vst [vmem:[%s354 + $0x109] sm:$0xff] %v337
      %410 = vst [vmem:[%s354 + $0x111] sm:$0xff] %v338
      %411 = vst [vmem:[%s354 + $0x121] sm:$0xff] %v339
      %412 = vst [vmem:[%s354 + $0x129] sm:$0xff] %v340
      %413 = vst [vmem:[%s354 + $0x139] sm:$0xff] %v341
      %414 = vst [vmem:[%s354 + $0x141] sm:$0xff] %v342
      %415 = vst [vmem:[%s354 + $0x151] sm:$0xff] %v343
      %416 = vst [vmem:[%s354 + $0x159] sm:$0xff] %v344
      %417 = vst [vmem:[%s354 + $0x169] sm:$0xff] %v345
      %418 = vst [vmem:[%s354 + $0x171] sm:$0xff] %v346
      %v419 = vld [vmem:[#allocation2] sm:$0xff]
      %v420 = vld [vmem:[#allocation2 + $0x8] sm:$0xff]
      %v421 = vld [vmem:[#allocation2 + $0x18] sm:$0xff]
      %v422 = vld [vmem:[#allocation2 + $0x20] sm:$0xff]
      %v423 = vld [vmem:[#allocation2 + $0x30] sm:$0xff]
      %v424 = vld [vmem:[#allocation2 + $0x38] sm:$0xff]
      %v425 = vld [vmem:[#allocation2 + $0x48] sm:$0xff]
      %v426 = vld [vmem:[#allocation2 + $0x50] sm:$0xff]
      %v427 = vld [vmem:[#allocation2 + $0x60] sm:$0xff]
      %v428 = vld [vmem:[#allocation2 + $0x68] sm:$0xff]
      %v429 = vld [vmem:[#allocation2 + $0x78] sm:$0xff]
      %v430 = vld [vmem:[#allocation2 + $0x80] sm:$0xff]
      %v431 = vld [vmem:[#allocation2 + $0x90] sm:$0xff]
      %v432 = vld [vmem:[#allocation2 + $0x98] sm:$0xff]
      %v433 = vld [vmem:[#allocation2 + $0xa8] sm:$0xff]
      %v434 = vld [vmem:[#allocation2 + $0xb0] sm:$0xff]
      %v435 = vld [vmem:[#allocation2 + $0xc0] sm:$0xff]
      %v436 = vld [vmem:[#allocation2 + $0xc8] sm:$0xff]
      %v437 = vld [vmem:[#allocation2 + $0xd8] sm:$0xff]
      %v438 = vld [vmem:[#allocation2 + $0xe0] sm:$0xff]
      %v439 = vld [vmem:[#allocation2 + $0xf0] sm:$0xff]
      %v440 = vld [vmem:[#allocation2 + $0xf8] sm:$0xff]
      %v441 = vld [vmem:[#allocation2 + $0x108] sm:$0xff]
      %v442 = vld [vmem:[#allocation2 + $0x110] sm:$0xff]
      %v443 = vld [vmem:[#allocation2 + $0x120] sm:$0xff]
      %v444 = vld [vmem:[#allocation2 + $0x128] sm:$0xff]
      %v445 = vld [vmem:[#allocation2 + $0x138] sm:$0xff]
      %v446 = vld [vmem:[#allocation2 + $0x140] sm:$0xff]
      %v447 = vld [vmem:[#allocation2 + $0x150] sm:$0xff]
      %v448 = vld [vmem:[#allocation2 + $0x158] sm:$0xff]
      %v449 = vld [vmem:[#allocation2 + $0x168] sm:$0xff]
      %v450 = vld [vmem:[#allocation2 + $0x170] sm:$0xff]
      %v451 = vld [vmem:[#allocation2 + $0x1] sm:$0xff]
      %v452 = vld [vmem:[#allocation2 + $0x9] sm:$0xff]
      %v453 = vld [vmem:[#allocation2 + $0x19] sm:$0xff]
      %v454 = vld [vmem:[#allocation2 + $0x21] sm:$0xff]
      %v455 = vld [vmem:[#allocation2 + $0x31] sm:$0xff]
      %v456 = vld [vmem:[#allocation2 + $0x39] sm:$0xff]
      %v457 = vld [vmem:[#allocation2 + $0x49] sm:$0xff]
      %v458 = vld [vmem:[#allocation2 + $0x51] sm:$0xff]
      %v459 = vld [vmem:[#allocation2 + $0x61] sm:$0xff]
      %v460 = vld [vmem:[#allocation2 + $0x69] sm:$0xff]
      %v461 = vld [vmem:[#allocation2 + $0x79] sm:$0xff]
      %v462 = vld [vmem:[#allocation2 + $0x81] sm:$0xff]
      %v463 = vld [vmem:[#allocation2 + $0x91] sm:$0xff]
      %v464 = vld [vmem:[#allocation2 + $0x99] sm:$0xff]
      %v465 = vld [vmem:[#allocation2 + $0xa9] sm:$0xff]
      %v466 = vld [vmem:[#allocation2 + $0xb1] sm:$0xff]
      %v467 = vld [vmem:[#allocation2 + $0xc1] sm:$0xff]
      %v468 = vld [vmem:[#allocation2 + $0xc9] sm:$0xff]
      %v469 = vld [vmem:[#allocation2 + $0xd9] sm:$0xff]
      %v470 = vld [vmem:[#allocation2 + $0xe1] sm:$0xff]
      %v471 = vld [vmem:[#allocation2 + $0xf1] sm:$0xff]
      %v472 = vld [vmem:[#allocation2 + $0xf9] sm:$0xff]
      %v473 = vld [vmem:[#allocation2 + $0x109] sm:$0xff]
      %v474 = vld [vmem:[#allocation2 + $0x111] sm:$0xff]
      %v475 = vld [vmem:[#allocation2 + $0x121] sm:$0xff]
      %v476 = vld [vmem:[#allocation2 + $0x129] sm:$0xff]
      %v477 = vld [vmem:[#allocation2 + $0x139] sm:$0xff]
      %v478 = vld [vmem:[#allocation2 + $0x141] sm:$0xff]
      %v479 = vld [vmem:[#allocation2 + $0x151] sm:$0xff]
      %v480 = vld [vmem:[#allocation2 + $0x159] sm:$0xff]
      %v481 = vld [vmem:[#allocation2 + $0x169] sm:$0xff]
      %v482 = vld [vmem:[#allocation2 + $0x171] sm:$0xff]
      %v483 = vld [vmem:[#allocation2 + $0x2] sm:$0xff]
      %v484 = vld [vmem:[#allocation2 + $0xa] sm:$0xff]
      %v485 = vld [vmem:[#allocation2 + $0x1a] sm:$0xff]
      %v486 = vld [vmem:[#allocation2 + $0x22] sm:$0xff]
      %v487 = vld [vmem:[#allocation2 + $0x32] sm:$0xff]
      %v488 = vld [vmem:[#allocation2 + $0x3a] sm:$0xff]
      %v489 = vld [vmem:[#allocation2 + $0x4a] sm:$0xff]
      %v490 = vld [vmem:[#allocation2 + $0x52] sm:$0xff]
      %v491 = vld [vmem:[#allocation2 + $0x62] sm:$0xff]
      %v492 = vld [vmem:[#allocation2 + $0x6a] sm:$0xff]
      %v493 = vld [vmem:[#allocation2 + $0x7a] sm:$0xff]
      %v494 = vld [vmem:[#allocation2 + $0x82] sm:$0xff]
      %v495 = vld [vmem:[#allocation2 + $0x92] sm:$0xff]
      %v496 = vld [vmem:[#allocation2 + $0x9a] sm:$0xff]
      %v497 = vld [vmem:[#allocation2 + $0xaa] sm:$0xff]
      %v498 = vld [vmem:[#allocation2 + $0xb2] sm:$0xff]
      %v499 = vld [vmem:[#allocation2 + $0xc2] sm:$0xff]
      %v500 = vld [vmem:[#allocation2 + $0xca] sm:$0xff]
      %v501 = vld [vmem:[#allocation2 + $0xda] sm:$0xff]
      %v502 = vld [vmem:[#allocation2 + $0xe2] sm:$0xff]
      %v503 = vld [vmem:[#allocation2 + $0xf2] sm:$0xff]
      %v504 = vld [vmem:[#allocation2 + $0xfa] sm:$0xff]
      %v505 = vld [vmem:[#allocation2 + $0x10a] sm:$0xff]
      %v506 = vld [vmem:[#allocation2 + $0x112] sm:$0xff]
      %v507 = vld [vmem:[#allocation2 + $0x122] sm:$0xff]
      %v508 = vld [vmem:[#allocation2 + $0x12a] sm:$0xff]
      %v509 = vld [vmem:[#allocation2 + $0x13a] sm:$0xff]
      %v510 = vld [vmem:[#allocation2 + $0x142] sm:$0xff]
      %v511 = vld [vmem:[#allocation2 + $0x152] sm:$0xff]
      %v512 = vld [vmem:[#allocation2 + $0x15a] sm:$0xff]
      %v513 = vld [vmem:[#allocation2 + $0x16a] sm:$0xff]
      %v514 = vld [vmem:[#allocation2 + $0x172] sm:$0xff]
      %v515 = vld [vmem:[%s354] sm:$0xff]
      %v516 = vld [vmem:[%s354 + $0x8] sm:$0xff]
      %v517 = vld [vmem:[%s354 + $0x18] sm:$0xff]
      %v518 = vld [vmem:[%s354 + $0x20] sm:$0xff]
      %v519 = vld [vmem:[%s354 + $0x30] sm:$0xff]
      %v520 = vld [vmem:[%s354 + $0x38] sm:$0xff]
      %v521 = vld [vmem:[%s354 + $0x48] sm:$0xff]
      %v522 = vld [vmem:[%s354 + $0x50] sm:$0xff]
      %v523 = vld [vmem:[%s354 + $0x60] sm:$0xff]
      %v524 = vld [vmem:[%s354 + $0x68] sm:$0xff]
      %v525 = vld [vmem:[%s354 + $0x78] sm:$0xff]
      %v526 = vld [vmem:[%s354 + $0x80] sm:$0xff]
      %v527 = vld [vmem:[%s354 + $0x90] sm:$0xff]
      %v528 = vld [vmem:[%s354 + $0x98] sm:$0xff]
      %v529 = vld [vmem:[%s354 + $0xa8] sm:$0xff]
      %v530 = vld [vmem:[%s354 + $0xb0] sm:$0xff]
      %v531 = vld [vmem:[%s354 + $0xc0] sm:$0xff]
      %v532 = vld [vmem:[%s354 + $0xc8] sm:$0xff]
      %v533 = vld [vmem:[%s354 + $0xd8] sm:$0xff]
      %v534 = vld [vmem:[%s354 + $0xe0] sm:$0xff]
      %v535 = vld [vmem:[%s354 + $0xf0] sm:$0xff]
      %v536 = vld [vmem:[%s354 + $0xf8] sm:$0xff]
      %v537 = vld [vmem:[%s354 + $0x108] sm:$0xff]
      %v538 = vld [vmem:[%s354 + $0x110] sm:$0xff]
      %v539 = vld [vmem:[%s354 + $0x120] sm:$0xff]
      %v540 = vld [vmem:[%s354 + $0x128] sm:$0xff]
      %v541 = vld [vmem:[%s354 + $0x138] sm:$0xff]
      %v542 = vld [vmem:[%s354 + $0x140] sm:$0xff]
      %v543 = vld [vmem:[%s354 + $0x150] sm:$0xff]
      %v544 = vld [vmem:[%s354 + $0x158] sm:$0xff]
      %v545 = vld [vmem:[%s354 + $0x168] sm:$0xff]
      %v546 = vld [vmem:[%s354 + $0x170] sm:$0xff]
      %v547 = vld [vmem:[%s354 + $0x1] sm:$0xff]
      %v548 = vld [vmem:[%s354 + $0x9] sm:$0xff]
      %v549 = vld [vmem:[%s354 + $0x19] sm:$0xff]
      %v550 = vld [vmem:[%s354 + $0x21] sm:$0xff]
      %v551 = vld [vmem:[%s354 + $0x31] sm:$0xff]
      %v552 = vld [vmem:[%s354 + $0x39] sm:$0xff]
      %v553 = vld [vmem:[%s354 + $0x49] sm:$0xff]
      %v554 = vld [vmem:[%s354 + $0x51] sm:$0xff]
      %v555 = vld [vmem:[%s354 + $0x61] sm:$0xff]
      %v556 = vld [vmem:[%s354 + $0x69] sm:$0xff]
      %v557 = vld [vmem:[%s354 + $0x79] sm:$0xff]
      %v558 = vld [vmem:[%s354 + $0x81] sm:$0xff]
      %v559 = vld [vmem:[%s354 + $0x91] sm:$0xff]
      %v560 = vld [vmem:[%s354 + $0x99] sm:$0xff]
      %v561 = vld [vmem:[%s354 + $0xa9] sm:$0xff]
      %v562 = vld [vmem:[%s354 + $0xb1] sm:$0xff]
      %v563 = vld [vmem:[%s354 + $0xc1] sm:$0xff]
      %v564 = vld [vmem:[%s354 + $0xc9] sm:$0xff]
      %v565 = vld [vmem:[%s354 + $0xd9] sm:$0xff]
      %v566 = vld [vmem:[%s354 + $0xe1] sm:$0xff]
      %v567 = vld [vmem:[%s354 + $0xf1] sm:$0xff]
      %v568 = vld [vmem:[%s354 + $0xf9] sm:$0xff]
      %v569 = vld [vmem:[%s354 + $0x109] sm:$0xff]
      %v570 = vld [vmem:[%s354 + $0x111] sm:$0xff]
      %v571 = vld [vmem:[%s354 + $0x121] sm:$0xff]
      %v572 = vld [vmem:[%s354 + $0x129] sm:$0xff]
      %v573 = vld [vmem:[%s354 + $0x139] sm:$0xff]
      %v574 = vld [vmem:[%s354 + $0x141] sm:$0xff]
      %v575 = vld [vmem:[%s354 + $0x151] sm:$0xff]
      %v576 = vld [vmem:[%s354 + $0x159] sm:$0xff]
      %v577 = vld [vmem:[%s354 + $0x169] sm:$0xff]
      %v578 = vld [vmem:[%s354 + $0x171] sm:$0xff]
      %v579 = vld [vmem:[%s354 + $0x2] sm:$0xff]
      %v580 = vld [vmem:[%s354 + $0xa] sm:$0xff]
      %v581 = vld [vmem:[%s354 + $0x1a] sm:$0xff]
      %v582 = vld [vmem:[%s354 + $0x22] sm:$0xff]
      %v583 = vld [vmem:[%s354 + $0x32] sm:$0xff]
      %v584 = vld [vmem:[%s354 + $0x3a] sm:$0xff]
      %v585 = vld [vmem:[%s354 + $0x4a] sm:$0xff]
      %v586 = vld [vmem:[%s354 + $0x52] sm:$0xff]
      %v587 = vld [vmem:[%s354 + $0x62] sm:$0xff]
      %v588 = vld [vmem:[%s354 + $0x6a] sm:$0xff]
      %v589 = vld [vmem:[%s354 + $0x7a] sm:$0xff]
      %v590 = vld [vmem:[%s354 + $0x82] sm:$0xff]
      %v591 = vld [vmem:[%s354 + $0x92] sm:$0xff]
      %v592 = vld [vmem:[%s354 + $0x9a] sm:$0xff]
      %v593 = vld [vmem:[%s354 + $0xaa] sm:$0xff]
      %v594 = vld [vmem:[%s354 + $0xb2] sm:$0xff]
      %v595 = vld [vmem:[%s354 + $0xc2] sm:$0xff]
      %v596 = vld [vmem:[%s354 + $0xca] sm:$0xff]
      %v597 = vld [vmem:[%s354 + $0xda] sm:$0xff]
      %v598 = vld [vmem:[%s354 + $0xe2] sm:$0xff]
      %v599 = vld [vmem:[%s354 + $0xf2] sm:$0xff]
      %v600 = vld [vmem:[%s354 + $0xfa] sm:$0xff]
      %v601 = vld [vmem:[%s354 + $0x10a] sm:$0xff]
      %v602 = vld [vmem:[%s354 + $0x112] sm:$0xff]
      %v603 = vld [vmem:[%s354 + $0x122] sm:$0xff]
      %v604 = vld [vmem:[%s354 + $0x12a] sm:$0xff]
      %v605 = vld [vmem:[%s354 + $0x13a] sm:$0xff]
      %v606 = vld [vmem:[%s354 + $0x142] sm:$0xff]
      %v607 = vld [vmem:[%s354 + $0x152] sm:$0xff]
      %v608 = vld [vmem:[%s354 + $0x15a] sm:$0xff]
      %v609 = vld [vmem:[%s354 + $0x16a] sm:$0xff]
      %v610 = vld [vmem:[%s354 + $0x172] sm:$0xff]
      %s611 = scalar_lea.vmem [#allocation2], 48
      %v612 = vld [vmem:[%s611] sm:$0xff]
      %v613 = vld [vmem:[%s611 + $0x8] sm:$0xff]
      %v614 = vld [vmem:[%s611 + $0x18] sm:$0xff]
      %v615 = vld [vmem:[%s611 + $0x20] sm:$0xff]
      %v616 = vld [vmem:[%s611 + $0x30] sm:$0xff]
      %v617 = vld [vmem:[%s611 + $0x38] sm:$0xff]
      %v618 = vld [vmem:[%s611 + $0x48] sm:$0xff]
      %v619 = vld [vmem:[%s611 + $0x50] sm:$0xff]
      %v620 = vld [vmem:[%s611 + $0x60] sm:$0xff]
      %v621 = vld [vmem:[%s611 + $0x68] sm:$0xff]
      %v622 = vld [vmem:[%s611 + $0x78] sm:$0xff]
      %v623 = vld [vmem:[%s611 + $0x80] sm:$0xff]
      %v624 = vld [vmem:[%s611 + $0x90] sm:$0xff]
      %v625 = vld [vmem:[%s611 + $0x98] sm:$0xff]
      %v626 = vld [vmem:[%s611 + $0xa8] sm:$0xff]
      %v627 = vld [vmem:[%s611 + $0xb0] sm:$0xff]
      %v628 = vld [vmem:[%s611 + $0xc0] sm:$0xff]
      %v629 = vld [vmem:[%s611 + $0xc8] sm:$0xff]
      %v630 = vld [vmem:[%s611 + $0xd8] sm:$0xff]
      %v631 = vld [vmem:[%s611 + $0xe0] sm:$0xff]
      %v632 = vld [vmem:[%s611 + $0xf0] sm:$0xff]
      %v633 = vld [vmem:[%s611 + $0xf8] sm:$0xff]
      %v634 = vld [vmem:[%s611 + $0x108] sm:$0xff]
      %v635 = vld [vmem:[%s611 + $0x110] sm:$0xff]
      %v636 = vld [vmem:[%s611 + $0x120] sm:$0xff]
      %v637 = vld [vmem:[%s611 + $0x128] sm:$0xff]
      %v638 = vld [vmem:[%s611 + $0x138] sm:$0xff]
      %v639 = vld [vmem:[%s611 + $0x140] sm:$0xff]
      %v640 = vld [vmem:[%s611 + $0x150] sm:$0xff]
      %v641 = vld [vmem:[%s611 + $0x158] sm:$0xff]
      %v642 = vld [vmem:[%s611 + $0x168] sm:$0xff]
      %v643 = vld [vmem:[%s611 + $0x170] sm:$0xff]
      %v644 = vld [vmem:[%s611 + $0x1] sm:$0xff]
      %v645 = vld [vmem:[%s611 + $0x9] sm:$0xff]
      %v646 = vld [vmem:[%s611 + $0x19] sm:$0xff]
      %v647 = vld [vmem:[%s611 + $0x21] sm:$0xff]
      %v648 = vld [vmem:[%s611 + $0x31] sm:$0xff]
      %v649 = vld [vmem:[%s611 + $0x39] sm:$0xff]
      %v650 = vld [vmem:[%s611 + $0x49] sm:$0xff]
      %v651 = vld [vmem:[%s611 + $0x51] sm:$0xff]
      %v652 = vld [vmem:[%s611 + $0x61] sm:$0xff]
      %v653 = vld [vmem:[%s611 + $0x69] sm:$0xff]
      %v654 = vld [vmem:[%s611 + $0x79] sm:$0xff]
      %v655 = vld [vmem:[%s611 + $0x81] sm:$0xff]
      %v656 = vld [vmem:[%s611 + $0x91] sm:$0xff]
      %v657 = vld [vmem:[%s611 + $0x99] sm:$0xff]
      %v658 = vld [vmem:[%s611 + $0xa9] sm:$0xff]
      %v659 = vld [vmem:[%s611 + $0xb1] sm:$0xff]
      %v660 = vld [vmem:[%s611 + $0xc1] sm:$0xff]
      %v661 = vld [vmem:[%s611 + $0xc9] sm:$0xff]
      %v662 = vld [vmem:[%s611 + $0xd9] sm:$0xff]
      %v663 = vld [vmem:[%s611 + $0xe1] sm:$0xff]
      %v664 = vld [vmem:[%s611 + $0xf1] sm:$0xff]
      %v665 = vld [vmem:[%s611 + $0xf9] sm:$0xff]
      %v666 = vld [vmem:[%s611 + $0x109] sm:$0xff]
      %v667 = vld [vmem:[%s611 + $0x111] sm:$0xff]
      %v668 = vld [vmem:[%s611 + $0x121] sm:$0xff]
      %v669 = vld [vmem:[%s611 + $0x129] sm:$0xff]
      %v670 = vld [vmem:[%s611 + $0x139] sm:$0xff]
      %v671 = vld [vmem:[%s611 + $0x141] sm:$0xff]
      %v672 = vld [vmem:[%s611 + $0x151] sm:$0xff]
      %v673 = vld [vmem:[%s611 + $0x159] sm:$0xff]
      %v674 = vld [vmem:[%s611 + $0x169] sm:$0xff]
      %v675 = vld [vmem:[%s611 + $0x171] sm:$0xff]
      %v676 = vld [vmem:[%s611 + $0x2] sm:$0xff]
      %v677 = vld [vmem:[%s611 + $0xa] sm:$0xff]
      %v678 = vld [vmem:[%s611 + $0x1a] sm:$0xff]
      %v679 = vld [vmem:[%s611 + $0x22] sm:$0xff]
      %v680 = vld [vmem:[%s611 + $0x32] sm:$0xff]
      %v681 = vld [vmem:[%s611 + $0x3a] sm:$0xff]
      %v682 = vld [vmem:[%s611 + $0x4a] sm:$0xff]
      %v683 = vld [vmem:[%s611 + $0x52] sm:$0xff]
      %v684 = vld [vmem:[%s611 + $0x62] sm:$0xff]
      %v685 = vld [vmem:[%s611 + $0x6a] sm:$0xff]
      %v686 = vld [vmem:[%s611 + $0x7a] sm:$0xff]
      %v687 = vld [vmem:[%s611 + $0x82] sm:$0xff]
      %v688 = vld [vmem:[%s611 + $0x92] sm:$0xff]
      %v689 = vld [vmem:[%s611 + $0x9a] sm:$0xff]
      %v690 = vld [vmem:[%s611 + $0xaa] sm:$0xff]
      %v691 = vld [vmem:[%s611 + $0xb2] sm:$0xff]
      %v692 = vld [vmem:[%s611 + $0xc2] sm:$0xff]
      %v693 = vld [vmem:[%s611 + $0xca] sm:$0xff]
      %v694 = vld [vmem:[%s611 + $0xda] sm:$0xff]
      %v695 = vld [vmem:[%s611 + $0xe2] sm:$0xff]
      %v696 = vld [vmem:[%s611 + $0xf2] sm:$0xff]
      %v697 = vld [vmem:[%s611 + $0xfa] sm:$0xff]
      %v698 = vld [vmem:[%s611 + $0x10a] sm:$0xff]
      %v699 = vld [vmem:[%s611 + $0x112] sm:$0xff]
      %v700 = vld [vmem:[%s611 + $0x122] sm:$0xff]
      %v701 = vld [vmem:[%s611 + $0x12a] sm:$0xff]
      %v702 = vld [vmem:[%s611 + $0x13a] sm:$0xff]
      %v703 = vld [vmem:[%s611 + $0x142] sm:$0xff]
      %v704 = vld [vmem:[%s611 + $0x152] sm:$0xff]
      %v705 = vld [vmem:[%s611 + $0x15a] sm:$0xff]
      %v706 = vld [vmem:[%s611 + $0x16a] sm:$0xff]
      %v707 = vld [vmem:[%s611 + $0x172] sm:$0xff]
      %v708 = vld [vmem:[%s2] sm:$0xff]
      %v709 = vld [vmem:[%s2 + $0x8] sm:$0xff]
      %v710 = vld [vmem:[%s2 + $0x10] sm:$0xff]
      %v711 = vld [vmem:[%s2 + $0x18] sm:$0xff]
      %v712 = vld [vmem:[%s2 + $0x20] sm:$0xff]
      %v713 = vld [vmem:[%s2 + $0x28] sm:$0xff]
      %v714 = vld [vmem:[%s2 + $0x30] sm:$0xff]
      %v715 = vld [vmem:[%s2 + $0x38] sm:$0xff]
      %v716 = vld [vmem:[%s2 + $0x40] sm:$0xff]
      %v717 = vld [vmem:[%s2 + $0x48] sm:$0xff]
      %v718 = vld [vmem:[%s2 + $0x50] sm:$0xff]
      %v719 = vld [vmem:[%s2 + $0x58] sm:$0xff]
      %v720 = vld [vmem:[%s2 + $0x60] sm:$0xff]
      %v721 = vld [vmem:[%s2 + $0x68] sm:$0xff]
      %v722 = vld [vmem:[%s2 + $0x70] sm:$0xff]
      %v723 = vld [vmem:[%s2 + $0x78] sm:$0xff]
      %v724 = vld [vmem:[%s2 + $0x80] sm:$0xff]
      %v725 = vld [vmem:[%s2 + $0x88] sm:$0xff]
      %v726 = vld [vmem:[%s2 + $0x90] sm:$0xff]
      %v727 = vld [vmem:[%s2 + $0x98] sm:$0xff]
      %v728 = vld [vmem:[%s2 + $0xa0] sm:$0xff]
      %v729 = vld [vmem:[%s2 + $0xa8] sm:$0xff]
      %v730 = vld [vmem:[%s2 + $0xb0] sm:$0xff]
      %v731 = vld [vmem:[%s2 + $0xb8] sm:$0xff]
      %v732 = vld [vmem:[%s2 + $0xc0] sm:$0xff]
      %v733 = vld [vmem:[%s2 + $0xc8] sm:$0xff]
      %v734 = vld [vmem:[%s2 + $0xd0] sm:$0xff]
      %v735 = vld [vmem:[%s2 + $0xd8] sm:$0xff]
      %v736 = vld [vmem:[%s2 + $0xe0] sm:$0xff]
      %v737 = vld [vmem:[%s2 + $0xe8] sm:$0xff]
      %v738 = vld [vmem:[%s2 + $0xf0] sm:$0xff]
      %v739 = vld [vmem:[%s2 + $0xf8] sm:$0xff]
      %v740 = vld [vmem:[%s2 + $0x100] sm:$0xff]
      %v741 = vld [vmem:[%s2 + $0x108] sm:$0xff]
      %v742 = vld [vmem:[%s2 + $0x110] sm:$0xff]
      %v743 = vld [vmem:[%s2 + $0x118] sm:$0xff]
      %v744 = vld [vmem:[%s2 + $0x120] sm:$0xff]
      %v745 = vld [vmem:[%s2 + $0x128] sm:$0xff]
      %v746 = vld [vmem:[%s2 + $0x130] sm:$0xff]
      %v747 = vld [vmem:[%s2 + $0x138] sm:$0xff]
      %v748 = vld [vmem:[%s2 + $0x140] sm:$0xff]
      %v749 = vld [vmem:[%s2 + $0x148] sm:$0xff]
      %v750 = vld [vmem:[%s2 + $0x150] sm:$0xff]
      %v751 = vld [vmem:[%s2 + $0x158] sm:$0xff]
      %v752 = vld [vmem:[%s2 + $0x160] sm:$0xff]
      %v753 = vld [vmem:[%s2 + $0x168] sm:$0xff]
      %v754 = vld [vmem:[%s2 + $0x170] sm:$0xff]
      %v755 = vld [vmem:[%s2 + $0x178] sm:$0xff]
      %v756 = vld [vmem:[%s2 + $0x180] sm:$0xff]
      %v757 = vld [vmem:[%s2 + $0x188] sm:$0xff]
      %v758 = vld [vmem:[%s2 + $0x190] sm:$0xff]
      %v759 = vld [vmem:[%s2 + $0x198] sm:$0xff]
      %v760 = vld [vmem:[%s2 + $0x1a0] sm:$0xff]
      %v761 = vld [vmem:[%s2 + $0x1a8] sm:$0xff]
      %v762 = vld [vmem:[%s2 + $0x1b0] sm:$0xff]
      %v763 = vld [vmem:[%s2 + $0x1b8] sm:$0xff]
      %v764 = vld [vmem:[%s2 + $0x1c0] sm:$0xff]
      %v765 = vld [vmem:[%s2 + $0x1c8] sm:$0xff]
      %v766 = vld [vmem:[%s2 + $0x1d0] sm:$0xff]
      %v767 = vld [vmem:[%s2 + $0x1d8] sm:$0xff]
      %v768 = vld [vmem:[%s2 + $0x1e0] sm:$0xff]
      %v769 = vld [vmem:[%s2 + $0x1e8] sm:$0xff]
      %v770 = vld [vmem:[%s2 + $0x1f0] sm:$0xff]
      %v771 = vld [vmem:[%s2 + $0x1f8] sm:$0xff]
      %v772 = vld [vmem:[%s2 + $0x200] sm:$0xff]
      %v773 = vld [vmem:[%s2 + $0x208] sm:$0xff]
      %v774 = vld [vmem:[%s2 + $0x210] sm:$0xff]
      %v775 = vld [vmem:[%s2 + $0x218] sm:$0xff]
      %v776 = vld [vmem:[%s2 + $0x220] sm:$0xff]
      %v777 = vld [vmem:[%s2 + $0x228] sm:$0xff]
      %v778 = vld [vmem:[%s2 + $0x230] sm:$0xff]
      %v779 = vld [vmem:[%s2 + $0x238] sm:$0xff]
      %v780 = vld [vmem:[%s2 + $0x240] sm:$0xff]
      %v781 = vld [vmem:[%s2 + $0x248] sm:$0xff]
      %v782 = vld [vmem:[%s2 + $0x250] sm:$0xff]
      %v783 = vld [vmem:[%s2 + $0x258] sm:$0xff]
      %v784 = vld [vmem:[%s2 + $0x260] sm:$0xff]
      %v785 = vld [vmem:[%s2 + $0x268] sm:$0xff]
      %v786 = vld [vmem:[%s2 + $0x270] sm:$0xff]
      %v787 = vld [vmem:[%s2 + $0x278] sm:$0xff]
      %v788 = vld [vmem:[%s2 + $0x280] sm:$0xff]
      %v789 = vld [vmem:[%s2 + $0x288] sm:$0xff]
      %v790 = vld [vmem:[%s2 + $0x290] sm:$0xff]
      %v791 = vld [vmem:[%s2 + $0x298] sm:$0xff]
      %v792 = vld [vmem:[%s2 + $0x2a0] sm:$0xff]
      %v793 = vld [vmem:[%s2 + $0x2a8] sm:$0xff]
      %v794 = vld [vmem:[%s2 + $0x2b0] sm:$0xff]
      %v795 = vld [vmem:[%s2 + $0x2b8] sm:$0xff]
      %v796 = vld [vmem:[%s2 + $0x2c0] sm:$0xff]
      %v797 = vld [vmem:[%s2 + $0x2c8] sm:$0xff]
      %v798 = vld [vmem:[%s2 + $0x2d0] sm:$0xff]
      %v799 = vld [vmem:[%s2 + $0x2d8] sm:$0xff]
      %v800 = vld [vmem:[%s2 + $0x2e0] sm:$0xff]
      %v801 = vld [vmem:[%s2 + $0x2e8] sm:$0xff]
      %v802 = vld [vmem:[%s2 + $0x2f0] sm:$0xff]
      %v803 = vld [vmem:[%s2 + $0x2f8] sm:$0xff]
      %v804 = vld [vmem:[%s2 + $0x300] sm:$0xff]
      %v805 = vld [vmem:[%s2 + $0x308] sm:$0xff]
      %v806 = vld [vmem:[%s2 + $0x310] sm:$0xff]
      %v807 = vld [vmem:[%s2 + $0x318] sm:$0xff]
      %v808 = vld [vmem:[%s2 + $0x320] sm:$0xff]
      %v809 = vld [vmem:[%s2 + $0x328] sm:$0xff]
      %v810 = vld [vmem:[%s2 + $0x330] sm:$0xff]
      %v811 = vld [vmem:[%s2 + $0x338] sm:$0xff]
      %v812 = vld [vmem:[%s2 + $0x340] sm:$0xff]
      %v813 = vld [vmem:[%s2 + $0x348] sm:$0xff]
      %v814 = vld [vmem:[%s2 + $0x350] sm:$0xff]
      %v815 = vld [vmem:[%s2 + $0x358] sm:$0xff]
      %v816 = vld [vmem:[%s2 + $0x360] sm:$0xff]
      %v817 = vld [vmem:[%s2 + $0x368] sm:$0xff]
      %v818 = vld [vmem:[%s2 + $0x370] sm:$0xff]
      %v819 = vld [vmem:[%s2 + $0x378] sm:$0xff]
      %v820 = vld [vmem:[%s2 + $0x380] sm:$0xff]
      %v821 = vld [vmem:[%s2 + $0x388] sm:$0xff]
      %v822 = vld [vmem:[%s2 + $0x390] sm:$0xff]
      %v823 = vld [vmem:[%s2 + $0x398] sm:$0xff]
      %v824 = vld [vmem:[%s2 + $0x3a0] sm:$0xff]
      %v825 = vld [vmem:[%s2 + $0x3a8] sm:$0xff]
      %v826 = vld [vmem:[%s2 + $0x3b0] sm:$0xff]
      %v827 = vld [vmem:[%s2 + $0x3b8] sm:$0xff]
      %v828 = vld [vmem:[%s2 + $0x3c0] sm:$0xff]
      %v829 = vld [vmem:[%s2 + $0x3c8] sm:$0xff]
      %v830 = vld [vmem:[%s2 + $0x3d0] sm:$0xff]
      %v831 = vld [vmem:[%s2 + $0x3d8] sm:$0xff]
      %v832 = vld [vmem:[%s2 + $0x3e0] sm:$0xff]
      %v833 = vld [vmem:[%s2 + $0x3e8] sm:$0xff]
      %v834 = vld [vmem:[%s2 + $0x3f0] sm:$0xff]
      %v835 = vld [vmem:[%s2 + $0x3f8] sm:$0xff]
      %v836 = vld [vmem:[%s2 + $0x400] sm:$0xff]
      %v837 = vld [vmem:[%s2 + $0x408] sm:$0xff]
      %v838 = vld [vmem:[%s2 + $0x410] sm:$0xff]
      %v839 = vld [vmem:[%s2 + $0x418] sm:$0xff]
      %v840 = vld [vmem:[%s2 + $0x420] sm:$0xff]
      %v841 = vld [vmem:[%s2 + $0x428] sm:$0xff]
      %v842 = vld [vmem:[%s2 + $0x430] sm:$0xff]
      %v843 = vld [vmem:[%s2 + $0x438] sm:$0xff]
      %v844 = vld [vmem:[%s2 + $0x440] sm:$0xff]
      %v845 = vld [vmem:[%s2 + $0x448] sm:$0xff]
      %v846 = vld [vmem:[%s2 + $0x450] sm:$0xff]
      %v847 = vld [vmem:[%s2 + $0x458] sm:$0xff]
      %v848 = vld [vmem:[%s2 + $0x460] sm:$0xff]
      %v849 = vld [vmem:[%s2 + $0x468] sm:$0xff]
      %v850 = vld [vmem:[%s2 + $0x470] sm:$0xff]
      %v851 = vld [vmem:[%s2 + $0x478] sm:$0xff]
      %852 = vmatprep.subr.mxu0 0.0
      %853 = vmatpush1.msra.mxu0 %v708
      %854 = vmatprep.subr.mxu0 0.0
      %855 = vmatpush1.msra.mxu0 %v709
      %856 = vmatprep.subr.mxu0 0.0
      %857 = vmatpush1.msra.mxu0 %v710
      %858 = vmatprep.subr.mxu0 0.0
      %859 = vmatpush1.msra.mxu0 %v711
      %860 = vmatprep.subr.mxu0 0.0
      %861 = vmatpush1.msra.mxu0 %v712
      %862 = vmatprep.subr.mxu0 0.0
      %863 = vmatpush1.msra.mxu0 %v713
      %864 = vmatprep.subr.mxu0 0.0
      %865 = vmatpush1.msra.mxu0 %v714
      %866 = vmatprep.subr.mxu0 0.0
      %867 = vmatpush1.msra.mxu0 %v715
      %868 = vmatprep.subr.mxu0 0.0
      %869 = vmatpush1.msra.mxu0 %v716
      %870 = vmatprep.subr.mxu0 0.0
      %871 = vmatpush1.msra.mxu0 %v717
      %872 = vmatprep.subr.mxu0 0.0
      %873 = vmatpush1.msra.mxu0 %v718
      %874 = vmatprep.subr.mxu0 0.0
      %875 = vmatpush1.msra.mxu0 %v719
      %876 = vmatprep.subr.mxu0 0.0
      %877 = vmatpush1.msra.mxu0 %v720
      %878 = vmatprep.subr.mxu0 0.0
      %879 = vmatpush1.msra.mxu0 %v721
      %880 = vmatprep.subr.mxu0 0.0
      %881 = vmatpush1.msra.mxu0 %v722
      %882 = vmatprep.subr.mxu0 0.0
      %883 = vmatpush1.msra.mxu0 %v723
      %884 = vmatprep.subr.mxu0 0.0
      %885 = vmatpush1.msra.mxu0 %v724
      %886 = vmatprep.subr.mxu0 0.0
      %887 = vmatpush1.msra.mxu0 %v725
      %888 = vmatprep.subr.mxu0 0.0
      %889 = vmatpush1.msra.mxu0 %v726
      %890 = vmatprep.subr.mxu0 0.0
      %891 = vmatpush1.msra.mxu0 %v727
      %892 = vmatprep.subr.mxu0 0.0
      %893 = vmatpush1.msra.mxu0 %v728
      %894 = vmatprep.subr.mxu0 0.0
      %895 = vmatpush1.msra.mxu0 %v729
      %896 = vmatprep.subr.mxu0 0.0
      %897 = vmatpush1.msra.mxu0 %v730
      %898 = vmatprep.subr.mxu0 0.0
      %899 = vmatpush1.msra.mxu0 %v731
      %900 = vmatprep.subr.mxu0 0.0
      %901 = vmatpush1.msra.mxu0 %v732
      %902 = vmatprep.subr.mxu0 0.0
      %903 = vmatpush1.msra.mxu0 %v733
      %904 = vmatprep.subr.mxu0 0.0
      %905 = vmatpush1.msra.mxu0 %v734
      %906 = vmatprep.subr.mxu0 0.0
      %907 = vmatpush1.msra.mxu0 %v735
      %908 = vmatprep.subr.mxu0 0.0
      %909 = vmatpush1.msra.mxu0 %v736
      %910 = vmatprep.subr.mxu0 0.0
      %911 = vmatpush1.msra.mxu0 %v737
      %912 = vmatprep.subr.mxu0 0.0
      %913 = vmatpush1.msra.mxu0 %v738
      %914 = vmatprep.subr.mxu0 0.0
      %915 = vmatpush1.msra.mxu0 %v739
      %916 = vmatprep.mubr.f32.mxu0 %v451
      %917 = vmatmul.mubr.f32.gmra.mrb[0].mxu0 %v419
      %v918 = vpop.f32.mrb[0].mxu0
      %v919 = vadd.f32 0.0, %v918
      %v920 = vpop.f32.mrb[0].mxu0
      %921 = vmatprep.mubr.f32.mxu0 %v452
      %922 = vmatmul.mubr.f32.gmra.mrb[0].mxu0 %v420
      %v923 = vpop.f32.mrb[0].mxu0
      %v924 = vadd.f32 0.0, %v923
      %v925 = vpop.f32.mrb[0].mxu0
      %926 = vmatprep.mubr.f32.mxu0 %v453
      %927 = vmatmul.mubr.f32.gmra.mrb[0].mxu0 %v421
      %v928 = vpop.f32.mrb[0].mxu0
      %v929 = vadd.f32 0.0, %v928
      %v930 = vpop.f32.mrb[0].mxu0
      %931 = vmatprep.mubr.f32.mxu0 %v454
      %932 = vmatmul.mubr.f32.gmra.mrb[0].mxu0 %v422
      %v933 = vpop.f32.mrb[0].mxu0
      %v934 = vadd.f32 0.0, %v933
      %v935 = vpop.f32.mrb[0].mxu0
      %936 = vmatprep.mubr.f32.mxu0 %v455
      %937 = vmatmul.mubr.f32.gmra.mrb[0].mxu0 %v423
      %v938 = vpop.f32.mrb[0].mxu0
      %v939 = vadd.f32 0.0, %v938
      %v940 = vpop.f32.mrb[0].mxu0
      %941 = vmatprep.mubr.f32.mxu0 %v456
      %942 = vmatmul.mubr.f32.gmra.mrb[0].mxu0 %v424
      %v943 = vpop.f32.mrb[0].mxu0
      %v944 = vadd.f32 0.0, %v943
      %v945 = vpop.f32.mrb[0].mxu0
      %946 = vmatprep.mubr.f32.mxu0 %v457
      %947 = vmatmul.mubr.f32.gmra.mrb[0].mxu0 %v425
      %v948 = vpop.f32.mrb[0].mxu0
      %v949 = vadd.f32 0.0, %v948
      %v950 = vpop.f32.mrb[0].mxu0
      %951 = vmatprep.mubr.f32.mxu0 %v458
      %952 = vmatmul.mubr.f32.gmra.mrb[0].mxu0 %v426
      %v953 = vpop.f32.mrb[0].mxu0
      %v954 = vadd.f32 0.0, %v953
      %v955 = vpop.f32.mrb[0].mxu0
      %956 = vmatprep.mubr.f32.mxu0 %v459
      %957 = vmatmul.mubr.f32.gmra.mrb[0].mxu0 %v427
      %v958 = vpop.f32.mrb[0].mxu0
      %v959 = vadd.f32 0.0, %v958
      %v960 = vpop.f32.mrb[0].mxu0
      %961 = vmatprep.mubr.f32.mxu0 %v460
      %962 = vmatmul.mubr.f32.gmra.mrb[0].mxu0 %v428
      %v963 = vpop.f32.mrb[0].mxu0
      %v964 = vadd.f32 0.0, %v963
      %v965 = vpop.f32.mrb[0].mxu0
      %966 = vmatprep.mubr.f32.mxu0 %v461
      %967 = vmatmul.mubr.f32.gmra.mrb[0].mxu0 %v429
      %v968 = vpop.f32.mrb[0].mxu0
      %v969 = vadd.f32 0.0, %v968
      %v970 = vpop.f32.mrb[0].mxu0
      %971 = vmatprep.mubr.f32.mxu0 %v462
      %972 = vmatmul.mubr.f32.gmra.mrb[0].mxu0 %v430
      %v973 = vpop.f32.mrb[0].mxu0
      %v974 = vadd.f32 0.0, %v973
      %v975 = vpop.f32.mrb[0].mxu0
      %976 = vmatprep.mubr.f32.mxu0 %v463
      %977 = vmatmul.mubr.f32.gmra.mrb[0].mxu0 %v431
      %v978 = vpop.f32.mrb[0].mxu0
      %v979 = vadd.f32 0.0, %v978
      %v980 = vpop.f32.mrb[0].mxu0
      %981 = vmatprep.mubr.f32.mxu0 %v464
      %982 = vmatmul.mubr.f32.gmra.mrb[0].mxu0 %v432
      %v983 = vpop.f32.mrb[0].mxu0
      %v984 = vadd.f32 0.0, %v983
      %v985 = vpop.f32.mrb[0].mxu0
      %986 = vmatprep.mubr.f32.mxu0 %v465
      %987 = vmatmul.mubr.f32.gmra.mrb[0].mxu0 %v433
      %v988 = vpop.f32.mrb[0].mxu0
      %v989 = vadd.f32 0.0, %v988
      %v990 = vpop.f32.mrb[0].mxu0
      %991 = vmatprep.mubr.f32.mxu0 %v466
      %992 = vmatmul.mubr.f32.gmra.mrb[0].mxu0 %v434
      %v993 = vpop.f32.mrb[0].mxu0
      %v994 = vadd.f32 0.0, %v993
      %v995 = vpop.f32.mrb[0].mxu0
      %996 = vmatprep.mubr.f32.mxu0 %v467
      %997 = vmatmul.mubr.f32.gmra.mrb[0].mxu0 %v435
      %v998 = vpop.f32.mrb[0].mxu0
      %v999 = vadd.f32 0.0, %v998
      %v1000 = vpop.f32.mrb[0].mxu0
      %1001 = vmatprep.mubr.f32.mxu0 %v468
      %1002 = vmatmul.mubr.f32.gmra.mrb[0].mxu0 %v436
      %v1003 = vpop.f32.mrb[0].mxu0
      %v1004 = vadd.f32 0.0, %v1003
      %v1005 = vpop.f32.mrb[0].mxu0
      %1006 = vmatprep.mubr.f32.mxu0 %v469
      %1007 = vmatmul.mubr.f32.gmra.mrb[0].mxu0 %v437
      %v1008 = vpop.f32.mrb[0].mxu0
      %v1009 = vadd.f32 0.0, %v1008
      %v1010 = vpop.f32.mrb[0].mxu0
      %1011 = vmatprep.mubr.f32.mxu0 %v470
      %1012 = vmatmul.mubr.f32.gmra.mrb[0].mxu0 %v438
      %v1013 = vpop.f32.mrb[0].mxu0
      %v1014 = vadd.f32 0.0, %v1013
      %v1015 = vpop.f32.mrb[0].mxu0
      %1016 = vmatprep.mubr.f32.mxu0 %v471
      %1017 = vmatmul.mubr.f32.gmra.mrb[0].mxu0 %v439
      %v1018 = vpop.f32.mrb[0].mxu0
      %v1019 = vadd.f32 0.0, %v1018
      %v1020 = vpop.f32.mrb[0].mxu0
      %1021 = vmatprep.mubr.f32.mxu0 %v472
      %1022 = vmatmul.mubr.f32.gmra.mrb[0].mxu0 %v440
      %v1023 = vpop.f32.mrb[0].mxu0
      %v1024 = vadd.f32 0.0, %v1023
      %v1025 = vpop.f32.mrb[0].mxu0
      %1026 = vmatprep.mubr.f32.mxu0 %v473
      %1027 = vmatmul.mubr.f32.gmra.mrb[0].mxu0 %v441
      %v1028 = vpop.f32.mrb[0].mxu0
      %v1029 = vadd.f32 0.0, %v1028
      %v1030 = vpop.f32.mrb[0].mxu0
      %1031 = vmatprep.mubr.f32.mxu0 %v474
      %1032 = vmatmul.mubr.f32.gmra.mrb[0].mxu0 %v442
      %v1033 = vpop.f32.mrb[0].mxu0
      %v1034 = vadd.f32 0.0, %v1033
      %v1035 = vpop.f32.mrb[0].mxu0
      %1036 = vmatprep.mubr.f32.mxu0 %v475
      %1037 = vmatmul.mubr.f32.gmra.mrb[0].mxu0 %v443
      %v1038 = vpop.f32.mrb[0].mxu0
      %v1039 = vadd.f32 0.0, %v1038
      %v1040 = vpop.f32.mrb[0].mxu0
      %1041 = vmatprep.mubr.f32.mxu0 %v476
      %1042 = vmatmul.mubr.f32.gmra.mrb[0].mxu0 %v444
      %v1043 = vpop.f32.mrb[0].mxu0
      %v1044 = vadd.f32 0.0, %v1043
      %v1045 = vpop.f32.mrb[0].mxu0
      %1046 = vmatprep.mubr.f32.mxu0 %v477
      %1047 = vmatmul.mubr.f32.gmra.mrb[0].mxu0 %v445
      %v1048 = vpop.f32.mrb[0].mxu0
      %v1049 = vadd.f32 0.0, %v1048
      %v1050 = vpop.f32.mrb[0].mxu0
      %1051 = vmatprep.mubr.f32.mxu0 %v478
      %1052 = vmatmul.mubr.f32.gmra.mrb[0].mxu0 %v446
      %v1053 = vpop.f32.mrb[0].mxu0
      %v1054 = vadd.f32 0.0, %v1053
      %v1055 = vpop.f32.mrb[0].mxu0
      %1056 = vmatprep.mubr.f32.mxu0 %v479
      %1057 = vmatmul.mubr.f32.gmra.mrb[0].mxu0 %v447
      %v1058 = vpop.f32.mrb[0].mxu0
      %v1059 = vadd.f32 0.0, %v1058
      %v1060 = vpop.f32.mrb[0].mxu0
      %1061 = vmatprep.mubr.f32.mxu0 %v480
      %1062 = vmatmul.mubr.f32.gmra.mrb[0].mxu0 %v448
      %v1063 = vpop.f32.mrb[0].mxu0
      %v1064 = vadd.f32 0.0, %v1063
      %v1065 = vpop.f32.mrb[0].mxu0
      %1066 = vmatprep.mubr.f32.mxu0 %v481
      %1067 = vmatmul.mubr.f32.gmra.mrb[0].mxu0 %v449
      %v1068 = vpop.f32.mrb[0].mxu0
      %v1069 = vadd.f32 0.0, %v1068
      %v1070 = vpop.f32.mrb[0].mxu0
      %1071 = vmatprep.mubr.f32.mxu0 %v482
      %1072 = vmatmul.mubr.f32.gmra.mrb[0].mxu0 %v450
      %v1073 = vpop.f32.mrb[0].mxu0
      %v1074 = vadd.f32 0.0, %v1073
      %v1075 = vpop.f32.mrb[0].mxu0
      %1076 = vdwg.mxu0
      %1077 = vmatprep.subr.mxu0 0.0
      %1078 = vmatpush1.msra.mxu0 %v740
      %1079 = vmatprep.subr.mxu0 0.0
      %1080 = vmatpush1.msra.mxu0 %v741
      %1081 = vmatprep.subr.mxu0 0.0
      %1082 = vmatpush1.msra.mxu0 %v742
      %1083 = vmatprep.subr.mxu0 0.0
      %1084 = vmatpush1.msra.mxu0 %v743
      %1085 = vmatprep.subr.mxu0 0.0
      %1086 = vmatpush1.msra.mxu0 %v744
      %1087 = vmatprep.subr.mxu0 0.0
      %1088 = vmatpush1.msra.mxu0 %v745
      %1089 = vmatprep.subr.mxu0 0.0
      %1090 = vmatpush1.msra.mxu0 %v746
      %1091 = vmatprep.subr.mxu0 0.0
      %1092 = vmatpush1.msra.mxu0 %v747
      %1093 = vmatprep.subr.mxu0 0.0
      %1094 = vmatpush1.msra.mxu0 %v748
      %1095 = vmatprep.subr.mxu0 0.0
      %1096 = vmatpush1.msra.mxu0 %v749
      %1097 = vmatprep.subr.mxu0 0.0
      %1098 = vmatpush1.msra.mxu0 %v750
      %1099 = vmatprep.subr.mxu0 0.0
      %1100 = vmatpush1.msra.mxu0 %v751
      %1101 = vmatprep.subr.mxu0 0.0
      %1102 = vmatpush1.msra.mxu0 %v752
      %1103 = vmatprep.subr.mxu0 0.0
      %1104 = vmatpush1.msra.mxu0 %v753
      %1105 = vmatprep.subr.mxu0 0.0
      %1106 = vmatpush1.msra.mxu0 %v754
      %1107 = vmatprep.subr.mxu0 0.0
      %1108 = vmatpush1.msra.mxu0 %v755
      %1109 = vmatprep.subr.mxu0 0.0
      %1110 = vmatpush1.msra.mxu0 %v756
      %1111 = vmatprep.subr.mxu0 0.0
      %1112 = vmatpush1.msra.mxu0 %v757
      %1113 = vmatprep.subr.mxu0 0.0
      %1114 = vmatpush1.msra.mxu0 %v758
      %1115 = vmatprep.subr.mxu0 0.0
      %1116 = vmatpush1.msra.mxu0 %v759
      %1117 = vmatprep.subr.mxu0 0.0
      %1118 = vmatpush1.msra.mxu0 %v760
      %1119 = vmatprep.subr.mxu0 0.0
      %1120 = vmatpush1.msra.mxu0 %v761
      %1121 = vmatprep.subr.mxu0 0.0
      %1122 = vmatpush1.msra.mxu0 %v762
      %1123 = vmatprep.subr.mxu0 0.0
      %1124 = vmatpush1.msra.mxu0 %v763
      %1125 = vmatprep.subr.mxu0 0.0
      %1126 = vmatpush1.msra.mxu0 %v764
      %1127 = vmatprep.subr.mxu0 0.0
      %1128 = vmatpush1.msra.mxu0 %v765
      %1129 = vmatprep.subr.mxu0 0.0
      %1130 = vmatpush1.msra.mxu0 %v766
      %1131 = vmatprep.subr.mxu0 0.0
      %1132 = vmatpush1.msra.mxu0 %v767
      %1133 = vmatprep.subr.mxu0 0.0
      %1134 = vmatpush1.msra.mxu0 %v768
      %1135 = vmatprep.subr.mxu0 0.0
      %1136 = vmatpush1.msra.mxu0 %v769
      %1137 = vmatprep.subr.mxu0 0.0
      %1138 = vmatpush1.msra.mxu0 %v770
      %1139 = vmatprep.subr.mxu0 0.0
      %1140 = vmatpush1.msra.mxu0 %v771
      %1141 = vmatprep.mubr.f32.mxu0 %v515
      %1142 = vmatmul.mubr.f32.gmra.mrb[0].mxu0 %v483
      %v1143 = vpop.f32.mrb[0].mxu0
      %v1144 = vadd.f32 %v919, %v1143
      %v1145 = vpop.f32.mrb[0].mxu0
      %1146 = vmatprep.mubr.f32.mxu0 %v516
      %1147 = vmatmul.mubr.f32.gmra.mrb[0].mxu0 %v484
      %v1148 = vpop.f32.mrb[0].mxu0
      %v1149 = vadd.f32 %v924, %v1148
      %v1150 = vpop.f32.mrb[0].mxu0
      %1151 = vmatprep.mubr.f32.mxu0 %v517
      %1152 = vmatmul.mubr.f32.gmra.mrb[0].mxu0 %v485
      %v1153 = vpop.f32.mrb[0].mxu0
      %v1154 = vadd.f32 %v929, %v1153
      %v1155 = vpop.f32.mrb[0].mxu0
      %1156 = vmatprep.mubr.f32.mxu0 %v518
      %1157 = vmatmul.mubr.f32.gmra.mrb[0].mxu0 %v486
      %v1158 = vpop.f32.mrb[0].mxu0
      %v1159 = vadd.f32 %v934, %v1158
      %v1160 = vpop.f32.mrb[0].mxu0
      %1161 = vmatprep.mubr.f32.mxu0 %v519
      %1162 = vmatmul.mubr.f32.gmra.mrb[0].mxu0 %v487
      %v1163 = vpop.f32.mrb[0].mxu0
      %v1164 = vadd.f32 %v939, %v1163
      %v1165 = vpop.f32.mrb[0].mxu0
      %1166 = vmatprep.mubr.f32.mxu0 %v520
      %1167 = vmatmul.mubr.f32.gmra.mrb[0].mxu0 %v488
      %v1168 = vpop.f32.mrb[0].mxu0
      %v1169 = vadd.f32 %v944, %v1168
      %v1170 = vpop.f32.mrb[0].mxu0
      %1171 = vmatprep.mubr.f32.mxu0 %v521
      %1172 = vmatmul.mubr.f32.gmra.mrb[0].mxu0 %v489
      %v1173 = vpop.f32.mrb[0].mxu0
      %v1174 = vadd.f32 %v949, %v1173
      %v1175 = vpop.f32.mrb[0].mxu0
      %1176 = vmatprep.mubr.f32.mxu0 %v522
      %1177 = vmatmul.mubr.f32.gmra.mrb[0].mxu0 %v490
      %v1178 = vpop.f32.mrb[0].mxu0
      %v1179 = vadd.f32 %v954, %v1178
      %v1180 = vpop.f32.mrb[0].mxu0
      %1181 = vmatprep.mubr.f32.mxu0 %v523
      %1182 = vmatmul.mubr.f32.gmra.mrb[0].mxu0 %v491
      %v1183 = vpop.f32.mrb[0].mxu0
      %v1184 = vadd.f32 %v959, %v1183
      %v1185 = vpop.f32.mrb[0].mxu0
      %1186 = vmatprep.mubr.f32.mxu0 %v524
      %1187 = vmatmul.mubr.f32.gmra.mrb[0].mxu0 %v492
      %v1188 = vpop.f32.mrb[0].mxu0
      %v1189 = vadd.f32 %v964, %v1188
      %v1190 = vpop.f32.mrb[0].mxu0
      %1191 = vmatprep.mubr.f32.mxu0 %v525
      %1192 = vmatmul.mubr.f32.gmra.mrb[0].mxu0 %v493
      %v1193 = vpop.f32.mrb[0].mxu0
      %v1194 = vadd.f32 %v969, %v1193
      %v1195 = vpop.f32.mrb[0].mxu0
      %1196 = vmatprep.mubr.f32.mxu0 %v526
      %1197 = vmatmul.mubr.f32.gmra.mrb[0].mxu0 %v494
      %v1198 = vpop.f32.mrb[0].mxu0
      %v1199 = vadd.f32 %v974, %v1198
      %v1200 = vpop.f32.mrb[0].mxu0
      %1201 = vmatprep.mubr.f32.mxu0 %v527
      %1202 = vmatmul.mubr.f32.gmra.mrb[0].mxu0 %v495
      %v1203 = vpop.f32.mrb[0].mxu0
      %v1204 = vadd.f32 %v979, %v1203
      %v1205 = vpop.f32.mrb[0].mxu0
      %1206 = vmatprep.mubr.f32.mxu0 %v528
      %1207 = vmatmul.mubr.f32.gmra.mrb[0].mxu0 %v496
      %v1208 = vpop.f32.mrb[0].mxu0
      %v1209 = vadd.f32 %v984, %v1208
      %v1210 = vpop.f32.mrb[0].mxu0
      %1211 = vmatprep.mubr.f32.mxu0 %v529
      %1212 = vmatmul.mubr.f32.gmra.mrb[0].mxu0 %v497
      %v1213 = vpop.f32.mrb[0].mxu0
      %v1214 = vadd.f32 %v989, %v1213
      %v1215 = vpop.f32.mrb[0].mxu0
      %1216 = vmatprep.mubr.f32.mxu0 %v530
      %1217 = vmatmul.mubr.f32.gmra.mrb[0].mxu0 %v498
      %v1218 = vpop.f32.mrb[0].mxu0
      %v1219 = vadd.f32 %v994, %v1218
      %v1220 = vpop.f32.mrb[0].mxu0
      %1221 = vmatprep.mubr.f32.mxu0 %v531
      %1222 = vmatmul.mubr.f32.gmra.mrb[0].mxu0 %v499
      %v1223 = vpop.f32.mrb[0].mxu0
      %v1224 = vadd.f32 %v999, %v1223
      %v1225 = vpop.f32.mrb[0].mxu0
      %1226 = vmatprep.mubr.f32.mxu0 %v532
      %1227 = vmatmul.mubr.f32.gmra.mrb[0].mxu0 %v500
      %v1228 = vpop.f32.mrb[0].mxu0
      %v1229 = vadd.f32 %v1004, %v1228
      %v1230 = vpop.f32.mrb[0].mxu0
      %1231 = vmatprep.mubr.f32.mxu0 %v533
      %1232 = vmatmul.mubr.f32.gmra.mrb[0].mxu0 %v501
      %v1233 = vpop.f32.mrb[0].mxu0
      %v1234 = vadd.f32 %v1009, %v1233
      %v1235 = vpop.f32.mrb[0].mxu0
      %1236 = vmatprep.mubr.f32.mxu0 %v534
      %1237 = vmatmul.mubr.f32.gmra.mrb[0].mxu0 %v502
      %v1238 = vpop.f32.mrb[0].mxu0
      %v1239 = vadd.f32 %v1014, %v1238
      %v1240 = vpop.f32.mrb[0].mxu0
      %1241 = vmatprep.mubr.f32.mxu0 %v535
      %1242 = vmatmul.mubr.f32.gmra.mrb[0].mxu0 %v503
      %v1243 = vpop.f32.mrb[0].mxu0
      %v1244 = vadd.f32 %v1019, %v1243
      %v1245 = vpop.f32.mrb[0].mxu0
      %1246 = vmatprep.mubr.f32.mxu0 %v536
      %1247 = vmatmul.mubr.f32.gmra.mrb[0].mxu0 %v504
      %v1248 = vpop.f32.mrb[0].mxu0
      %v1249 = vadd.f32 %v1024, %v1248
      %v1250 = vpop.f32.mrb[0].mxu0
      %1251 = vmatprep.mubr.f32.mxu0 %v537
      %1252 = vmatmul.mubr.f32.gmra.mrb[0].mxu0 %v505
      %v1253 = vpop.f32.mrb[0].mxu0
      %v1254 = vadd.f32 %v1029, %v1253
      %v1255 = vpop.f32.mrb[0].mxu0
      %1256 = vmatprep.mubr.f32.mxu0 %v538
      %1257 = vmatmul.mubr.f32.gmra.mrb[0].mxu0 %v506
      %v1258 = vpop.f32.mrb[0].mxu0
      %v1259 = vadd.f32 %v1034, %v1258
      %v1260 = vpop.f32.mrb[0].mxu0
      %1261 = vmatprep.mubr.f32.mxu0 %v539
      %1262 = vmatmul.mubr.f32.gmra.mrb[0].mxu0 %v507
      %v1263 = vpop.f32.mrb[0].mxu0
      %v1264 = vadd.f32 %v1039, %v1263
      %v1265 = vpop.f32.mrb[0].mxu0
      %1266 = vmatprep.mubr.f32.mxu0 %v540
      %1267 = vmatmul.mubr.f32.gmra.mrb[0].mxu0 %v508
      %v1268 = vpop.f32.mrb[0].mxu0
      %v1269 = vadd.f32 %v1044, %v1268
      %v1270 = vpop.f32.mrb[0].mxu0
      %1271 = vmatprep.mubr.f32.mxu0 %v541
      %1272 = vmatmul.mubr.f32.gmra.mrb[0].mxu0 %v509
      %v1273 = vpop.f32.mrb[0].mxu0
      %v1274 = vadd.f32 %v1049, %v1273
      %v1275 = vpop.f32.mrb[0].mxu0
      %1276 = vmatprep.mubr.f32.mxu0 %v542
      %1277 = vmatmul.mubr.f32.gmra.mrb[0].mxu0 %v510
      %v1278 = vpop.f32.mrb[0].mxu0
      %v1279 = vadd.f32 %v1054, %v1278
      %v1280 = vpop.f32.mrb[0].mxu0
      %1281 = vmatprep.mubr.f32.mxu0 %v543
      %1282 = vmatmul.mubr.f32.gmra.mrb[0].mxu0 %v511
      %v1283 = vpop.f32.mrb[0].mxu0
      %v1284 = vadd.f32 %v1059, %v1283
      %v1285 = vpop.f32.mrb[0].mxu0
      %1286 = vmatprep.mubr.f32.mxu0 %v544
      %1287 = vmatmul.mubr.f32.gmra.mrb[0].mxu0 %v512
      %v1288 = vpop.f32.mrb[0].mxu0
      %v1289 = vadd.f32 %v1064, %v1288
      %v1290 = vpop.f32.mrb[0].mxu0
      %1291 = vmatprep.mubr.f32.mxu0 %v545
      %1292 = vmatmul.mubr.f32.gmra.mrb[0].mxu0 %v513
      %v1293 = vpop.f32.mrb[0].mxu0
      %v1294 = vadd.f32 %v1069, %v1293
      %v1295 = vpop.f32.mrb[0].mxu0
      %1296 = vmatprep.mubr.f32.mxu0 %v546
      %1297 = vmatmul.mubr.f32.gmra.mrb[0].mxu0 %v514
      %v1298 = vpop.f32.mrb[0].mxu0
      %v1299 = vadd.f32 %v1074, %v1298
      %v1300 = vpop.f32.mrb[0].mxu0
      %1301 = vdwg.mxu0
      %1302 = vmatprep.subr.mxu0 0.0
      %1303 = vmatpush1.msra.mxu0 %v772
      %1304 = vmatprep.subr.mxu0 0.0
      %1305 = vmatpush1.msra.mxu0 %v773
      %1306 = vmatprep.subr.mxu0 0.0
      %1307 = vmatpush1.msra.mxu0 %v774
      %1308 = vmatprep.subr.mxu0 0.0
      %1309 = vmatpush1.msra.mxu0 %v775
      %1310 = vmatprep.subr.mxu0 0.0
      %1311 = vmatpush1.msra.mxu0 %v776
      %1312 = vmatprep.subr.mxu0 0.0
      %1313 = vmatpush1.msra.mxu0 %v777
      %1314 = vmatprep.subr.mxu0 0.0
      %1315 = vmatpush1.msra.mxu0 %v778
      %1316 = vmatprep.subr.mxu0 0.0
      %1317 = vmatpush1.msra.mxu0 %v779
      %1318 = vmatprep.subr.mxu0 0.0
      %1319 = vmatpush1.msra.mxu0 %v780
      %1320 = vmatprep.subr.mxu0 0.0
      %1321 = vmatpush1.msra.mxu0 %v781
      %1322 = vmatprep.subr.mxu0 0.0
      %1323 = vmatpush1.msra.mxu0 %v782
      %1324 = vmatprep.subr.mxu0 0.0
      %1325 = vmatpush1.msra.mxu0 %v783
      %1326 = vmatprep.subr.mxu0 0.0
      %1327 = vmatpush1.msra.mxu0 %v784
      %1328 = vmatprep.subr.mxu0 0.0
      %1329 = vmatpush1.msra.mxu0 %v785
      %1330 = vmatprep.subr.mxu0 0.0
      %1331 = vmatpush1.msra.mxu0 %v786
      %1332 = vmatprep.subr.mxu0 0.0
      %1333 = vmatpush1.msra.mxu0 %v787
      %1334 = vmatprep.subr.mxu0 0.0
      %1335 = vmatpush1.msra.mxu0 %v788
      %1336 = vmatprep.subr.mxu0 0.0
      %1337 = vmatpush1.msra.mxu0 %v789
      %1338 = vmatprep.subr.mxu0 0.0
      %1339 = vmatpush1.msra.mxu0 %v790
      %1340 = vmatprep.subr.mxu0 0.0
      %1341 = vmatpush1.msra.mxu0 %v791
      %1342 = vmatprep.subr.mxu0 0.0
      %1343 = vmatpush1.msra.mxu0 %v792
      %1344 = vmatprep.subr.mxu0 0.0
      %1345 = vmatpush1.msra.mxu0 %v793
      %1346 = vmatprep.subr.mxu0 0.0
      %1347 = vmatpush1.msra.mxu0 %v794
      %1348 = vmatprep.subr.mxu0 0.0
      %1349 = vmatpush1.msra.mxu0 %v795
      %1350 = vmatprep.subr.mxu0 0.0
      %1351 = vmatpush1.msra.mxu0 %v796
      %1352 = vmatprep.subr.mxu0 0.0
      %1353 = vmatpush1.msra.mxu0 %v797
      %1354 = vmatprep.subr.mxu0 0.0
      %1355 = vmatpush1.msra.mxu0 %v798
      %1356 = vmatprep.subr.mxu0 0.0
      %1357 = vmatpush1.msra.mxu0 %v799
      %1358 = vmatprep.subr.mxu0 0.0
      %1359 = vmatpush1.msra.mxu0 %v800
      %1360 = vmatprep.subr.mxu0 0.0
      %1361 = vmatpush1.msra.mxu0 %v801
      %1362 = vmatprep.subr.mxu0 0.0
      %1363 = vmatpush1.msra.mxu0 %v802
      %1364 = vmatprep.subr.mxu0 0.0
      %1365 = vmatpush1.msra.mxu0 %v803
      %1366 = vmatprep.mubr.f32.mxu0 %v579
      %1367 = vmatmul.mubr.f32.gmra.mrb[0].mxu0 %v547
      %v1368 = vpop.f32.mrb[0].mxu0
      %v1369 = vadd.f32 %v1144, %v1368
      %v1370 = vpop.f32.mrb[0].mxu0
      %1371 = vmatprep.mubr.f32.mxu0 %v580
      %1372 = vmatmul.mubr.f32.gmra.mrb[0].mxu0 %v548
      %v1373 = vpop.f32.mrb[0].mxu0
      %v1374 = vadd.f32 %v1149, %v1373
      %v1375 = vpop.f32.mrb[0].mxu0
      %1376 = vmatprep.mubr.f32.mxu0 %v581
      %1377 = vmatmul.mubr.f32.gmra.mrb[0].mxu0 %v549
      %v1378 = vpop.f32.mrb[0].mxu0
      %v1379 = vadd.f32 %v1154, %v1378
      %v1380 = vpop.f32.mrb[0].mxu0
      %1381 = vmatprep.mubr.f32.mxu0 %v582
      %1382 = vmatmul.mubr.f32.gmra.mrb[0].mxu0 %v550
      %v1383 = vpop.f32.mrb[0].mxu0
      %v1384 = vadd.f32 %v1159, %v1383
      %v1385 = vpop.f32.mrb[0].mxu0
      %1386 = vmatprep.mubr.f32.mxu0 %v583
      %1387 = vmatmul.mubr.f32.gmra.mrb[0].mxu0 %v551
      %v1388 = vpop.f32.mrb[0].mxu0
      %v1389 = vadd.f32 %v1164, %v1388
      %v1390 = vpop.f32.mrb[0].mxu0
      %1391 = vmatprep.mubr.f32.mxu0 %v584
      %1392 = vmatmul.mubr.f32.gmra.mrb[0].mxu0 %v552
      %v1393 = vpop.f32.mrb[0].mxu0
      %v1394 = vadd.f32 %v1169, %v1393
      %v1395 = vpop.f32.mrb[0].mxu0
      %1396 = vmatprep.mubr.f32.mxu0 %v585
      %1397 = vmatmul.mubr.f32.gmra.mrb[0].mxu0 %v553
      %v1398 = vpop.f32.mrb[0].mxu0
      %v1399 = vadd.f32 %v1174, %v1398
      %v1400 = vpop.f32.mrb[0].mxu0
      %1401 = vmatprep.mubr.f32.mxu0 %v586
      %1402 = vmatmul.mubr.f32.gmra.mrb[0].mxu0 %v554
      %v1403 = vpop.f32.mrb[0].mxu0
      %v1404 = vadd.f32 %v1179, %v1403
      %v1405 = vpop.f32.mrb[0].mxu0
      %1406 = vmatprep.mubr.f32.mxu0 %v587
      %1407 = vmatmul.mubr.f32.gmra.mrb[0].mxu0 %v555
      %v1408 = vpop.f32.mrb[0].mxu0
      %v1409 = vadd.f32 %v1184, %v1408
      %v1410 = vpop.f32.mrb[0].mxu0
      %1411 = vmatprep.mubr.f32.mxu0 %v588
      %1412 = vmatmul.mubr.f32.gmra.mrb[0].mxu0 %v556
      %v1413 = vpop.f32.mrb[0].mxu0
      %v1414 = vadd.f32 %v1189, %v1413
      %v1415 = vpop.f32.mrb[0].mxu0
      %1416 = vmatprep.mubr.f32.mxu0 %v589
      %1417 = vmatmul.mubr.f32.gmra.mrb[0].mxu0 %v557
      %v1418 = vpop.f32.mrb[0].mxu0
      %v1419 = vadd.f32 %v1194, %v1418
      %v1420 = vpop.f32.mrb[0].mxu0
      %1421 = vmatprep.mubr.f32.mxu0 %v590
      %1422 = vmatmul.mubr.f32.gmra.mrb[0].mxu0 %v558
      %v1423 = vpop.f32.mrb[0].mxu0
      %v1424 = vadd.f32 %v1199, %v1423
      %v1425 = vpop.f32.mrb[0].mxu0
      %1426 = vmatprep.mubr.f32.mxu0 %v591
      %1427 = vmatmul.mubr.f32.gmra.mrb[0].mxu0 %v559
      %v1428 = vpop.f32.mrb[0].mxu0
      %v1429 = vadd.f32 %v1204, %v1428
      %v1430 = vpop.f32.mrb[0].mxu0
      %1431 = vmatprep.mubr.f32.mxu0 %v592
      %1432 = vmatmul.mubr.f32.gmra.mrb[0].mxu0 %v560
      %v1433 = vpop.f32.mrb[0].mxu0
      %v1434 = vadd.f32 %v1209, %v1433
      %v1435 = vpop.f32.mrb[0].mxu0
      %1436 = vmatprep.mubr.f32.mxu0 %v593
      %1437 = vmatmul.mubr.f32.gmra.mrb[0].mxu0 %v561
      %v1438 = vpop.f32.mrb[0].mxu0
      %v1439 = vadd.f32 %v1214, %v1438
      %v1440 = vpop.f32.mrb[0].mxu0
      %1441 = vmatprep.mubr.f32.mxu0 %v594
      %1442 = vmatmul.mubr.f32.gmra.mrb[0].mxu0 %v562
      %v1443 = vpop.f32.mrb[0].mxu0
      %v1444 = vadd.f32 %v1219, %v1443
      %v1445 = vpop.f32.mrb[0].mxu0
      %1446 = vmatprep.mubr.f32.mxu0 %v595
      %1447 = vmatmul.mubr.f32.gmra.mrb[0].mxu0 %v563
      %v1448 = vpop.f32.mrb[0].mxu0
      %v1449 = vadd.f32 %v1224, %v1448
      %v1450 = vpop.f32.mrb[0].mxu0
      %1451 = vmatprep.mubr.f32.mxu0 %v596
      %1452 = vmatmul.mubr.f32.gmra.mrb[0].mxu0 %v564
      %v1453 = vpop.f32.mrb[0].mxu0
      %v1454 = vadd.f32 %v1229, %v1453
      %v1455 = vpop.f32.mrb[0].mxu0
      %1456 = vmatprep.mubr.f32.mxu0 %v597
      %1457 = vmatmul.mubr.f32.gmra.mrb[0].mxu0 %v565
      %v1458 = vpop.f32.mrb[0].mxu0
      %v1459 = vadd.f32 %v1234, %v1458
      %v1460 = vpop.f32.mrb[0].mxu0
      %1461 = vmatprep.mubr.f32.mxu0 %v598
      %1462 = vmatmul.mubr.f32.gmra.mrb[0].mxu0 %v566
      %v1463 = vpop.f32.mrb[0].mxu0
      %v1464 = vadd.f32 %v1239, %v1463
      %v1465 = vpop.f32.mrb[0].mxu0
      %1466 = vmatprep.mubr.f32.mxu0 %v599
      %1467 = vmatmul.mubr.f32.gmra.mrb[0].mxu0 %v567
      %v1468 = vpop.f32.mrb[0].mxu0
      %v1469 = vadd.f32 %v1244, %v1468
      %v1470 = vpop.f32.mrb[0].mxu0
      %1471 = vmatprep.mubr.f32.mxu0 %v600
      %1472 = vmatmul.mubr.f32.gmra.mrb[0].mxu0 %v568
      %v1473 = vpop.f32.mrb[0].mxu0
      %v1474 = vadd.f32 %v1249, %v1473
      %v1475 = vpop.f32.mrb[0].mxu0
      %1476 = vmatprep.mubr.f32.mxu0 %v601
      %1477 = vmatmul.mubr.f32.gmra.mrb[0].mxu0 %v569
      %v1478 = vpop.f32.mrb[0].mxu0
      %v1479 = vadd.f32 %v1254, %v1478
      %v1480 = vpop.f32.mrb[0].mxu0
      %1481 = vmatprep.mubr.f32.mxu0 %v602
      %1482 = vmatmul.mubr.f32.gmra.mrb[0].mxu0 %v570
      %v1483 = vpop.f32.mrb[0].mxu0
      %v1484 = vadd.f32 %v1259, %v1483
      %v1485 = vpop.f32.mrb[0].mxu0
      %1486 = vmatprep.mubr.f32.mxu0 %v603
      %1487 = vmatmul.mubr.f32.gmra.mrb[0].mxu0 %v571
      %v1488 = vpop.f32.mrb[0].mxu0
      %v1489 = vadd.f32 %v1264, %v1488
      %v1490 = vpop.f32.mrb[0].mxu0
      %1491 = vmatprep.mubr.f32.mxu0 %v604
      %1492 = vmatmul.mubr.f32.gmra.mrb[0].mxu0 %v572
      %v1493 = vpop.f32.mrb[0].mxu0
      %v1494 = vadd.f32 %v1269, %v1493
      %v1495 = vpop.f32.mrb[0].mxu0
      %1496 = vmatprep.mubr.f32.mxu0 %v605
      %1497 = vmatmul.mubr.f32.gmra.mrb[0].mxu0 %v573
      %v1498 = vpop.f32.mrb[0].mxu0
      %v1499 = vadd.f32 %v1274, %v1498
      %v1500 = vpop.f32.mrb[0].mxu0
      %1501 = vmatprep.mubr.f32.mxu0 %v606
      %1502 = vmatmul.mubr.f32.gmra.mrb[0].mxu0 %v574
      %v1503 = vpop.f32.mrb[0].mxu0
      %v1504 = vadd.f32 %v1279, %v1503
      %v1505 = vpop.f32.mrb[0].mxu0
      %1506 = vmatprep.mubr.f32.mxu0 %v607
      %1507 = vmatmul.mubr.f32.gmra.mrb[0].mxu0 %v575
      %v1508 = vpop.f32.mrb[0].mxu0
      %v1509 = vadd.f32 %v1284, %v1508
      %v1510 = vpop.f32.mrb[0].mxu0
      %1511 = vmatprep.mubr.f32.mxu0 %v608
      %1512 = vmatmul.mubr.f32.gmra.mrb[0].mxu0 %v576
      %v1513 = vpop.f32.mrb[0].mxu0
      %v1514 = vadd.f32 %v1289, %v1513
      %v1515 = vpop.f32.mrb[0].mxu0
      %1516 = vmatprep.mubr.f32.mxu0 %v609
      %1517 = vmatmul.mubr.f32.gmra.mrb[0].mxu0 %v577
      %v1518 = vpop.f32.mrb[0].mxu0
      %v1519 = vadd.f32 %v1294, %v1518
      %v1520 = vpop.f32.mrb[0].mxu0
      %1521 = vmatprep.mubr.f32.mxu0 %v610
      %1522 = vmatmul.mubr.f32.gmra.mrb[0].mxu0 %v578
      %v1523 = vpop.f32.mrb[0].mxu0
      %v1524 = vadd.f32 %v1299, %v1523
      %v1525 = vpop.f32.mrb[0].mxu0
      %1526 = vdwg.mxu0
      %1527 = vmatprep.subr.mxu0 0.0
      %1528 = vmatpush1.msra.mxu0 %v804
      %1529 = vmatprep.subr.mxu0 0.0
      %1530 = vmatpush1.msra.mxu0 %v805
      %1531 = vmatprep.subr.mxu0 0.0
      %1532 = vmatpush1.msra.mxu0 %v806
      %1533 = vmatprep.subr.mxu0 0.0
      %1534 = vmatpush1.msra.mxu0 %v807
      %1535 = vmatprep.subr.mxu0 0.0
      %1536 = vmatpush1.msra.mxu0 %v808
      %1537 = vmatprep.subr.mxu0 0.0
      %1538 = vmatpush1.msra.mxu0 %v809
      %1539 = vmatprep.subr.mxu0 0.0
      %1540 = vmatpush1.msra.mxu0 %v810
      %1541 = vmatprep.subr.mxu0 0.0
      %1542 = vmatpush1.msra.mxu0 %v811
      %1543 = vmatprep.subr.mxu0 0.0
      %1544 = vmatpush1.msra.mxu0 %v812
      %1545 = vmatprep.subr.mxu0 0.0
      %1546 = vmatpush1.msra.mxu0 %v813
      %1547 = vmatprep.subr.mxu0 0.0
      %1548 = vmatpush1.msra.mxu0 %v814
      %1549 = vmatprep.subr.mxu0 0.0
      %1550 = vmatpush1.msra.mxu0 %v815
      %1551 = vmatprep.subr.mxu0 0.0
      %1552 = vmatpush1.msra.mxu0 %v816
      %1553 = vmatprep.subr.mxu0 0.0
      %1554 = vmatpush1.msra.mxu0 %v817
      %1555 = vmatprep.subr.mxu0 0.0
      %1556 = vmatpush1.msra.mxu0 %v818
      %1557 = vmatprep.subr.mxu0 0.0
      %1558 = vmatpush1.msra.mxu0 %v819
      %1559 = vmatprep.subr.mxu0 0.0
      %1560 = vmatpush1.msra.mxu0 %v820
      %1561 = vmatprep.subr.mxu0 0.0
      %1562 = vmatpush1.msra.mxu0 %v821
      %1563 = vmatprep.subr.mxu0 0.0
      %1564 = vmatpush1.msra.mxu0 %v822
      %1565 = vmatprep.subr.mxu0 0.0
      %1566 = vmatpush1.msra.mxu0 %v823
      %1567 = vmatprep.subr.mxu0 0.0
      %1568 = vmatpush1.msra.mxu0 %v824
      %1569 = vmatprep.subr.mxu0 0.0
      %1570 = vmatpush1.msra.mxu0 %v825
      %1571 = vmatprep.subr.mxu0 0.0
      %1572 = vmatpush1.msra.mxu0 %v826
      %1573 = vmatprep.subr.mxu0 0.0
      %1574 = vmatpush1.msra.mxu0 %v827
      %1575 = vmatprep.subr.mxu0 0.0
      %1576 = vmatpush1.msra.mxu0 %v828
      %1577 = vmatprep.subr.mxu0 0.0
      %1578 = vmatpush1.msra.mxu0 %v829
      %1579 = vmatprep.subr.mxu0 0.0
      %1580 = vmatpush1.msra.mxu0 %v830
      %1581 = vmatprep.subr.mxu0 0.0
      %1582 = vmatpush1.msra.mxu0 %v831
      %1583 = vmatprep.subr.mxu0 0.0
      %1584 = vmatpush1.msra.mxu0 %v832
      %1585 = vmatprep.subr.mxu0 0.0
      %1586 = vmatpush1.msra.mxu0 %v833
      %1587 = vmatprep.subr.mxu0 0.0
      %1588 = vmatpush1.msra.mxu0 %v834
      %1589 = vmatprep.subr.mxu0 0.0
      %1590 = vmatpush1.msra.mxu0 %v835
      %1591 = vmatprep.mubr.f32.mxu0 %v644
      %1592 = vmatmul.mubr.f32.gmra.mrb[0].mxu0 %v612
      %v1593 = vpop.f32.mrb[0].mxu0
      %v1594 = vadd.f32 %v1369, %v1593
      %v1595 = vpop.f32.mrb[0].mxu0
      %1596 = vmatprep.mubr.f32.mxu0 %v645
      %1597 = vmatmul.mubr.f32.gmra.mrb[0].mxu0 %v613
      %v1598 = vpop.f32.mrb[0].mxu0
      %v1599 = vadd.f32 %v1374, %v1598
      %v1600 = vpop.f32.mrb[0].mxu0
      %1601 = vmatprep.mubr.f32.mxu0 %v646
      %1602 = vmatmul.mubr.f32.gmra.mrb[0].mxu0 %v614
      %v1603 = vpop.f32.mrb[0].mxu0
      %v1604 = vadd.f32 %v1379, %v1603
      %v1605 = vpop.f32.mrb[0].mxu0
      %1606 = vmatprep.mubr.f32.mxu0 %v647
      %1607 = vmatmul.mubr.f32.gmra.mrb[0].mxu0 %v615
      %v1608 = vpop.f32.mrb[0].mxu0
      %v1609 = vadd.f32 %v1384, %v1608
      %v1610 = vpop.f32.mrb[0].mxu0
      %1611 = vmatprep.mubr.f32.mxu0 %v648
      %1612 = vmatmul.mubr.f32.gmra.mrb[0].mxu0 %v616
      %v1613 = vpop.f32.mrb[0].mxu0
      %v1614 = vadd.f32 %v1389, %v1613
      %v1615 = vpop.f32.mrb[0].mxu0
      %1616 = vmatprep.mubr.f32.mxu0 %v649
      %1617 = vmatmul.mubr.f32.gmra.mrb[0].mxu0 %v617
      %v1618 = vpop.f32.mrb[0].mxu0
      %v1619 = vadd.f32 %v1394, %v1618
      %v1620 = vpop.f32.mrb[0].mxu0
      %1621 = vmatprep.mubr.f32.mxu0 %v650
      %1622 = vmatmul.mubr.f32.gmra.mrb[0].mxu0 %v618
      %v1623 = vpop.f32.mrb[0].mxu0
      %v1624 = vadd.f32 %v1399, %v1623
      %v1625 = vpop.f32.mrb[0].mxu0
      %1626 = vmatprep.mubr.f32.mxu0 %v651
      %1627 = vmatmul.mubr.f32.gmra.mrb[0].mxu0 %v619
      %v1628 = vpop.f32.mrb[0].mxu0
      %v1629 = vadd.f32 %v1404, %v1628
      %v1630 = vpop.f32.mrb[0].mxu0
      %1631 = vmatprep.mubr.f32.mxu0 %v652
      %1632 = vmatmul.mubr.f32.gmra.mrb[0].mxu0 %v620
      %v1633 = vpop.f32.mrb[0].mxu0
      %v1634 = vadd.f32 %v1409, %v1633
      %v1635 = vpop.f32.mrb[0].mxu0
      %1636 = vmatprep.mubr.f32.mxu0 %v653
      %1637 = vmatmul.mubr.f32.gmra.mrb[0].mxu0 %v621
      %v1638 = vpop.f32.mrb[0].mxu0
      %v1639 = vadd.f32 %v1414, %v1638
      %v1640 = vpop.f32.mrb[0].mxu0
      %1641 = vmatprep.mubr.f32.mxu0 %v654
      %1642 = vmatmul.mubr.f32.gmra.mrb[0].mxu0 %v622
      %v1643 = vpop.f32.mrb[0].mxu0
      %v1644 = vadd.f32 %v1419, %v1643
      %v1645 = vpop.f32.mrb[0].mxu0
      %1646 = vmatprep.mubr.f32.mxu0 %v655
      %1647 = vmatmul.mubr.f32.gmra.mrb[0].mxu0 %v623
      %v1648 = vpop.f32.mrb[0].mxu0
      %v1649 = vadd.f32 %v1424, %v1648
      %v1650 = vpop.f32.mrb[0].mxu0
      %1651 = vmatprep.mubr.f32.mxu0 %v656
      %1652 = vmatmul.mubr.f32.gmra.mrb[0].mxu0 %v624
      %v1653 = vpop.f32.mrb[0].mxu0
      %v1654 = vadd.f32 %v1429, %v1653
      %v1655 = vpop.f32.mrb[0].mxu0
      %1656 = vmatprep.mubr.f32.mxu0 %v657
      %1657 = vmatmul.mubr.f32.gmra.mrb[0].mxu0 %v625
      %v1658 = vpop.f32.mrb[0].mxu0
      %v1659 = vadd.f32 %v1434, %v1658
      %v1660 = vpop.f32.mrb[0].mxu0
      %1661 = vmatprep.mubr.f32.mxu0 %v658
      %1662 = vmatmul.mubr.f32.gmra.mrb[0].mxu0 %v626
      %v1663 = vpop.f32.mrb[0].mxu0
      %v1664 = vadd.f32 %v1439, %v1663
      %v1665 = vpop.f32.mrb[0].mxu0
      %1666 = vmatprep.mubr.f32.mxu0 %v659
      %1667 = vmatmul.mubr.f32.gmra.mrb[0].mxu0 %v627
      %v1668 = vpop.f32.mrb[0].mxu0
      %v1669 = vadd.f32 %v1444, %v1668
      %v1670 = vpop.f32.mrb[0].mxu0
      %1671 = vmatprep.mubr.f32.mxu0 %v660
      %1672 = vmatmul.mubr.f32.gmra.mrb[0].mxu0 %v628
      %v1673 = vpop.f32.mrb[0].mxu0
      %v1674 = vadd.f32 %v1449, %v1673
      %v1675 = vpop.f32.mrb[0].mxu0
      %1676 = vmatprep.mubr.f32.mxu0 %v661
      %1677 = vmatmul.mubr.f32.gmra.mrb[0].mxu0 %v629
      %v1678 = vpop.f32.mrb[0].mxu0
      %v1679 = vadd.f32 %v1454, %v1678
      %v1680 = vpop.f32.mrb[0].mxu0
      %1681 = vmatprep.mubr.f32.mxu0 %v662
      %1682 = vmatmul.mubr.f32.gmra.mrb[0].mxu0 %v630
      %v1683 = vpop.f32.mrb[0].mxu0
      %v1684 = vadd.f32 %v1459, %v1683
      %v1685 = vpop.f32.mrb[0].mxu0
      %1686 = vmatprep.mubr.f32.mxu0 %v663
      %1687 = vmatmul.mubr.f32.gmra.mrb[0].mxu0 %v631
      %v1688 = vpop.f32.mrb[0].mxu0
      %v1689 = vadd.f32 %v1464, %v1688
      %v1690 = vpop.f32.mrb[0].mxu0
      %1691 = vmatprep.mubr.f32.mxu0 %v664
      %1692 = vmatmul.mubr.f32.gmra.mrb[0].mxu0 %v632
      %v1693 = vpop.f32.mrb[0].mxu0
      %v1694 = vadd.f32 %v1469, %v1693
      %v1695 = vpop.f32.mrb[0].mxu0
      %1696 = vmatprep.mubr.f32.mxu0 %v665
      %1697 = vmatmul.mubr.f32.gmra.mrb[0].mxu0 %v633
      %v1698 = vpop.f32.mrb[0].mxu0
      %v1699 = vadd.f32 %v1474, %v1698
      %v1700 = vpop.f32.mrb[0].mxu0
      %1701 = vmatprep.mubr.f32.mxu0 %v666
      %1702 = vmatmul.mubr.f32.gmra.mrb[0].mxu0 %v634
      %v1703 = vpop.f32.mrb[0].mxu0
      %v1704 = vadd.f32 %v1479, %v1703
      %v1705 = vpop.f32.mrb[0].mxu0
      %1706 = vmatprep.mubr.f32.mxu0 %v667
      %1707 = vmatmul.mubr.f32.gmra.mrb[0].mxu0 %v635
      %v1708 = vpop.f32.mrb[0].mxu0
      %v1709 = vadd.f32 %v1484, %v1708
      %v1710 = vpop.f32.mrb[0].mxu0
      %1711 = vmatprep.mubr.f32.mxu0 %v668
      %1712 = vmatmul.mubr.f32.gmra.mrb[0].mxu0 %v636
      %v1713 = vpop.f32.mrb[0].mxu0
      %v1714 = vadd.f32 %v1489, %v1713
      %v1715 = vpop.f32.mrb[0].mxu0
      %1716 = vmatprep.mubr.f32.mxu0 %v669
      %1717 = vmatmul.mubr.f32.gmra.mrb[0].mxu0 %v637
      %v1718 = vpop.f32.mrb[0].mxu0
      %v1719 = vadd.f32 %v1494, %v1718
      %v1720 = vpop.f32.mrb[0].mxu0
      %1721 = vmatprep.mubr.f32.mxu0 %v670
      %1722 = vmatmul.mubr.f32.gmra.mrb[0].mxu0 %v638
      %v1723 = vpop.f32.mrb[0].mxu0
      %v1724 = vadd.f32 %v1499, %v1723
      %v1725 = vpop.f32.mrb[0].mxu0
      %1726 = vmatprep.mubr.f32.mxu0 %v671
      %1727 = vmatmul.mubr.f32.gmra.mrb[0].mxu0 %v639
      %v1728 = vpop.f32.mrb[0].mxu0
      %v1729 = vadd.f32 %v1504, %v1728
      %v1730 = vpop.f32.mrb[0].mxu0
      %1731 = vmatprep.mubr.f32.mxu0 %v672
      %1732 = vmatmul.mubr.f32.gmra.mrb[0].mxu0 %v640
      %v1733 = vpop.f32.mrb[0].mxu0
      %v1734 = vadd.f32 %v1509, %v1733
      %v1735 = vpop.f32.mrb[0].mxu0
      %1736 = vmatprep.mubr.f32.mxu0 %v673
      %1737 = vmatmul.mubr.f32.gmra.mrb[0].mxu0 %v641
      %v1738 = vpop.f32.mrb[0].mxu0
      %v1739 = vadd.f32 %v1514, %v1738
      %v1740 = vpop.f32.mrb[0].mxu0
      %1741 = vmatprep.mubr.f32.mxu0 %v674
      %1742 = vmatmul.mubr.f32.gmra.mrb[0].mxu0 %v642
      %v1743 = vpop.f32.mrb[0].mxu0
      %v1744 = vadd.f32 %v1519, %v1743
      %v1745 = vpop.f32.mrb[0].mxu0
      %1746 = vmatprep.mubr.f32.mxu0 %v675
      %1747 = vmatmul.mubr.f32.gmra.mrb[0].mxu0 %v643
      %v1748 = vpop.f32.mrb[0].mxu0
      %v1749 = vadd.f32 %v1524, %v1748
      %v1750 = vpop.f32.mrb[0].mxu0
      %1751 = vdwg.mxu0
      %1752 = vmatprep.subr.mxu0 0.0
      %1753 = vmatpush1.msra.mxu0 %v836
      %1754 = vmatprep.subr.mxu0 0.0
      %1755 = vmatpush1.msra.mxu0 %v837
      %1756 = vmatprep.subr.mxu0 0.0
      %1757 = vmatpush1.msra.mxu0 %v838
      %1758 = vmatprep.subr.mxu0 0.0
      %1759 = vmatpush1.msra.mxu0 %v839
      %1760 = vmatprep.subr.mxu0 0.0
      %1761 = vmatpush1.msra.mxu0 %v840
      %1762 = vmatprep.subr.mxu0 0.0
      %1763 = vmatpush1.msra.mxu0 %v841
      %1764 = vmatprep.subr.mxu0 0.0
      %1765 = vmatpush1.msra.mxu0 %v842
      %1766 = vmatprep.subr.mxu0 0.0
      %1767 = vmatpush1.msra.mxu0 %v843
      %1768 = vmatprep.subr.mxu0 0.0
      %1769 = vmatpush1.msra.mxu0 %v844
      %1770 = vmatprep.subr.mxu0 0.0
      %1771 = vmatpush1.msra.mxu0 %v845
      %1772 = vmatprep.subr.mxu0 0.0
      %1773 = vmatpush1.msra.mxu0 %v846
      %1774 = vmatprep.subr.mxu0 0.0
      %1775 = vmatpush1.msra.mxu0 %v847
      %1776 = vmatprep.subr.mxu0 0.0
      %1777 = vmatpush1.msra.mxu0 %v848
      %1778 = vmatprep.subr.mxu0 0.0
      %1779 = vmatpush1.msra.mxu0 %v849
      %1780 = vmatprep.subr.mxu0 0.0
      %1781 = vmatpush1.msra.mxu0 %v850
      %1782 = vmatprep.subr.mxu0 0.0
      %1783 = vmatpush1.msra.mxu0 %v851
      %1784 = vmatprep.subr.mxu0 0.0
      %1785 = vmatpush1.msra.mxu0 0.0
      %1786 = vmatprep.subr.mxu0 0.0
      %1787 = vmatpush1.msra.mxu0 0.0
      %1788 = vmatprep.subr.mxu0 0.0
      %1789 = vmatpush1.msra.mxu0 0.0
      %1790 = vmatprep.subr.mxu0 0.0
      %1791 = vmatpush1.msra.mxu0 0.0
      %1792 = vmatprep.subr.mxu0 0.0
      %1793 = vmatpush1.msra.mxu0 0.0
      %1794 = vmatprep.subr.mxu0 0.0
      %1795 = vmatpush1.msra.mxu0 0.0
      %1796 = vmatprep.subr.mxu0 0.0
      %1797 = vmatpush1.msra.mxu0 0.0
      %1798 = vmatprep.subr.mxu0 0.0
      %1799 = vmatpush1.msra.mxu0 0.0
      %1800 = vmatprep.subr.mxu0 0.0
      %1801 = vmatpush1.msra.mxu0 0.0
      %1802 = vmatprep.subr.mxu0 0.0
      %1803 = vmatpush1.msra.mxu0 0.0
      %1804 = vmatprep.subr.mxu0 0.0
      %1805 = vmatpush1.msra.mxu0 0.0
      %1806 = vmatprep.subr.mxu0 0.0
      %1807 = vmatpush1.msra.mxu0 0.0
      %1808 = vmatprep.subr.mxu0 0.0
      %1809 = vmatpush1.msra.mxu0 0.0
      %1810 = vmatprep.subr.mxu0 0.0
      %1811 = vmatpush1.msra.mxu0 0.0
      %1812 = vmatprep.subr.mxu0 0.0
      %1813 = vmatpush1.msra.mxu0 0.0
      %1814 = vmatprep.subr.mxu0 0.0
      %1815 = vmatpush1.msra.mxu0 0.0
      %1816 = vmatprep.mubr.f32.mxu0 0.0
      %1817 = vmatmul.mubr.f32.gmra.mrb[0].mxu0 %v676
      %v1818 = vpop.f32.mrb[0].mxu0
      %v1819 = vadd.f32 %v1594, %v1818
      %v1820 = vpop.f32.mrb[0].mxu0
      %1821 = vmatprep.mubr.f32.mxu0 0.0
      %1822 = vmatmul.mubr.f32.gmra.mrb[0].mxu0 %v677
      %v1823 = vpop.f32.mrb[0].mxu0
      %v1824 = vadd.f32 %v1599, %v1823
      %v1825 = vpop.f32.mrb[0].mxu0
      %1826 = vmatprep.mubr.f32.mxu0 0.0
      %1827 = vmatmul.mubr.f32.gmra.mrb[0].mxu0 %v678
      %v1828 = vpop.f32.mrb[0].mxu0
      %v1829 = vadd.f32 %v1604, %v1828
      %v1830 = vpop.f32.mrb[0].mxu0
      %1831 = vmatprep.mubr.f32.mxu0 0.0
      %1832 = vmatmul.mubr.f32.gmra.mrb[0].mxu0 %v679
      %v1833 = vpop.f32.mrb[0].mxu0
      %v1834 = vadd.f32 %v1609, %v1833
      %v1835 = vpop.f32.mrb[0].mxu0
      %1836 = vmatprep.mubr.f32.mxu0 0.0
      %1837 = vmatmul.mubr.f32.gmra.mrb[0].mxu0 %v680
      %v1838 = vpop.f32.mrb[0].mxu0
      %v1839 = vadd.f32 %v1614, %v1838
      %v1840 = vpop.f32.mrb[0].mxu0
      %1841 = vmatprep.mubr.f32.mxu0 0.0
      %1842 = vmatmul.mubr.f32.gmra.mrb[0].mxu0 %v681
      %v1843 = vpop.f32.mrb[0].mxu0
      %v1844 = vadd.f32 %v1619, %v1843
      %v1845 = vpop.f32.mrb[0].mxu0
      %1846 = vmatprep.mubr.f32.mxu0 0.0
      %1847 = vmatmul.mubr.f32.gmra.mrb[0].mxu0 %v682
      %v1848 = vpop.f32.mrb[0].mxu0
      %v1849 = vadd.f32 %v1624, %v1848
      %v1850 = vpop.f32.mrb[0].mxu0
      %1851 = vmatprep.mubr.f32.mxu0 0.0
      %1852 = vmatmul.mubr.f32.gmra.mrb[0].mxu0 %v683
      %v1853 = vpop.f32.mrb[0].mxu0
      %v1854 = vadd.f32 %v1629, %v1853
      %v1855 = vpop.f32.mrb[0].mxu0
      %1856 = vmatprep.mubr.f32.mxu0 0.0
      %1857 = vmatmul.mubr.f32.gmra.mrb[0].mxu0 %v684
      %v1858 = vpop.f32.mrb[0].mxu0
      %v1859 = vadd.f32 %v1634, %v1858
      %v1860 = vpop.f32.mrb[0].mxu0
      %1861 = vmatprep.mubr.f32.mxu0 0.0
      %1862 = vmatmul.mubr.f32.gmra.mrb[0].mxu0 %v685
      %v1863 = vpop.f32.mrb[0].mxu0
      %v1864 = vadd.f32 %v1639, %v1863
      %v1865 = vpop.f32.mrb[0].mxu0
      %1866 = vmatprep.mubr.f32.mxu0 0.0
      %1867 = vmatmul.mubr.f32.gmra.mrb[0].mxu0 %v686
      %v1868 = vpop.f32.mrb[0].mxu0
      %v1869 = vadd.f32 %v1644, %v1868
      %v1870 = vpop.f32.mrb[0].mxu0
      %1871 = vmatprep.mubr.f32.mxu0 0.0
      %1872 = vmatmul.mubr.f32.gmra.mrb[0].mxu0 %v687
      %v1873 = vpop.f32.mrb[0].mxu0
      %v1874 = vadd.f32 %v1649, %v1873
      %v1875 = vpop.f32.mrb[0].mxu0
      %1876 = vmatprep.mubr.f32.mxu0 0.0
      %1877 = vmatmul.mubr.f32.gmra.mrb[0].mxu0 %v688
      %v1878 = vpop.f32.mrb[0].mxu0
      %v1879 = vadd.f32 %v1654, %v1878
      %v1880 = vpop.f32.mrb[0].mxu0
      %1881 = vmatprep.mubr.f32.mxu0 0.0
      %1882 = vmatmul.mubr.f32.gmra.mrb[0].mxu0 %v689
      %v1883 = vpop.f32.mrb[0].mxu0
      %v1884 = vadd.f32 %v1659, %v1883
      %v1885 = vpop.f32.mrb[0].mxu0
      %1886 = vmatprep.mubr.f32.mxu0 0.0
      %1887 = vmatmul.mubr.f32.gmra.mrb[0].mxu0 %v690
      %v1888 = vpop.f32.mrb[0].mxu0
      %v1889 = vadd.f32 %v1664, %v1888
      %v1890 = vpop.f32.mrb[0].mxu0
      %1891 = vmatprep.mubr.f32.mxu0 0.0
      %1892 = vmatmul.mubr.f32.gmra.mrb[0].mxu0 %v691
      %v1893 = vpop.f32.mrb[0].mxu0
      %v1894 = vadd.f32 %v1669, %v1893
      %v1895 = vpop.f32.mrb[0].mxu0
      %1896 = vmatprep.mubr.f32.mxu0 0.0
      %1897 = vmatmul.mubr.f32.gmra.mrb[0].mxu0 %v692
      %v1898 = vpop.f32.mrb[0].mxu0
      %v1899 = vadd.f32 %v1674, %v1898
      %v1900 = vpop.f32.mrb[0].mxu0
      %1901 = vmatprep.mubr.f32.mxu0 0.0
      %1902 = vmatmul.mubr.f32.gmra.mrb[0].mxu0 %v693
      %v1903 = vpop.f32.mrb[0].mxu0
      %v1904 = vadd.f32 %v1679, %v1903
      %v1905 = vpop.f32.mrb[0].mxu0
      %1906 = vmatprep.mubr.f32.mxu0 0.0
      %1907 = vmatmul.mubr.f32.gmra.mrb[0].mxu0 %v694
      %v1908 = vpop.f32.mrb[0].mxu0
      %v1909 = vadd.f32 %v1684, %v1908
      %v1910 = vpop.f32.mrb[0].mxu0
      %1911 = vmatprep.mubr.f32.mxu0 0.0
      %1912 = vmatmul.mubr.f32.gmra.mrb[0].mxu0 %v695
      %v1913 = vpop.f32.mrb[0].mxu0
      %v1914 = vadd.f32 %v1689, %v1913
      %v1915 = vpop.f32.mrb[0].mxu0
      %1916 = vmatprep.mubr.f32.mxu0 0.0
      %1917 = vmatmul.mubr.f32.gmra.mrb[0].mxu0 %v696
      %v1918 = vpop.f32.mrb[0].mxu0
      %v1919 = vadd.f32 %v1694, %v1918
      %v1920 = vpop.f32.mrb[0].mxu0
      %1921 = vmatprep.mubr.f32.mxu0 0.0
      %1922 = vmatmul.mubr.f32.gmra.mrb[0].mxu0 %v697
      %v1923 = vpop.f32.mrb[0].mxu0
      %v1924 = vadd.f32 %v1699, %v1923
      %v1925 = vpop.f32.mrb[0].mxu0
      %1926 = vmatprep.mubr.f32.mxu0 0.0
      %1927 = vmatmul.mubr.f32.gmra.mrb[0].mxu0 %v698
      %v1928 = vpop.f32.mrb[0].mxu0
      %v1929 = vadd.f32 %v1704, %v1928
      %v1930 = vpop.f32.mrb[0].mxu0
      %1931 = vmatprep.mubr.f32.mxu0 0.0
      %1932 = vmatmul.mubr.f32.gmra.mrb[0].mxu0 %v699
      %v1933 = vpop.f32.mrb[0].mxu0
      %v1934 = vadd.f32 %v1709, %v1933
      %v1935 = vpop.f32.mrb[0].mxu0
      %1936 = vmatprep.mubr.f32.mxu0 0.0
      %1937 = vmatmul.mubr.f32.gmra.mrb[0].mxu0 %v700
      %v1938 = vpop.f32.mrb[0].mxu0
      %v1939 = vadd.f32 %v1714, %v1938
      %v1940 = vpop.f32.mrb[0].mxu0
      %1941 = vmatprep.mubr.f32.mxu0 0.0
      %1942 = vmatmul.mubr.f32.gmra.mrb[0].mxu0 %v701
      %v1943 = vpop.f32.mrb[0].mxu0
      %v1944 = vadd.f32 %v1719, %v1943
      %v1945 = vpop.f32.mrb[0].mxu0
      %1946 = vmatprep.mubr.f32.mxu0 0.0
      %1947 = vmatmul.mubr.f32.gmra.mrb[0].mxu0 %v702
      %v1948 = vpop.f32.mrb[0].mxu0
      %v1949 = vadd.f32 %v1724, %v1948
      %v1950 = vpop.f32.mrb[0].mxu0
      %1951 = vmatprep.mubr.f32.mxu0 0.0
      %1952 = vmatmul.mubr.f32.gmra.mrb[0].mxu0 %v703
      %v1953 = vpop.f32.mrb[0].mxu0
      %v1954 = vadd.f32 %v1729, %v1953
      %v1955 = vpop.f32.mrb[0].mxu0
      %1956 = vmatprep.mubr.f32.mxu0 0.0
      %1957 = vmatmul.mubr.f32.gmra.mrb[0].mxu0 %v704
      %v1958 = vpop.f32.mrb[0].mxu0
      %v1959 = vadd.f32 %v1734, %v1958
      %v1960 = vpop.f32.mrb[0].mxu0
      %1961 = vmatprep.mubr.f32.mxu0 0.0
      %1962 = vmatmul.mubr.f32.gmra.mrb[0].mxu0 %v705
      %v1963 = vpop.f32.mrb[0].mxu0
      %v1964 = vadd.f32 %v1739, %v1963
      %v1965 = vpop.f32.mrb[0].mxu0
      %1966 = vmatprep.mubr.f32.mxu0 0.0
      %1967 = vmatmul.mubr.f32.gmra.mrb[0].mxu0 %v706
      %v1968 = vpop.f32.mrb[0].mxu0
      %v1969 = vadd.f32 %v1744, %v1968
      %v1970 = vpop.f32.mrb[0].mxu0
      %1971 = vmatprep.mubr.f32.mxu0 0.0
      %1972 = vmatmul.mubr.f32.gmra.mrb[0].mxu0 %v707
      %v1973 = vpop.f32.mrb[0].mxu0
      %v1974 = vadd.f32 %v1749, %v1973
      %v1975 = vpop.f32.mrb[0].mxu0
      %1976 = vdwg.mxu0
      %v1977 = vadd.f32 %v1819, %v1824
      %v1978 = vadd.f32 %v1977, %v1829
      %v1979 = vadd.f32 %v1978, %v1834
      %v1980 = vadd.f32 %v1979, %v1839
      %v1981 = vadd.f32 %v1980, %v1844
      %v1982 = vadd.f32 %v1981, %v1849
      %v1983 = vadd.f32 %v1982, %v1854
      %v1984 = vadd.f32 %v1983, %v1859
      %v1985 = vadd.f32 %v1984, %v1864
      %v1986 = vadd.f32 %v1985, %v1869
      %v1987 = vadd.f32 %v1986, %v1874
      %v1988 = vadd.f32 %v1987, %v1879
      %v1989 = vadd.f32 %v1988, %v1884
      %v1990 = vadd.f32 %v1989, %v1889
      %v1991 = vadd.f32 %v1990, %v1894
      %v1992 = vadd.f32 %v1991, %v1899
      %v1993 = vadd.f32 %v1992, %v1904
      %v1994 = vadd.f32 %v1993, %v1909
      %v1995 = vadd.f32 %v1994, %v1914
      %v1996 = vadd.f32 %v1995, %v1919
      %v1997 = vadd.f32 %v1996, %v1924
      %v1998 = vadd.f32 %v1997, %v1929
      %v1999 = vadd.f32 %v1998, %v1934
      %v2000 = vadd.f32 %v1999, %v1939
      %v2001 = vadd.f32 %v2000, %v1944
      %v2002 = vadd.f32 %v2001, %v1949
      %v2003 = vadd.f32 %v2002, %v1954
      %v2004 = vadd.f32 %v2003, %v1959
      %v2005 = vadd.f32 %v2004, %v1964
      %v2006 = vadd.f32 %v2005, %v1969
      %v2007 = vadd.f32 %v2006, %v1974
      %v2008 = vrot.slane %v2007, 4
      %v2009 = vadd.f32 %v2007, %v2008
      %v2010 = vrot.slane %v2009, 2
      %v2011 = vadd.f32 %v2009, %v2010
      %v2012 = vrot.slane %v2011, 1
      %v2013 = vadd.f32 %v2011, %v2012
      %v2014 = vmul.f32 %v1819, %v1819
      %v2015 = vmul.f32 %v1824, %v1824
      %v2016 = vmul.f32 %v1829, %v1829
      %v2017 = vmul.f32 %v1834, %v1834
      %v2018 = vmul.f32 %v1839, %v1839
      %v2019 = vmul.f32 %v1844, %v1844
      %v2020 = vmul.f32 %v1849, %v1849
      %v2021 = vmul.f32 %v1854, %v1854
      %v2022 = vmul.f32 %v1859, %v1859
      %v2023 = vmul.f32 %v1864, %v1864
      %v2024 = vmul.f32 %v1869, %v1869
      %v2025 = vmul.f32 %v1874, %v1874
      %v2026 = vmul.f32 %v1879, %v1879
      %v2027 = vmul.f32 %v1884, %v1884
      %v2028 = vmul.f32 %v1889, %v1889
      %v2029 = vmul.f32 %v1894, %v1894
      %v2030 = vmul.f32 %v1899, %v1899
      %v2031 = vmul.f32 %v1904, %v1904
      %v2032 = vmul.f32 %v1909, %v1909
      %v2033 = vmul.f32 %v1914, %v1914
      %v2034 = vmul.f32 %v1919, %v1919
      %v2035 = vmul.f32 %v1924, %v1924
      %v2036 = vmul.f32 %v1929, %v1929
      %v2037 = vmul.f32 %v1934, %v1934
      %v2038 = vmul.f32 %v1939, %v1939
      %v2039 = vmul.f32 %v1944, %v1944
      %v2040 = vmul.f32 %v1949, %v1949
      %v2041 = vmul.f32 %v1954, %v1954
      %v2042 = vmul.f32 %v1959, %v1959
      %v2043 = vmul.f32 %v1964, %v1964
      %v2044 = vmul.f32 %v1969, %v1969
      %v2045 = vmul.f32 %v1974, %v1974
      %v2046 = vadd.f32 %v2014, %v2015
      %v2047 = vadd.f32 %v2046, %v2016
      %v2048 = vadd.f32 %v2047, %v2017
      %v2049 = vadd.f32 %v2048, %v2018
      %v2050 = vadd.f32 %v2049, %v2019
      %v2051 = vadd.f32 %v2050, %v2020
      %v2052 = vadd.f32 %v2051, %v2021
      %v2053 = vadd.f32 %v2052, %v2022
      %v2054 = vadd.f32 %v2053, %v2023
      %v2055 = vadd.f32 %v2054, %v2024
      %v2056 = vadd.f32 %v2055, %v2025
      %v2057 = vadd.f32 %v2056, %v2026
      %v2058 = vadd.f32 %v2057, %v2027
      %v2059 = vadd.f32 %v2058, %v2028
      %v2060 = vadd.f32 %v2059, %v2029
      %v2061 = vadd.f32 %v2060, %v2030
      %v2062 = vadd.f32 %v2061, %v2031
      %v2063 = vadd.f32 %v2062, %v2032
      %v2064 = vadd.f32 %v2063, %v2033
      %v2065 = vadd.f32 %v2064, %v2034
      %v2066 = vadd.f32 %v2065, %v2035
      %v2067 = vadd.f32 %v2066, %v2036
      %v2068 = vadd.f32 %v2067, %v2037
      %v2069 = vadd.f32 %v2068, %v2038
      %v2070 = vadd.f32 %v2069, %v2039
      %v2071 = vadd.f32 %v2070, %v2040
      %v2072 = vadd.f32 %v2071, %v2041
      %v2073 = vadd.f32 %v2072, %v2042
      %v2074 = vadd.f32 %v2073, %v2043
      %v2075 = vadd.f32 %v2074, %v2044
      %v2076 = vadd.f32 %v2075, %v2045
      %v2077 = vrot.slane %v2076, 4
      %v2078 = vadd.f32 %v2076, %v2077
      %v2079 = vrot.slane %v2078, 2
      %v2080 = vadd.f32 %v2078, %v2079
      %v2081 = vrot.slane %v2080, 1
      %v2082 = vadd.f32 %v2080, %v2081
      %vm2083 = vcmask 1040384
      %v2084 = vsel %vm2083, %v2013, %v2082
      %2085 = vst [vmem:[%s208] sm:$0x3] %v2084
      %2086 = vst [vmem:[%s204] sm:$0xff] %v1819
      %2087 = vst [vmem:[%s204 + $0x8] sm:$0xff] %v1824
      %2088 = vst [vmem:[%s204 + $0x10] sm:$0xff] %v1829
      %2089 = vst [vmem:[%s204 + $0x18] sm:$0xff] %v1834
      %2090 = vst [vmem:[%s204 + $0x20] sm:$0xff] %v1839
      %2091 = vst [vmem:[%s204 + $0x28] sm:$0xff] %v1844
      %2092 = vst [vmem:[%s204 + $0x30] sm:$0xff] %v1849
      %2093 = vst [vmem:[%s204 + $0x38] sm:$0xff] %v1854
      %2094 = vst [vmem:[%s204 + $0x40] sm:$0xff] %v1859
      %2095 = vst [vmem:[%s204 + $0x48] sm:$0xff] %v1864
      %2096 = vst [vmem:[%s204 + $0x50] sm:$0xff] %v1869
      %2097 = vst [vmem:[%s204 + $0x58] sm:$0xff] %v1874
      %2098 = vst [vmem:[%s204 + $0x60] sm:$0xff] %v1879
      %2099 = vst [vmem:[%s204 + $0x68] sm:$0xff] %v1884
      %2100 = vst [vmem:[%s204 + $0x70] sm:$0xff] %v1889
      %2101 = vst [vmem:[%s204 + $0x78] sm:$0xff] %v1894
      %2102 = vst [vmem:[%s204 + $0x80] sm:$0xff] %v1899
      %2103 = vst [vmem:[%s204 + $0x88] sm:$0xff] %v1904
      %2104 = vst [vmem:[%s204 + $0x90] sm:$0xff] %v1909
      %2105 = vst [vmem:[%s204 + $0x98] sm:$0xff] %v1914
      %2106 = vst [vmem:[%s204 + $0xa0] sm:$0xff] %v1919
      %2107 = vst [vmem:[%s204 + $0xa8] sm:$0xff] %v1924
      %2108 = vst [vmem:[%s204 + $0xb0] sm:$0xff] %v1929
      %2109 = vst [vmem:[%s204 + $0xb8] sm:$0xff] %v1934
      %2110 = vst [vmem:[%s204 + $0xc0] sm:$0xff] %v1939
      %2111 = vst [vmem:[%s204 + $0xc8] sm:$0xff] %v1944
      %2112 = vst [vmem:[%s204 + $0xd0] sm:$0xff] %v1949
      %2113 = vst [vmem:[%s204 + $0xd8] sm:$0xff] %v1954
      %2114 = vst [vmem:[%s204 + $0xe0] sm:$0xff] %v1959
      %2115 = vst [vmem:[%s204 + $0xe8] sm:$0xff] %v1964
      %2116 = vst [vmem:[%s204 + $0xf0] sm:$0xff] %v1969
      %2117 = vst [vmem:[%s204 + $0xf8] sm:$0xff] %v1974
      %p2118 = scmp.lt.s32.totalorder %s16, 1
      %s2119 = scalar_select %p2118, %s16, 1
      %s2120 = smul.addr %s2119, 32
      %s2121 = smul.addr %s2120, 8
      %s2122 = scalar_lea.vmem %s3, %s2121
      %p2123 = scmp.lt.s32.totalorder %s16, 1
      %s2124 = scalar_select %p2123, %s16, 1
      %s2125 = smul.addr %s2124, 2
      %s2126 = scalar_lea.vmem %s4, %s2125
      // Predicated region
      $region33: #{basic_block_forward.4} parent=31 // pred_check
        %p2127 = pneg %p102
      $region34: #{basic_block_forward.4} parent=31 // pred_check_branch
        %2129 = sbr.rel (%p2127) target = $region36
      $region35: #{basic_block_forward.4} parent=31 // pred_region
        _
      $region36: #{basic_block_forward.4} parent=31 // pred_fallthru
        _
      // Predicated region
      $region37: #{basic_block_forward.4} parent=31 // pred_check
        %p2130 = pneg %p128
      $region38: #{basic_block_forward.4} parent=31 // pred_check_branch
        %2132 = sbr.rel (%p2130) target = $region40
      $region39: #{basic_block_forward.4} parent=31 // pred_region
        _
      $region40: #{basic_block_forward.4} parent=31 // pred_fallthru
        _
    $region32: #{basic_block_forward.4} parent=5 // pred_fallthru
      _
    %p2133 = scmp.le.s32.totalorder 2, %s11
    // Predicated region
    $region41: #{basic_block_forward.4} parent=5 // pred_check
      %p2134 = pneg %p2133
    $region42: #{basic_block_forward.4} parent=5 // pred_check_branch
      %2136 = sbr.rel (%p2134) target = $region44
    $region43: #{basic_block_forward.4} parent=5 // pred_region
      %s2137 = ssub.s32 %s11, 2
      // Predicated region
      $region45: #{basic_block_forward.4} parent=43 // pred_check
        %p2138 = pneg %p108
      $region46: #{basic_block_forward.4} parent=43 // pred_check_branch
        %2140 = sbr.rel (%p2138) target = $region48
      $region47: #{basic_block_forward.4} parent=43 // pred_region
        %p2141 = scmp.lt.s32.totalorder %s17, 1
        %s2142 = scalar_select %p2141, %s17, 1
        %s2143 = smul.addr %s2142, 32
        %s2144 = smul.addr %s2143, 8
        %s2145 = scalar_lea.vmem %s3, %s2144
      $region48: #{basic_block_forward.4} parent=43 // pred_fallthru
        _
      // Predicated region
      $region49: #{basic_block_forward.4} parent=43 // pred_check
        %p2146 = pneg %p134
      $region50: #{basic_block_forward.4} parent=43 // pred_check_branch
        %2148 = sbr.rel (%p2146) target = $region52
      $region51: #{basic_block_forward.4} parent=43 // pred_region
        %p2149 = scmp.lt.s32.totalorder %s17, 1
        %s2150 = scalar_select %p2149, %s17, 1
        %s2151 = smul.addr %s2150, 2
        %s2152 = scalar_lea.vmem %s4, %s2151
      $region52: #{basic_block_forward.4} parent=43 // pred_fallthru
        _
    $region44: #{basic_block_forward.4} parent=5 // pred_fallthru
      _
  $region6: #{basic_block_forward.4} parent=0 // loop_footer
    %s15 = sadd.s32 1, %s11
  $region7: #{basic_block_forward.4} parent=0 // loop_footer_branch
    %10 = sbr.rel target = $region3
  $region8: #{basic_block_forward.4} parent=0 // loop_exit
    _

// kernel: basic_block_forward.3
$region0: #{basic_block_forward.3}
  #allocation0 [shape = 'u32[]', space=smem, size = 0x4, offset = 0x4, fixed_abs, tag = 'smem constant byte address 0x4 - core index']
  #allocation1 [shape = 'u32[144,128]{1,0:T(1,128)}', space=vmem, size = 0x12000, scoped, tag = 'internal scratch']
  #allocation2 [shape = 'f32[18,18,128]{2,1,0:T(8,128)}', space=vmem, size = 0x36000, scoped, tag = 'scratch operand']
  %s0 = inlined_call_operand.vmem [shape: f32[2,16,16,128], index: 0, kind: input, shape index: {}]
  %s1 = inlined_call_operand.vmem [shape: f32[1152,128], index: 1, kind: input, shape index: {}]
  %s2 = inlined_call_operand.vmem [shape: f32[2,16,16,128], index: 2, kind: output, shape index: {0}]
  %s3 = inlined_call_operand.vmem [shape: f32[2,2,128], index: 3, kind: output, shape index: {1}]
  %4 = xla_tuple %s2, %s3
  %s5 = sld [smem:[#allocation0]]
  $region49: #{basic_block_forward.3} parent=0
    _
  %s7 = ssub.s32 1, %s5
  %s8 = scalar_select 0, %s7, %s5
  loop: start=0, step=1, limit=4
  $region2: #{basic_block_forward.3} parent=0 // loop_pre_header
    _
  $region3: #{basic_block_forward.3} parent=0 // loop_header
    %s10 = sphi 0, %s14
    %p11 = scmp.ge.s32.totalorder %s10, 4
    %s20 = sphi 0, %s22
    %s23 = sphi 0, %s20
    %s24 = sphi 0, %s23
    %s40 = sphi 0, %s24
    %s44 = sphi 0, %s44
    %s46 = sphi 0, %s44
    %s47 = sphi 0, %s46
    %s61 = sphi 0, %s47
    %s67 = sphi 0, %s69
    %s70 = sphi 0, %s67
    %s71 = sphi 0, %s70
    %s87 = sphi 0, %s71
    %s93 = sphi 0, %s95
    %s96 = sphi 0, %s93
    %s97 = sphi 0, %s96
    %s113 = sphi 0, %s97
  $region4: #{basic_block_forward.3} parent=0 // loop_header_branch
    %13 = sbr.rel (%p11) target = $region8
  $region5: #{basic_block_forward.3} parent=0 // loop_body
    %s15 = ssub.s32 %s10, 1
    %s16 = ssub.s32 %s10, 2
    %s17 = sadd.s32 %s10, 1
    %s18 = ssub.s32 %s10, %s17
    %p19 = scmp.eq.s32.totalorder %s18, 0
    %s21 = sadd.s32 %s20, 1
    %s22 = scalar_select %p19, %s20, %s21
    %p25 = pneg %p19
    %p26 = scmp.eq.s32.totalorder %s10, 1
    %p27 = por %p25, %p26
    %p28 = scmp.ne.s32.totalorder %s20, %s23
    %p29 = scmp.eq.s32.totalorder %s10, 0
    %p30 = por %p28, %p29
    %p31 = scmp.ne.s32.totalorder %s20, %s23
    %p32 = scmp.eq.s32.totalorder %s15, 1
    %p33 = por %p31, %p32
    %p34 = scmp.ne.s32.totalorder %s23, %s24
    %p35 = scmp.eq.s32.totalorder %s15, 0
    %p36 = por %p34, %p35
    %p37 = scmp.ne.s32.totalorder %s23, %s24
    %p38 = scmp.eq.s32.totalorder %s16, 1
    %p39 = por %p37, %p38
    %p41 = scmp.ne.s32.totalorder %s24, %s40
    %p42 = scmp.eq.s32.totalorder %s16, 0
    %p43 = por %p41, %p42
    %s45 = sadd.s32 %s44, 1
    %p48 = scmp.eq.s32.totalorder %s10, 1
    %p49 = scmp.ne.s32.totalorder %s44, %s46
    %p50 = scmp.eq.s32.totalorder %s10, 0
    %p51 = por %p49, %p50
    %p52 = scmp.ne.s32.totalorder %s44, %s46
    %p53 = scmp.eq.s32.totalorder %s15, 1
    %p54 = por %p52, %p53
    %p55 = scmp.ne.s32.totalorder %s46, %s47
    %p56 = scmp.eq.s32.totalorder %s15, 0
    %p57 = por %p55, %p56
    %p58 = scmp.ne.s32.totalorder %s46, %s47
    %p59 = scmp.eq.s32.totalorder %s16, 1
    %p60 = por %p58, %p59
    %p62 = scmp.ne.s32.totalorder %s47, %s61
    %p63 = scmp.eq.s32.totalorder %s16, 0
    %p64 = por %p62, %p63
    %s65 = ssub.s32 %s10, %s17
    %p66 = scmp.eq.s32.totalorder %s65, 0
    %s68 = sadd.s32 %s67, 1
    %s69 = scalar_select %p66, %s67, %s68
    %p72 = pneg %p66
    %p73 = scmp.eq.s32.totalorder %s10, 1
    %p74 = por %p72, %p73
    %p75 = scmp.ne.s32.totalorder %s67, %s70
    %p76 = scmp.eq.s32.totalorder %s10, 0
    %p77 = por %p75, %p76
    %p78 = scmp.ne.s32.totalorder %s67, %s70
    %p79 = scmp.eq.s32.totalorder %s15, 1
    %p80 = por %p78, %p79
    %p81 = scmp.ne.s32.totalorder %s70, %s71
    %p82 = scmp.eq.s32.totalorder %s15, 0
    %p83 = por %p81, %p82
    %p84 = scmp.ne.s32.totalorder %s70, %s71
    %p85 = scmp.eq.s32.totalorder %s16, 1
    %p86 = por %p84, %p85
    %p88 = scmp.ne.s32.totalorder %s71, %s87
    %p89 = scmp.eq.s32.totalorder %s16, 0
    %p90 = por %p88, %p89
    %s91 = ssub.s32 %s10, %s17
    %p92 = scmp.eq.s32.totalorder %s91, 0
    %s94 = sadd.s32 %s93, 1
    %s95 = scalar_select %p92, %s93, %s94
    %p98 = pneg %p92
    %p99 = scmp.eq.s32.totalorder %s10, 1
    %p100 = por %p98, %p99
    %p101 = scmp.ne.s32.totalorder %s93, %s96
    %p102 = scmp.eq.s32.totalorder %s10, 0
    %p103 = por %p101, %p102
    %p104 = scmp.ne.s32.totalorder %s93, %s96
    %p105 = scmp.eq.s32.totalorder %s15, 1
    %p106 = por %p104, %p105
    %p107 = scmp.ne.s32.totalorder %s96, %s97
    %p108 = scmp.eq.s32.totalorder %s15, 0
    %p109 = por %p107, %p108
    %p110 = scmp.ne.s32.totalorder %s96, %s97
    %p111 = scmp.eq.s32.totalorder %s16, 1
    %p112 = por %p110, %p111
    %p114 = scmp.ne.s32.totalorder %s97, %s113
    %p115 = scmp.eq.s32.totalorder %s16, 0
    %p116 = por %p114, %p115
    %p117 = scmp.le.s32.totalorder 1, %s10
    %p118 = scmp.lt.s32.totalorder %s10, 3
    %p119 = pnand %p117, %p118
    %p120 = pneg %p119
    // Predicated region
    $region9: #{basic_block_forward.3} parent=5 // pred_check
      _
    $region10: #{basic_block_forward.3} parent=5 // pred_check_branch
      %122 = sbr.rel (%p119) target = $region12
    $region11: #{basic_block_forward.3} parent=5 // pred_region
      %s123 = ssub.s32 %s10, 1
      // Predicated region
      $region13: #{basic_block_forward.3} parent=11 // pred_check
        %p124 = pneg %p57
      $region14: #{basic_block_forward.3} parent=11 // pred_check_branch
        %126 = sbr.rel (%p124) target = $region16
      $region15: #{basic_block_forward.3} parent=11 // pred_region
        _
      $region16: #{basic_block_forward.3} parent=11 // pred_fallthru
        _
    $region12: #{basic_block_forward.3} parent=5 // pred_fallthru
      _
    %p127 = scmp.lt.s32.totalorder %s10, 2
    // Predicated region
    $region17: #{basic_block_forward.3} parent=5 // pred_check
      %p128 = pneg %p127
    $region18: #{basic_block_forward.3} parent=5 // pred_check_branch
      %130 = sbr.rel (%p128) target = $region20
    $region19: #{basic_block_forward.3} parent=5 // pred_region
      // Predicated region
      $region21: #{basic_block_forward.3} parent=19 // pred_check
        %p131 = pneg %p30
      $region22: #{basic_block_forward.3} parent=19 // pred_check_branch
        %133 = sbr.rel (%p131) target = $region24
      $region23: #{basic_block_forward.3} parent=19 // pred_region
        %p134 = scmp.lt.s32.totalorder %s10, 1
        %s135 = scalar_select %p134, %s10, 1
        %s136 = smul.addr %s135, 32
        %s137 = smul.addr %s136, 8
        %s138 = scalar_lea.vmem %s0, %s137
      $region24: #{basic_block_forward.3} parent=19 // pred_fallthru
        _
    $region20: #{basic_block_forward.3} parent=5 // pred_fallthru
      _
    %p139 = scmp.le.s32.totalorder 1, %s10
    %p140 = scmp.lt.s32.totalorder %s10, 3
    %p141 = pnand %p139, %p140
    %p142 = pneg %p141
    // Predicated region
    $region25: #{basic_block_forward.3} parent=5 // pred_check
      _
    $region26: #{basic_block_forward.3} parent=5 // pred_check_branch
      %144 = sbr.rel (%p141) target = $region28
    $region27: #{basic_block_forward.3} parent=5 // pred_region
      %s145 = ssub.s32 %s10, 1
      %p146 = scmp.lt.s32.totalorder %s15, 1
      %s147 = scalar_select %p146, %s15, 1
      %s148 = smul.addr %s147, 32
      %s149 = smul.addr %s148, 8
      %s150 = scalar_lea.vmem %s0, %s149
      %p151 = pneg %p36
      %p152 = pneg %p33
      %p153 = pneg %p57
      %p154 = pneg %p54
      %p155 = pneg %p83
      %p156 = pneg %p80
      %p157 = scmp.lt.s32.totalorder %s15, 1
      %s158 = scalar_select %p157, %s15, 1
      %s159 = smul.addr %s158, 32
      %s160 = smul.addr %s159, 8
      %s161 = scalar_lea.vmem %s2, %s160
      %p162 = pneg %p109
      %p163 = pneg %p106
      %p164 = scmp.lt.s32.totalorder %s15, 1
      %s165 = scalar_select %p164, %s15, 1
      %s166 = smul.addr %s165, 2
      %s167 = scalar_lea.vmem %s3, %s166
      %p168 = scmp.lt.s32.totalorder %s15, 1
      %s169 = scalar_select %p168, %s15, 1
      %s170 = smul.addr %s169, 32
      %s171 = smul.addr %s170, 8
      %s172 = scalar_lea.vmem %s0, %s171
      %p173 = scmp.lt.s32.totalorder %s15, 1
      %s174 = scalar_select %p173, %s15, 1
      %s175 = smul.addr %s174, 32
      %s176 = smul.addr %s175, 8
      %s177 = scalar_lea.vmem %s2, %s176
      %p178 = scmp.lt.s32.totalorder %s15, 1
      %s179 = scalar_select %p178, %s15, 1
      %s180 = smul.addr %s179, 2
      %s181 = scalar_lea.vmem %s3, %s180
      %v182 = vld [vmem:[%s172] sm:$0xff]
      %v183 = vld [vmem:[%s172 + $0x8] sm:$0xff]
      %v184 = vld [vmem:[%s172 + $0x10] sm:$0xff]
      %v185 = vld [vmem:[%s172 + $0x18] sm:$0xff]
      %v186 = vld [vmem:[%s172 + $0x20] sm:$0xff]
      %v187 = vld [vmem:[%s172 + $0x28] sm:$0xff]
      %v188 = vld [vmem:[%s172 + $0x30] sm:$0xff]
      %v189 = vld [vmem:[%s172 + $0x38] sm:$0xff]
      %v190 = vld [vmem:[%s172 + $0x40] sm:$0xff]
      %v191 = vld [vmem:[%s172 + $0x48] sm:$0xff]
      %v192 = vld [vmem:[%s172 + $0x50] sm:$0xff]
      %v193 = vld [vmem:[%s172 + $0x58] sm:$0xff]
      %v194 = vld [vmem:[%s172 + $0x60] sm:$0xff]
      %v195 = vld [vmem:[%s172 + $0x68] sm:$0xff]
      %v196 = vld [vmem:[%s172 + $0x70] sm:$0xff]
      %v197 = vld [vmem:[%s172 + $0x78] sm:$0xff]
      %v198 = vld [vmem:[%s172 + $0x80] sm:$0xff]
      %v199 = vld [vmem:[%s172 + $0x88] sm:$0xff]
      %v200 = vld [vmem:[%s172 + $0x90] sm:$0xff]
      %v201 = vld [vmem:[%s172 + $0x98] sm:$0xff]
      %v202 = vld [vmem:[%s172 + $0xa0] sm:$0xff]
      %v203 = vld [vmem:[%s172 + $0xa8] sm:$0xff]
      %v204 = vld [vmem:[%s172 + $0xb0] sm:$0xff]
      %v205 = vld [vmem:[%s172 + $0xb8] sm:$0xff]
      %v206 = vld [vmem:[%s172 + $0xc0] sm:$0xff]
      %v207 = vld [vmem:[%s172 + $0xc8] sm:$0xff]
      %v208 = vld [vmem:[%s172 + $0xd0] sm:$0xff]
      %v209 = vld [vmem:[%s172 + $0xd8] sm:$0xff]
      %v210 = vld [vmem:[%s172 + $0xe0] sm:$0xff]
      %v211 = vld [vmem:[%s172 + $0xe8] sm:$0xff]
      %v212 = vld [vmem:[%s172 + $0xf0] sm:$0xff]
      %v213 = vld [vmem:[%s172 + $0xf8] sm:$0xff]
      %214 = vst [vmem:[#allocation2] sm:$0xff] 0.0
      %215 = vst [vmem:[#allocation2 + $0x8] sm:$0xff] 0.0
      %216 = vst [vmem:[#allocation2 + $0x10] sm:$0x3] 0.0
      %s217 = scalar_lea.vmem [#allocation2], 408
      %218 = vst [vmem:[%s217] sm:$0xff] 0.0
      %219 = vst [vmem:[%s217 + $0x8] sm:$0xff] 0.0
      %220 = vst [vmem:[%s217 + $0x10] sm:$0x3] 0.0
      %s221 = scalar_lea.vmem [#allocation2], 24
      %222 = vst [vmem:[%s221] sm:$0x1] 0.0
      %223 = vst [vmem:[%s221 + $0x18] sm:$0x1] 0.0
      %224 = vst [vmem:[%s221 + $0x30] sm:$0x1] 0.0
      %225 = vst [vmem:[%s221 + $0x48] sm:$0x1] 0.0
      %226 = vst [vmem:[%s221 + $0x60] sm:$0x1] 0.0
      %227 = vst [vmem:[%s221 + $0x78] sm:$0x1] 0.0
      %228 = vst [vmem:[%s221 + $0x90] sm:$0x1] 0.0
      %229 = vst [vmem:[%s221 + $0xa8] sm:$0x1] 0.0
      %230 = vst [vmem:[%s221 + $0xc0] sm:$0x1] 0.0
      %231 = vst [vmem:[%s221 + $0xd8] sm:$0x1] 0.0
      %232 = vst [vmem:[%s221 + $0xf0] sm:$0x1] 0.0
      %233 = vst [vmem:[%s221 + $0x108] sm:$0x1] 0.0
      %234 = vst [vmem:[%s221 + $0x120] sm:$0x1] 0.0
      %235 = vst [vmem:[%s221 + $0x138] sm:$0x1] 0.0
      %236 = vst [vmem:[%s221 + $0x150] sm:$0x1] 0.0
      %237 = vst [vmem:[%s221 + $0x168] sm:$0x1] 0.0
      %238 = vst [vmem:[%s221 + $0x11] sm:$0x1] 0.0
      %239 = vst [vmem:[%s221 + $0x29] sm:$0x1] 0.0
      %240 = vst [vmem:[%s221 + $0x41] sm:$0x1] 0.0
      %241 = vst [vmem:[%s221 + $0x59] sm:$0x1] 0.0
      %242 = vst [vmem:[%s221 + $0x71] sm:$0x1] 0.0
      %243 = vst [vmem:[%s221 + $0x89] sm:$0x1] 0.0
      %244 = vst [vmem:[%s221 + $0xa1] sm:$0x1] 0.0
      %245 = vst [vmem:[%s221 + $0xb9] sm:$0x1] 0.0
      %246 = vst [vmem:[%s221 + $0xd1] sm:$0x1] 0.0
      %247 = vst [vmem:[%s221 + $0xe9] sm:$0x1] 0.0
      %248 = vst [vmem:[%s221 + $0x101] sm:$0x1] 0.0
      %249 = vst [vmem:[%s221 + $0x119] sm:$0x1] 0.0
      %250 = vst [vmem:[%s221 + $0x131] sm:$0x1] 0.0
      %251 = vst [vmem:[%s221 + $0x149] sm:$0x1] 0.0
      %252 = vst [vmem:[%s221 + $0x161] sm:$0x1] 0.0
      %253 = vst [vmem:[%s221 + $0x179] sm:$0x1] 0.0
      %254 = vst [vmem:[%s221 + $0x1] sm:$0xff] %v182
      %255 = vst [vmem:[%s221 + $0x9] sm:$0xff] %v183
      %256 = vst [vmem:[%s221 + $0x19] sm:$0xff] %v184
      %257 = vst [vmem:[%s221 + $0x21] sm:$0xff] %v185
      %258 = vst [vmem:[%s221 + $0x31] sm:$0xff] %v186
      %259 = vst [vmem:[%s221 + $0x39] sm:$0xff] %v187
      %260 = vst [vmem:[%s221 + $0x49] sm:$0xff] %v188
      %261 = vst [vmem:[%s221 + $0x51] sm:$0xff] %v189
      %262 = vst [vmem:[%s221 + $0x61] sm:$0xff] %v190
      %263 = vst [vmem:[%s221 + $0x69] sm:$0xff] %v191
      %264 = vst [vmem:[%s221 + $0x79] sm:$0xff] %v192
      %265 = vst [vmem:[%s221 + $0x81] sm:$0xff] %v193
      %266 = vst [vmem:[%s221 + $0x91] sm:$0xff] %v194
      %267 = vst [vmem:[%s221 + $0x99] sm:$0xff] %v195
      %268 = vst [vmem:[%s221 + $0xa9] sm:$0xff] %v196
      %269 = vst [vmem:[%s221 + $0xb1] sm:$0xff] %v197
      %270 = vst [vmem:[%s221 + $0xc1] sm:$0xff] %v198
      %271 = vst [vmem:[%s221 + $0xc9] sm:$0xff] %v199
      %272 = vst [vmem:[%s221 + $0xd9] sm:$0xff] %v200
      %273 = vst [vmem:[%s221 + $0xe1] sm:$0xff] %v201
      %274 = vst [vmem:[%s221 + $0xf1] sm:$0xff] %v202
      %275 = vst [vmem:[%s221 + $0xf9] sm:$0xff] %v203
      %276 = vst [vmem:[%s221 + $0x109] sm:$0xff] %v204
      %277 = vst [vmem:[%s221 + $0x111] sm:$0xff] %v205
      %278 = vst [vmem:[%s221 + $0x121] sm:$0xff] %v206
      %279 = vst [vmem:[%s221 + $0x129] sm:$0xff] %v207
      %280 = vst [vmem:[%s221 + $0x139] sm:$0xff] %v208
      %281 = vst [vmem:[%s221 + $0x141] sm:$0xff] %v209
      %282 = vst [vmem:[%s221 + $0x151] sm:$0xff] %v210
      %283 = vst [vmem:[%s221 + $0x159] sm:$0xff] %v211
      %284 = vst [vmem:[%s221 + $0x169] sm:$0xff] %v212
      %285 = vst [vmem:[%s221 + $0x171] sm:$0xff] %v213
      %v286 = vld [vmem:[#allocation2] sm:$0xff]
      %v287 = vld [vmem:[#allocation2 + $0x8] sm:$0xff]
      %v288 = vld [vmem:[#allocation2 + $0x18] sm:$0xff]
      %v289 = vld [vmem:[#allocation2 + $0x20] sm:$0xff]
      %v290 = vld [vmem:[#allocation2 + $0x30] sm:$0xff]
      %v291 = vld [vmem:[#allocation2 + $0x38] sm:$0xff]
      %v292 = vld [vmem:[#allocation2 + $0x48] sm:$0xff]
      %v293 = vld [vmem:[#allocation2 + $0x50] sm:$0xff]
      %v294 = vld [vmem:[#allocation2 + $0x60] sm:$0xff]
      %v295 = vld [vmem:[#allocation2 + $0x68] sm:$0xff]
      %v296 = vld [vmem:[#allocation2 + $0x78] sm:$0xff]
      %v297 = vld [vmem:[#allocation2 + $0x80] sm:$0xff]
      %v298 = vld [vmem:[#allocation2 + $0x90] sm:$0xff]
      %v299 = vld [vmem:[#allocation2 + $0x98] sm:$0xff]
      %v300 = vld [vmem:[#allocation2 + $0xa8] sm:$0xff]
      %v301 = vld [vmem:[#allocation2 + $0xb0] sm:$0xff]
      %v302 = vld [vmem:[#allocation2 + $0xc0] sm:$0xff]
      %v303 = vld [vmem:[#allocation2 + $0xc8] sm:$0xff]
      %v304 = vld [vmem:[#allocation2 + $0xd8] sm:$0xff]
      %v305 = vld [vmem:[#allocation2 + $0xe0] sm:$0xff]
      %v306 = vld [vmem:[#allocation2 + $0xf0] sm:$0xff]
      %v307 = vld [vmem:[#allocation2 + $0xf8] sm:$0xff]
      %v308 = vld [vmem:[#allocation2 + $0x108] sm:$0xff]
      %v309 = vld [vmem:[#allocation2 + $0x110] sm:$0xff]
      %v310 = vld [vmem:[#allocation2 + $0x120] sm:$0xff]
      %v311 = vld [vmem:[#allocation2 + $0x128] sm:$0xff]
      %v312 = vld [vmem:[#allocation2 + $0x138] sm:$0xff]
      %v313 = vld [vmem:[#allocation2 + $0x140] sm:$0xff]
      %v314 = vld [vmem:[#allocation2 + $0x150] sm:$0xff]
      %v315 = vld [vmem:[#allocation2 + $0x158] sm:$0xff]
      %v316 = vld [vmem:[#allocation2 + $0x168] sm:$0xff]
      %v317 = vld [vmem:[#allocation2 + $0x170] sm:$0xff]
      %v318 = vld [vmem:[#allocation2 + $0x1] sm:$0xff]
      %v319 = vld [vmem:[#allocation2 + $0x9] sm:$0xff]
      %v320 = vld [vmem:[#allocation2 + $0x19] sm:$0xff]
      %v321 = vld [vmem:[#allocation2 + $0x21] sm:$0xff]
      %v322 = vld [vmem:[#allocation2 + $0x31] sm:$0xff]
      %v323 = vld [vmem:[#allocation2 + $0x39] sm:$0xff]
      %v324 = vld [vmem:[#allocation2 + $0x49] sm:$0xff]
      %v325 = vld [vmem:[#allocation2 + $0x51] sm:$0xff]
      %v326 = vld [vmem:[#allocation2 + $0x61] sm:$0xff]
      %v327 = vld [vmem:[#allocation2 + $0x69] sm:$0xff]
      %v328 = vld [vmem:[#allocation2 + $0x79] sm:$0xff]
      %v329 = vld [vmem:[#allocation2 + $0x81] sm:$0xff]
      %v330 = vld [vmem:[#allocation2 + $0x91] sm:$0xff]
      %v331 = vld [vmem:[#allocation2 + $0x99] sm:$0xff]
      %v332 = vld [vmem:[#allocation2 + $0xa9] sm:$0xff]
      %v333 = vld [vmem:[#allocation2 + $0xb1] sm:$0xff]
      %v334 = vld [vmem:[#allocation2 + $0xc1] sm:$0xff]
      %v335 = vld [vmem:[#allocation2 + $0xc9] sm:$0xff]
      %v336 = vld [vmem:[#allocation2 + $0xd9] sm:$0xff]
      %v337 = vld [vmem:[#allocation2 + $0xe1] sm:$0xff]
      %v338 = vld [vmem:[#allocation2 + $0xf1] sm:$0xff]
      %v339 = vld [vmem:[#allocation2 + $0xf9] sm:$0xff]
      %v340 = vld [vmem:[#allocation2 + $0x109] sm:$0xff]
      %v341 = vld [vmem:[#allocation2 + $0x111] sm:$0xff]
      %v342 = vld [vmem:[#allocation2 + $0x121] sm:$0xff]
      %v343 = vld [vmem:[#allocation2 + $0x129] sm:$0xff]
      %v344 = vld [vmem:[#allocation2 + $0x139] sm:$0xff]
      %v345 = vld [vmem:[#allocation2 + $0x141] sm:$0xff]
      %v346 = vld [vmem:[#allocation2 + $0x151] sm:$0xff]
      %v347 = vld [vmem:[#allocation2 + $0x159] sm:$0xff]
      %v348 = vld [vmem:[#allocation2 + $0x169] sm:$0xff]
      %v349 = vld [vmem:[#allocation2 + $0x171] sm:$0xff]
      %v350 = vld [vmem:[#allocation2 + $0x2] sm:$0xff]
      %v351 = vld [vmem:[#allocation2 + $0xa] sm:$0xff]
      %v352 = vld [vmem:[#allocation2 + $0x1a] sm:$0xff]
      %v353 = vld [vmem:[#allocation2 + $0x22] sm:$0xff]
      %v354 = vld [vmem:[#allocation2 + $0x32] sm:$0xff]
      %v355 = vld [vmem:[#allocation2 + $0x3a] sm:$0xff]
      %v356 = vld [vmem:[#allocation2 + $0x4a] sm:$0xff]
      %v357 = vld [vmem:[#allocation2 + $0x52] sm:$0xff]
      %v358 = vld [vmem:[#allocation2 + $0x62] sm:$0xff]
      %v359 = vld [vmem:[#allocation2 + $0x6a] sm:$0xff]
      %v360 = vld [vmem:[#allocation2 + $0x7a] sm:$0xff]
      %v361 = vld [vmem:[#allocation2 + $0x82] sm:$0xff]
      %v362 = vld [vmem:[#allocation2 + $0x92] sm:$0xff]
      %v363 = vld [vmem:[#allocation2 + $0x9a] sm:$0xff]
      %v364 = vld [vmem:[#allocation2 + $0xaa] sm:$0xff]
      %v365 = vld [vmem:[#allocation2 + $0xb2] sm:$0xff]
      %v366 = vld [vmem:[#allocation2 + $0xc2] sm:$0xff]
      %v367 = vld [vmem:[#allocation2 + $0xca] sm:$0xff]
      %v368 = vld [vmem:[#allocation2 + $0xda] sm:$0xff]
      %v369 = vld [vmem:[#allocation2 + $0xe2] sm:$0xff]
      %v370 = vld [vmem:[#allocation2 + $0xf2] sm:$0xff]
      %v371 = vld [vmem:[#allocation2 + $0xfa] sm:$0xff]
      %v372 = vld [vmem:[#allocation2 + $0x10a] sm:$0xff]
      %v373 = vld [vmem:[#allocation2 + $0x112] sm:$0xff]
      %v374 = vld [vmem:[#allocation2 + $0x122] sm:$0xff]
      %v375 = vld [vmem:[#allocation2 + $0x12a] sm:$0xff]
      %v376 = vld [vmem:[#allocation2 + $0x13a] sm:$0xff]
      %v377 = vld [vmem:[#allocation2 + $0x142] sm:$0xff]
      %v378 = vld [vmem:[#allocation2 + $0x152] sm:$0xff]
      %v379 = vld [vmem:[#allocation2 + $0x15a] sm:$0xff]
      %v380 = vld [vmem:[#allocation2 + $0x16a] sm:$0xff]
      %v381 = vld [vmem:[#allocation2 + $0x172] sm:$0xff]
      %v382 = vld [vmem:[%s221] sm:$0xff]
      %v383 = vld [vmem:[%s221 + $0x8] sm:$0xff]
      %v384 = vld [vmem:[%s221 + $0x18] sm:$0xff]
      %v385 = vld [vmem:[%s221 + $0x20] sm:$0xff]
      %v386 = vld [vmem:[%s221 + $0x30] sm:$0xff]
      %v387 = vld [vmem:[%s221 + $0x38] sm:$0xff]
      %v388 = vld [vmem:[%s221 + $0x48] sm:$0xff]
      %v389 = vld [vmem:[%s221 + $0x50] sm:$0xff]
      %v390 = vld [vmem:[%s221 + $0x60] sm:$0xff]
      %v391 = vld [vmem:[%s221 + $0x68] sm:$0xff]
      %v392 = vld [vmem:[%s221 + $0x78] sm:$0xff]
      %v393 = vld [vmem:[%s221 + $0x80] sm:$0xff]
      %v394 = vld [vmem:[%s221 + $0x90] sm:$0xff]
      %v395 = vld [vmem:[%s221 + $0x98] sm:$0xff]
      %v396 = vld [vmem:[%s221 + $0xa8] sm:$0xff]
      %v397 = vld [vmem:[%s221 + $0xb0] sm:$0xff]
      %v398 = vld [vmem:[%s221 + $0xc0] sm:$0xff]
      %v399 = vld [vmem:[%s221 + $0xc8] sm:$0xff]
      %v400 = vld [vmem:[%s221 + $0xd8] sm:$0xff]
      %v401 = vld [vmem:[%s221 + $0xe0] sm:$0xff]
      %v402 = vld [vmem:[%s221 + $0xf0] sm:$0xff]
      %v403 = vld [vmem:[%s221 + $0xf8] sm:$0xff]
      %v404 = vld [vmem:[%s221 + $0x108] sm:$0xff]
      %v405 = vld [vmem:[%s221 + $0x110] sm:$0xff]
      %v406 = vld [vmem:[%s221 + $0x120] sm:$0xff]
      %v407 = vld [vmem:[%s221 + $0x128] sm:$0xff]
      %v408 = vld [vmem:[%s221 + $0x138] sm:$0xff]
      %v409 = vld [vmem:[%s221 + $0x140] sm:$0xff]
      %v410 = vld [vmem:[%s221 + $0x150] sm:$0xff]
      %v411 = vld [vmem:[%s221 + $0x158] sm:$0xff]
      %v412 = vld [vmem:[%s221 + $0x168] sm:$0xff]
      %v413 = vld [vmem:[%s221 + $0x170] sm:$0xff]
      %v414 = vld [vmem:[%s221 + $0x1] sm:$0xff]
      %v415 = vld [vmem:[%s221 + $0x9] sm:$0xff]
      %v416 = vld [vmem:[%s221 + $0x19] sm:$0xff]
      %v417 = vld [vmem:[%s221 + $0x21] sm:$0xff]
      %v418 = vld [vmem:[%s221 + $0x31] sm:$0xff]
      %v419 = vld [vmem:[%s221 + $0x39] sm:$0xff]
      %v420 = vld [vmem:[%s221 + $0x49] sm:$0xff]
      %v421 = vld [vmem:[%s221 + $0x51] sm:$0xff]
      %v422 = vld [vmem:[%s221 + $0x61] sm:$0xff]
      %v423 = vld [vmem:[%s221 + $0x69] sm:$0xff]
      %v424 = vld [vmem:[%s221 + $0x79] sm:$0xff]
      %v425 = vld [vmem:[%s221 + $0x81] sm:$0xff]
      %v426 = vld [vmem:[%s221 + $0x91] sm:$0xff]
      %v427 = vld [vmem:[%s221 + $0x99] sm:$0xff]
      %v428 = vld [vmem:[%s221 + $0xa9] sm:$0xff]
      %v429 = vld [vmem:[%s221 + $0xb1] sm:$0xff]
      %v430 = vld [vmem:[%s221 + $0xc1] sm:$0xff]
      %v431 = vld [vmem:[%s221 + $0xc9] sm:$0xff]
      %v432 = vld [vmem:[%s221 + $0xd9] sm:$0xff]
      %v433 = vld [vmem:[%s221 + $0xe1] sm:$0xff]
      %v434 = vld [vmem:[%s221 + $0xf1] sm:$0xff]
      %v435 = vld [vmem:[%s221 + $0xf9] sm:$0xff]
      %v436 = vld [vmem:[%s221 + $0x109] sm:$0xff]
      %v437 = vld [vmem:[%s221 + $0x111] sm:$0xff]
      %v438 = vld [vmem:[%s221 + $0x121] sm:$0xff]
      %v439 = vld [vmem:[%s221 + $0x129] sm:$0xff]
      %v440 = vld [vmem:[%s221 + $0x139] sm:$0xff]
      %v441 = vld [vmem:[%s221 + $0x141] sm:$0xff]
      %v442 = vld [vmem:[%s221 + $0x151] sm:$0xff]
      %v443 = vld [vmem:[%s221 + $0x159] sm:$0xff]
      %v444 = vld [vmem:[%s221 + $0x169] sm:$0xff]
      %v445 = vld [vmem:[%s221 + $0x171] sm:$0xff]
      %v446 = vld [vmem:[%s221 + $0x2] sm:$0xff]
      %v447 = vld [vmem:[%s221 + $0xa] sm:$0xff]
      %v448 = vld [vmem:[%s221 + $0x1a] sm:$0xff]
      %v449 = vld [vmem:[%s221 + $0x22] sm:$0xff]
      %v450 = vld [vmem:[%s221 + $0x32] sm:$0xff]
      %v451 = vld [vmem:[%s221 + $0x3a] sm:$0xff]
      %v452 = vld [vmem:[%s221 + $0x4a] sm:$0xff]
      %v453 = vld [vmem:[%s221 + $0x52] sm:$0xff]
      %v454 = vld [vmem:[%s221 + $0x62] sm:$0xff]
      %v455 = vld [vmem:[%s221 + $0x6a] sm:$0xff]
      %v456 = vld [vmem:[%s221 + $0x7a] sm:$0xff]
      %v457 = vld [vmem:[%s221 + $0x82] sm:$0xff]
      %v458 = vld [vmem:[%s221 + $0x92] sm:$0xff]
      %v459 = vld [vmem:[%s221 + $0x9a] sm:$0xff]
      %v460 = vld [vmem:[%s221 + $0xaa] sm:$0xff]
      %v461 = vld [vmem:[%s221 + $0xb2] sm:$0xff]
      %v462 = vld [vmem:[%s221 + $0xc2] sm:$0xff]
      %v463 = vld [vmem:[%s221 + $0xca] sm:$0xff]
      %v464 = vld [vmem:[%s221 + $0xda] sm:$0xff]
      %v465 = vld [vmem:[%s221 + $0xe2] sm:$0xff]
      %v466 = vld [vmem:[%s221 + $0xf2] sm:$0xff]
      %v467 = vld [vmem:[%s221 + $0xfa] sm:$0xff]
      %v468 = vld [vmem:[%s221 + $0x10a] sm:$0xff]
      %v469 = vld [vmem:[%s221 + $0x112] sm:$0xff]
      %v470 = vld [vmem:[%s221 + $0x122] sm:$0xff]
      %v471 = vld [vmem:[%s221 + $0x12a] sm:$0xff]
      %v472 = vld [vmem:[%s221 + $0x13a] sm:$0xff]
      %v473 = vld [vmem:[%s221 + $0x142] sm:$0xff]
      %v474 = vld [vmem:[%s221 + $0x152] sm:$0xff]
      %v475 = vld [vmem:[%s221 + $0x15a] sm:$0xff]
      %v476 = vld [vmem:[%s221 + $0x16a] sm:$0xff]
      %v477 = vld [vmem:[%s221 + $0x172] sm:$0xff]
      %s478 = scalar_lea.vmem [#allocation2], 48
      %v479 = vld [vmem:[%s478] sm:$0xff]
      %v480 = vld [vmem:[%s478 + $0x8] sm:$0xff]
      %v481 = vld [vmem:[%s478 + $0x18] sm:$0xff]
      %v482 = vld [vmem:[%s478 + $0x20] sm:$0xff]
      %v483 = vld [vmem:[%s478 + $0x30] sm:$0xff]
      %v484 = vld [vmem:[%s478 + $0x38] sm:$0xff]
      %v485 = vld [vmem:[%s478 + $0x48] sm:$0xff]
      %v486 = vld [vmem:[%s478 + $0x50] sm:$0xff]
      %v487 = vld [vmem:[%s478 + $0x60] sm:$0xff]
      %v488 = vld [vmem:[%s478 + $0x68] sm:$0xff]
      %v489 = vld [vmem:[%s478 + $0x78] sm:$0xff]
      %v490 = vld [vmem:[%s478 + $0x80] sm:$0xff]
      %v491 = vld [vmem:[%s478 + $0x90] sm:$0xff]
      %v492 = vld [vmem:[%s478 + $0x98] sm:$0xff]
      %v493 = vld [vmem:[%s478 + $0xa8] sm:$0xff]
      %v494 = vld [vmem:[%s478 + $0xb0] sm:$0xff]
      %v495 = vld [vmem:[%s478 + $0xc0] sm:$0xff]
      %v496 = vld [vmem:[%s478 + $0xc8] sm:$0xff]
      %v497 = vld [vmem:[%s478 + $0xd8] sm:$0xff]
      %v498 = vld [vmem:[%s478 + $0xe0] sm:$0xff]
      %v499 = vld [vmem:[%s478 + $0xf0] sm:$0xff]
      %v500 = vld [vmem:[%s478 + $0xf8] sm:$0xff]
      %v501 = vld [vmem:[%s478 + $0x108] sm:$0xff]
      %v502 = vld [vmem:[%s478 + $0x110] sm:$0xff]
      %v503 = vld [vmem:[%s478 + $0x120] sm:$0xff]
      %v504 = vld [vmem:[%s478 + $0x128] sm:$0xff]
      %v505 = vld [vmem:[%s478 + $0x138] sm:$0xff]
      %v506 = vld [vmem:[%s478 + $0x140] sm:$0xff]
      %v507 = vld [vmem:[%s478 + $0x150] sm:$0xff]
      %v508 = vld [vmem:[%s478 + $0x158] sm:$0xff]
      %v509 = vld [vmem:[%s478 + $0x168] sm:$0xff]
      %v510 = vld [vmem:[%s478 + $0x170] sm:$0xff]
      %v511 = vld [vmem:[%s478 + $0x1] sm:$0xff]
      %v512 = vld [vmem:[%s478 + $0x9] sm:$0xff]
      %v513 = vld [vmem:[%s478 + $0x19] sm:$0xff]
      %v514 = vld [vmem:[%s478 + $0x21] sm:$0xff]
      %v515 = vld [vmem:[%s478 + $0x31] sm:$0xff]
      %v516 = vld [vmem:[%s478 + $0x39] sm:$0xff]
      %v517 = vld [vmem:[%s478 + $0x49] sm:$0xff]
      %v518 = vld [vmem:[%s478 + $0x51] sm:$0xff]
      %v519 = vld [vmem:[%s478 + $0x61] sm:$0xff]
      %v520 = vld [vmem:[%s478 + $0x69] sm:$0xff]
      %v521 = vld [vmem:[%s478 + $0x79] sm:$0xff]
      %v522 = vld [vmem:[%s478 + $0x81] sm:$0xff]
      %v523 = vld [vmem:[%s478 + $0x91] sm:$0xff]
      %v524 = vld [vmem:[%s478 + $0x99] sm:$0xff]
      %v525 = vld [vmem:[%s478 + $0xa9] sm:$0xff]
      %v526 = vld [vmem:[%s478 + $0xb1] sm:$0xff]
      %v527 = vld [vmem:[%s478 + $0xc1] sm:$0xff]
      %v528 = vld [vmem:[%s478 + $0xc9] sm:$0xff]
      %v529 = vld [vmem:[%s478 + $0xd9] sm:$0xff]
      %v530 = vld [vmem:[%s478 + $0xe1] sm:$0xff]
      %v531 = vld [vmem:[%s478 + $0xf1] sm:$0xff]
      %v532 = vld [vmem:[%s478 + $0xf9] sm:$0xff]
      %v533 = vld [vmem:[%s478 + $0x109] sm:$0xff]
      %v534 = vld [vmem:[%s478 + $0x111] sm:$0xff]
      %v535 = vld [vmem:[%s478 + $0x121] sm:$0xff]
      %v536 = vld [vmem:[%s478 + $0x129] sm:$0xff]
      %v537 = vld [vmem:[%s478 + $0x139] sm:$0xff]
      %v538 = vld [vmem:[%s478 + $0x141] sm:$0xff]
      %v539 = vld [vmem:[%s478 + $0x151] sm:$0xff]
      %v540 = vld [vmem:[%s478 + $0x159] sm:$0xff]
      %v541 = vld [vmem:[%s478 + $0x169] sm:$0xff]
      %v542 = vld [vmem:[%s478 + $0x171] sm:$0xff]
      %v543 = vld [vmem:[%s478 + $0x2] sm:$0xff]
      %v544 = vld [vmem:[%s478 + $0xa] sm:$0xff]
      %v545 = vld [vmem:[%s478 + $0x1a] sm:$0xff]
      %v546 = vld [vmem:[%s478 + $0x22] sm:$0xff]
      %v547 = vld [vmem:[%s478 + $0x32] sm:$0xff]
      %v548 = vld [vmem:[%s478 + $0x3a] sm:$0xff]
      %v549 = vld [vmem:[%s478 + $0x4a] sm:$0xff]
      %v550 = vld [vmem:[%s478 + $0x52] sm:$0xff]
      %v551 = vld [vmem:[%s478 + $0x62] sm:$0xff]
      %v552 = vld [vmem:[%s478 + $0x6a] sm:$0xff]
      %v553 = vld [vmem:[%s478 + $0x7a] sm:$0xff]
      %v554 = vld [vmem:[%s478 + $0x82] sm:$0xff]
      %v555 = vld [vmem:[%s478 + $0x92] sm:$0xff]
      %v556 = vld [vmem:[%s478 + $0x9a] sm:$0xff]
      %v557 = vld [vmem:[%s478 + $0xaa] sm:$0xff]
      %v558 = vld [vmem:[%s478 + $0xb2] sm:$0xff]
      %v559 = vld [vmem:[%s478 + $0xc2] sm:$0xff]
      %v560 = vld [vmem:[%s478 + $0xca] sm:$0xff]
      %v561 = vld [vmem:[%s478 + $0xda] sm:$0xff]
      %v562 = vld [vmem:[%s478 + $0xe2] sm:$0xff]
      %v563 = vld [vmem:[%s478 + $0xf2] sm:$0xff]
      %v564 = vld [vmem:[%s478 + $0xfa] sm:$0xff]
      %v565 = vld [vmem:[%s478 + $0x10a] sm:$0xff]
      %v566 = vld [vmem:[%s478 + $0x112] sm:$0xff]
      %v567 = vld [vmem:[%s478 + $0x122] sm:$0xff]
      %v568 = vld [vmem:[%s478 + $0x12a] sm:$0xff]
      %v569 = vld [vmem:[%s478 + $0x13a] sm:$0xff]
      %v570 = vld [vmem:[%s478 + $0x142] sm:$0xff]
      %v571 = vld [vmem:[%s478 + $0x152] sm:$0xff]
      %v572 = vld [vmem:[%s478 + $0x15a] sm:$0xff]
      %v573 = vld [vmem:[%s478 + $0x16a] sm:$0xff]
      %v574 = vld [vmem:[%s478 + $0x172] sm:$0xff]
      %v575 = vld [vmem:[%s1] sm:$0xff]
      %v576 = vld [vmem:[%s1 + $0x8] sm:$0xff]
      %v577 = vld [vmem:[%s1 + $0x10] sm:$0xff]
      %v578 = vld [vmem:[%s1 + $0x18] sm:$0xff]
      %v579 = vld [vmem:[%s1 + $0x20] sm:$0xff]
      %v580 = vld [vmem:[%s1 + $0x28] sm:$0xff]
      %v581 = vld [vmem:[%s1 + $0x30] sm:$0xff]
      %v582 = vld [vmem:[%s1 + $0x38] sm:$0xff]
      %v583 = vld [vmem:[%s1 + $0x40] sm:$0xff]
      %v584 = vld [vmem:[%s1 + $0x48] sm:$0xff]
      %v585 = vld [vmem:[%s1 + $0x50] sm:$0xff]
      %v586 = vld [vmem:[%s1 + $0x58] sm:$0xff]
      %v587 = vld [vmem:[%s1 + $0x60] sm:$0xff]
      %v588 = vld [vmem:[%s1 + $0x68] sm:$0xff]
      %v589 = vld [vmem:[%s1 + $0x70] sm:$0xff]
      %v590 = vld [vmem:[%s1 + $0x78] sm:$0xff]
      %v591 = vld [vmem:[%s1 + $0x80] sm:$0xff]
      %v592 = vld [vmem:[%s1 + $0x88] sm:$0xff]
      %v593 = vld [vmem:[%s1 + $0x90] sm:$0xff]
      %v594 = vld [vmem:[%s1 + $0x98] sm:$0xff]
      %v595 = vld [vmem:[%s1 + $0xa0] sm:$0xff]
      %v596 = vld [vmem:[%s1 + $0xa8] sm:$0xff]
      %v597 = vld [vmem:[%s1 + $0xb0] sm:$0xff]
      %v598 = vld [vmem:[%s1 + $0xb8] sm:$0xff]
      %v599 = vld [vmem:[%s1 + $0xc0] sm:$0xff]
      %v600 = vld [vmem:[%s1 + $0xc8] sm:$0xff]
      %v601 = vld [vmem:[%s1 + $0xd0] sm:$0xff]
      %v602 = vld [vmem:[%s1 + $0xd8] sm:$0xff]
      %v603 = vld [vmem:[%s1 + $0xe0] sm:$0xff]
      %v604 = vld [vmem:[%s1 + $0xe8] sm:$0xff]
      %v605 = vld [vmem:[%s1 + $0xf0] sm:$0xff]
      %v606 = vld [vmem:[%s1 + $0xf8] sm:$0xff]
      %v607 = vld [vmem:[%s1 + $0x100] sm:$0xff]
      %v608 = vld [vmem:[%s1 + $0x108] sm:$0xff]
      %v609 = vld [vmem:[%s1 + $0x110] sm:$0xff]
      %v610 = vld [vmem:[%s1 + $0x118] sm:$0xff]
      %v611 = vld [vmem:[%s1 + $0x120] sm:$0xff]
      %v612 = vld [vmem:[%s1 + $0x128] sm:$0xff]
      %v613 = vld [vmem:[%s1 + $0x130] sm:$0xff]
      %v614 = vld [vmem:[%s1 + $0x138] sm:$0xff]
      %v615 = vld [vmem:[%s1 + $0x140] sm:$0xff]
      %v616 = vld [vmem:[%s1 + $0x148] sm:$0xff]
      %v617 = vld [vmem:[%s1 + $0x150] sm:$0xff]
      %v618 = vld [vmem:[%s1 + $0x158] sm:$0xff]
      %v619 = vld [vmem:[%s1 + $0x160] sm:$0xff]
      %v620 = vld [vmem:[%s1 + $0x168] sm:$0xff]
      %v621 = vld [vmem:[%s1 + $0x170] sm:$0xff]
      %v622 = vld [vmem:[%s1 + $0x178] sm:$0xff]
      %v623 = vld [vmem:[%s1 + $0x180] sm:$0xff]
      %v624 = vld [vmem:[%s1 + $0x188] sm:$0xff]
      %v625 = vld [vmem:[%s1 + $0x190] sm:$0xff]
      %v626 = vld [vmem:[%s1 + $0x198] sm:$0xff]
      %v627 = vld [vmem:[%s1 + $0x1a0] sm:$0xff]
      %v628 = vld [vmem:[%s1 + $0x1a8] sm:$0xff]
      %v629 = vld [vmem:[%s1 + $0x1b0] sm:$0xff]
      %v630 = vld [vmem:[%s1 + $0x1b8] sm:$0xff]
      %v631 = vld [vmem:[%s1 + $0x1c0] sm:$0xff]
      %v632 = vld [vmem:[%s1 + $0x1c8] sm:$0xff]
      %v633 = vld [vmem:[%s1 + $0x1d0] sm:$0xff]
      %v634 = vld [vmem:[%s1 + $0x1d8] sm:$0xff]
      %v635 = vld [vmem:[%s1 + $0x1e0] sm:$0xff]
      %v636 = vld [vmem:[%s1 + $0x1e8] sm:$0xff]
      %v637 = vld [vmem:[%s1 + $0x1f0] sm:$0xff]
      %v638 = vld [vmem:[%s1 + $0x1f8] sm:$0xff]
      %v639 = vld [vmem:[%s1 + $0x200] sm:$0xff]
      %v640 = vld [vmem:[%s1 + $0x208] sm:$0xff]
      %v641 = vld [vmem:[%s1 + $0x210] sm:$0xff]
      %v642 = vld [vmem:[%s1 + $0x218] sm:$0xff]
      %v643 = vld [vmem:[%s1 + $0x220] sm:$0xff]
      %v644 = vld [vmem:[%s1 + $0x228] sm:$0xff]
      %v645 = vld [vmem:[%s1 + $0x230] sm:$0xff]
      %v646 = vld [vmem:[%s1 + $0x238] sm:$0xff]
      %v647 = vld [vmem:[%s1 + $0x240] sm:$0xff]
      %v648 = vld [vmem:[%s1 + $0x248] sm:$0xff]
      %v649 = vld [vmem:[%s1 + $0x250] sm:$0xff]
      %v650 = vld [vmem:[%s1 + $0x258] sm:$0xff]
      %v651 = vld [vmem:[%s1 + $0x260] sm:$0xff]
      %v652 = vld [vmem:[%s1 + $0x268] sm:$0xff]
      %v653 = vld [vmem:[%s1 + $0x270] sm:$0xff]
      %v654 = vld [vmem:[%s1 + $0x278] sm:$0xff]
      %v655 = vld [vmem:[%s1 + $0x280] sm:$0xff]
      %v656 = vld [vmem:[%s1 + $0x288] sm:$0xff]
      %v657 = vld [vmem:[%s1 + $0x290] sm:$0xff]
      %v658 = vld [vmem:[%s1 + $0x298] sm:$0xff]
      %v659 = vld [vmem:[%s1 + $0x2a0] sm:$0xff]
      %v660 = vld [vmem:[%s1 + $0x2a8] sm:$0xff]
      %v661 = vld [vmem:[%s1 + $0x2b0] sm:$0xff]
      %v662 = vld [vmem:[%s1 + $0x2b8] sm:$0xff]
      %v663 = vld [vmem:[%s1 + $0x2c0] sm:$0xff]
      %v664 = vld [vmem:[%s1 + $0x2c8] sm:$0xff]
      %v665 = vld [vmem:[%s1 + $0x2d0] sm:$0xff]
      %v666 = vld [vmem:[%s1 + $0x2d8] sm:$0xff]
      %v667 = vld [vmem:[%s1 + $0x2e0] sm:$0xff]
      %v668 = vld [vmem:[%s1 + $0x2e8] sm:$0xff]
      %v669 = vld [vmem:[%s1 + $0x2f0] sm:$0xff]
      %v670 = vld [vmem:[%s1 + $0x2f8] sm:$0xff]
      %v671 = vld [vmem:[%s1 + $0x300] sm:$0xff]
      %v672 = vld [vmem:[%s1 + $0x308] sm:$0xff]
      %v673 = vld [vmem:[%s1 + $0x310] sm:$0xff]
      %v674 = vld [vmem:[%s1 + $0x318] sm:$0xff]
      %v675 = vld [vmem:[%s1 + $0x320] sm:$0xff]
      %v676 = vld [vmem:[%s1 + $0x328] sm:$0xff]
      %v677 = vld [vmem:[%s1 + $0x330] sm:$0xff]
      %v678 = vld [vmem:[%s1 + $0x338] sm:$0xff]
      %v679 = vld [vmem:[%s1 + $0x340] sm:$0xff]
      %v680 = vld [vmem:[%s1 + $0x348] sm:$0xff]
      %v681 = vld [vmem:[%s1 + $0x350] sm:$0xff]
      %v682 = vld [vmem:[%s1 + $0x358] sm:$0xff]
      %v683 = vld [vmem:[%s1 + $0x360] sm:$0xff]
      %v684 = vld [vmem:[%s1 + $0x368] sm:$0xff]
      %v685 = vld [vmem:[%s1 + $0x370] sm:$0xff]
      %v686 = vld [vmem:[%s1 + $0x378] sm:$0xff]
      %v687 = vld [vmem:[%s1 + $0x380] sm:$0xff]
      %v688 = vld [vmem:[%s1 + $0x388] sm:$0xff]
      %v689 = vld [vmem:[%s1 + $0x390] sm:$0xff]
      %v690 = vld [vmem:[%s1 + $0x398] sm:$0xff]
      %v691 = vld [vmem:[%s1 + $0x3a0] sm:$0xff]
      %v692 = vld [vmem:[%s1 + $0x3a8] sm:$0xff]
      %v693 = vld [vmem:[%s1 + $0x3b0] sm:$0xff]
      %v694 = vld [vmem:[%s1 + $0x3b8] sm:$0xff]
      %v695 = vld [vmem:[%s1 + $0x3c0] sm:$0xff]
      %v696 = vld [vmem:[%s1 + $0x3c8] sm:$0xff]
      %v697 = vld [vmem:[%s1 + $0x3d0] sm:$0xff]
      %v698 = vld [vmem:[%s1 + $0x3d8] sm:$0xff]
      %v699 = vld [vmem:[%s1 + $0x3e0] sm:$0xff]
      %v700 = vld [vmem:[%s1 + $0x3e8] sm:$0xff]
      %v701 = vld [vmem:[%s1 + $0x3f0] sm:$0xff]
      %v702 = vld [vmem:[%s1 + $0x3f8] sm:$0xff]
      %v703 = vld [vmem:[%s1 + $0x400] sm:$0xff]
      %v704 = vld [vmem:[%s1 + $0x408] sm:$0xff]
      %v705 = vld [vmem:[%s1 + $0x410] sm:$0xff]
      %v706 = vld [vmem:[%s1 + $0x418] sm:$0xff]
      %v707 = vld [vmem:[%s1 + $0x420] sm:$0xff]
      %v708 = vld [vmem:[%s1 + $0x428] sm:$0xff]
      %v709 = vld [vmem:[%s1 + $0x430] sm:$0xff]
      %v710 = vld [vmem:[%s1 + $0x438] sm:$0xff]
      %v711 = vld [vmem:[%s1 + $0x440] sm:$0xff]
      %v712 = vld [vmem:[%s1 + $0x448] sm:$0xff]
      %v713 = vld [vmem:[%s1 + $0x450] sm:$0xff]
      %v714 = vld [vmem:[%s1 + $0x458] sm:$0xff]
      %v715 = vld [vmem:[%s1 + $0x460] sm:$0xff]
      %v716 = vld [vmem:[%s1 + $0x468] sm:$0xff]
      %v717 = vld [vmem:[%s1 + $0x470] sm:$0xff]
      %v718 = vld [vmem:[%s1 + $0x478] sm:$0xff]
      %719 = vmatprep.subr.mxu0 0.0
      %720 = vmatpush1.msra.mxu0 %v575
      %721 = vmatprep.subr.mxu0 0.0
      %722 = vmatpush1.msra.mxu0 %v576
      %723 = vmatprep.subr.mxu0 0.0
      %724 = vmatpush1.msra.mxu0 %v577
      %725 = vmatprep.subr.mxu0 0.0
      %726 = vmatpush1.msra.mxu0 %v578
      %727 = vmatprep.subr.mxu0 0.0
      %728 = vmatpush1.msra.mxu0 %v579
      %729 = vmatprep.subr.mxu0 0.0
      %730 = vmatpush1.msra.mxu0 %v580
      %731 = vmatprep.subr.mxu0 0.0
      %732 = vmatpush1.msra.mxu0 %v581
      %733 = vmatprep.subr.mxu0 0.0
      %734 = vmatpush1.msra.mxu0 %v582
      %735 = vmatprep.subr.mxu0 0.0
      %736 = vmatpush1.msra.mxu0 %v583
      %737 = vmatprep.subr.mxu0 0.0
      %738 = vmatpush1.msra.mxu0 %v584
      %739 = vmatprep.subr.mxu0 0.0
      %740 = vmatpush1.msra.mxu0 %v585
      %741 = vmatprep.subr.mxu0 0.0
      %742 = vmatpush1.msra.mxu0 %v586
      %743 = vmatprep.subr.mxu0 0.0
      %744 = vmatpush1.msra.mxu0 %v587
      %745 = vmatprep.subr.mxu0 0.0
      %746 = vmatpush1.msra.mxu0 %v588
      %747 = vmatprep.subr.mxu0 0.0
      %748 = vmatpush1.msra.mxu0 %v589
      %749 = vmatprep.subr.mxu0 0.0
      %750 = vmatpush1.msra.mxu0 %v590
      %751 = vmatprep.subr.mxu0 0.0
      %752 = vmatpush1.msra.mxu0 %v591
      %753 = vmatprep.subr.mxu0 0.0
      %754 = vmatpush1.msra.mxu0 %v592
      %755 = vmatprep.subr.mxu0 0.0
      %756 = vmatpush1.msra.mxu0 %v593
      %757 = vmatprep.subr.mxu0 0.0
      %758 = vmatpush1.msra.mxu0 %v594
      %759 = vmatprep.subr.mxu0 0.0
      %760 = vmatpush1.msra.mxu0 %v595
      %761 = vmatprep.subr.mxu0 0.0
      %762 = vmatpush1.msra.mxu0 %v596
      %763 = vmatprep.subr.mxu0 0.0
      %764 = vmatpush1.msra.mxu0 %v597
      %765 = vmatprep.subr.mxu0 0.0
      %766 = vmatpush1.msra.mxu0 %v598
      %767 = vmatprep.subr.mxu0 0.0
      %768 = vmatpush1.msra.mxu0 %v599
      %769 = vmatprep.subr.mxu0 0.0
      %770 = vmatpush1.msra.mxu0 %v600
      %771 = vmatprep.subr.mxu0 0.0
      %772 = vmatpush1.msra.mxu0 %v601
      %773 = vmatprep.subr.mxu0 0.0
      %774 = vmatpush1.msra.mxu0 %v602
      %775 = vmatprep.subr.mxu0 0.0
      %776 = vmatpush1.msra.mxu0 %v603
      %777 = vmatprep.subr.mxu0 0.0
      %778 = vmatpush1.msra.mxu0 %v604
      %779 = vmatprep.subr.mxu0 0.0
      %780 = vmatpush1.msra.mxu0 %v605
      %781 = vmatprep.subr.mxu0 0.0
      %782 = vmatpush1.msra.mxu0 %v606
      %783 = vmatprep.mubr.f32.mxu0 %v318
      %784 = vmatmul.mubr.f32.gmra.mrb[0].mxu0 %v286
      %v785 = vpop.f32.mrb[0].mxu0
      %v786 = vadd.f32 0.0, %v785
      %v787 = vpop.f32.mrb[0].mxu0
      %788 = vmatprep.mubr.f32.mxu0 %v319
      %789 = vmatmul.mubr.f32.gmra.mrb[0].mxu0 %v287
      %v790 = vpop.f32.mrb[0].mxu0
      %v791 = vadd.f32 0.0, %v790
      %v792 = vpop.f32.mrb[0].mxu0
      %793 = vmatprep.mubr.f32.mxu0 %v320
      %794 = vmatmul.mubr.f32.gmra.mrb[0].mxu0 %v288
      %v795 = vpop.f32.mrb[0].mxu0
      %v796 = vadd.f32 0.0, %v795
      %v797 = vpop.f32.mrb[0].mxu0
      %798 = vmatprep.mubr.f32.mxu0 %v321
      %799 = vmatmul.mubr.f32.gmra.mrb[0].mxu0 %v289
      %v800 = vpop.f32.mrb[0].mxu0
      %v801 = vadd.f32 0.0, %v800
      %v802 = vpop.f32.mrb[0].mxu0
      %803 = vmatprep.mubr.f32.mxu0 %v322
      %804 = vmatmul.mubr.f32.gmra.mrb[0].mxu0 %v290
      %v805 = vpop.f32.mrb[0].mxu0
      %v806 = vadd.f32 0.0, %v805
      %v807 = vpop.f32.mrb[0].mxu0
      %808 = vmatprep.mubr.f32.mxu0 %v323
      %809 = vmatmul.mubr.f32.gmra.mrb[0].mxu0 %v291
      %v810 = vpop.f32.mrb[0].mxu0
      %v811 = vadd.f32 0.0, %v810
      %v812 = vpop.f32.mrb[0].mxu0
      %813 = vmatprep.mubr.f32.mxu0 %v324
      %814 = vmatmul.mubr.f32.gmra.mrb[0].mxu0 %v292
      %v815 = vpop.f32.mrb[0].mxu0
      %v816 = vadd.f32 0.0, %v815
      %v817 = vpop.f32.mrb[0].mxu0
      %818 = vmatprep.mubr.f32.mxu0 %v325
      %819 = vmatmul.mubr.f32.gmra.mrb[0].mxu0 %v293
      %v820 = vpop.f32.mrb[0].mxu0
      %v821 = vadd.f32 0.0, %v820
      %v822 = vpop.f32.mrb[0].mxu0
      %823 = vmatprep.mubr.f32.mxu0 %v326
      %824 = vmatmul.mubr.f32.gmra.mrb[0].mxu0 %v294
      %v825 = vpop.f32.mrb[0].mxu0
      %v826 = vadd.f32 0.0, %v825
      %v827 = vpop.f32.mrb[0].mxu0
      %828 = vmatprep.mubr.f32.mxu0 %v327
      %829 = vmatmul.mubr.f32.gmra.mrb[0].mxu0 %v295
      %v830 = vpop.f32.mrb[0].mxu0
      %v831 = vadd.f32 0.0, %v830
      %v832 = vpop.f32.mrb[0].mxu0
      %833 = vmatprep.mubr.f32.mxu0 %v328
      %834 = vmatmul.mubr.f32.gmra.mrb[0].mxu0 %v296
      %v835 = vpop.f32.mrb[0].mxu0
      %v836 = vadd.f32 0.0, %v835
      %v837 = vpop.f32.mrb[0].mxu0
      %838 = vmatprep.mubr.f32.mxu0 %v329
      %839 = vmatmul.mubr.f32.gmra.mrb[0].mxu0 %v297
      %v840 = vpop.f32.mrb[0].mxu0
      %v841 = vadd.f32 0.0, %v840
      %v842 = vpop.f32.mrb[0].mxu0
      %843 = vmatprep.mubr.f32.mxu0 %v330
      %844 = vmatmul.mubr.f32.gmra.mrb[0].mxu0 %v298
      %v845 = vpop.f32.mrb[0].mxu0
      %v846 = vadd.f32 0.0, %v845
      %v847 = vpop.f32.mrb[0].mxu0
      %848 = vmatprep.mubr.f32.mxu0 %v331
      %849 = vmatmul.mubr.f32.gmra.mrb[0].mxu0 %v299
      %v850 = vpop.f32.mrb[0].mxu0
      %v851 = vadd.f32 0.0, %v850
      %v852 = vpop.f32.mrb[0].mxu0
      %853 = vmatprep.mubr.f32.mxu0 %v332
      %854 = vmatmul.mubr.f32.gmra.mrb[0].mxu0 %v300
      %v855 = vpop.f32.mrb[0].mxu0
      %v856 = vadd.f32 0.0, %v855
      %v857 = vpop.f32.mrb[0].mxu0
      %858 = vmatprep.mubr.f32.mxu0 %v333
      %859 = vmatmul.mubr.f32.gmra.mrb[0].mxu0 %v301
      %v860 = vpop.f32.mrb[0].mxu0
      %v861 = vadd.f32 0.0, %v860
      %v862 = vpop.f32.mrb[0].mxu0
      %863 = vmatprep.mubr.f32.mxu0 %v334
      %864 = vmatmul.mubr.f32.gmra.mrb[0].mxu0 %v302
      %v865 = vpop.f32.mrb[0].mxu0
      %v866 = vadd.f32 0.0, %v865
      %v867 = vpop.f32.mrb[0].mxu0
      %868 = vmatprep.mubr.f32.mxu0 %v335
      %869 = vmatmul.mubr.f32.gmra.mrb[0].mxu0 %v303
      %v870 = vpop.f32.mrb[0].mxu0
      %v871 = vadd.f32 0.0, %v870
      %v872 = vpop.f32.mrb[0].mxu0
      %873 = vmatprep.mubr.f32.mxu0 %v336
      %874 = vmatmul.mubr.f32.gmra.mrb[0].mxu0 %v304
      %v875 = vpop.f32.mrb[0].mxu0
      %v876 = vadd.f32 0.0, %v875
      %v877 = vpop.f32.mrb[0].mxu0
      %878 = vmatprep.mubr.f32.mxu0 %v337
      %879 = vmatmul.mubr.f32.gmra.mrb[0].mxu0 %v305
      %v880 = vpop.f32.mrb[0].mxu0
      %v881 = vadd.f32 0.0, %v880
      %v882 = vpop.f32.mrb[0].mxu0
      %883 = vmatprep.mubr.f32.mxu0 %v338
      %884 = vmatmul.mubr.f32.gmra.mrb[0].mxu0 %v306
      %v885 = vpop.f32.mrb[0].mxu0
      %v886 = vadd.f32 0.0, %v885
      %v887 = vpop.f32.mrb[0].mxu0
      %888 = vmatprep.mubr.f32.mxu0 %v339
      %889 = vmatmul.mubr.f32.gmra.mrb[0].mxu0 %v307
      %v890 = vpop.f32.mrb[0].mxu0
      %v891 = vadd.f32 0.0, %v890
      %v892 = vpop.f32.mrb[0].mxu0
      %893 = vmatprep.mubr.f32.mxu0 %v340
      %894 = vmatmul.mubr.f32.gmra.mrb[0].mxu0 %v308
      %v895 = vpop.f32.mrb[0].mxu0
      %v896 = vadd.f32 0.0, %v895
      %v897 = vpop.f32.mrb[0].mxu0
      %898 = vmatprep.mubr.f32.mxu0 %v341
      %899 = vmatmul.mubr.f32.gmra.mrb[0].mxu0 %v309
      %v900 = vpop.f32.mrb[0].mxu0
      %v901 = vadd.f32 0.0, %v900
      %v902 = vpop.f32.mrb[0].mxu0
      %903 = vmatprep.mubr.f32.mxu0 %v342
      %904 = vmatmul.mubr.f32.gmra.mrb[0].mxu0 %v310
      %v905 = vpop.f32.mrb[0].mxu0
      %v906 = vadd.f32 0.0, %v905
      %v907 = vpop.f32.mrb[0].mxu0
      %908 = vmatprep.mubr.f32.mxu0 %v343
      %909 = vmatmul.mubr.f32.gmra.mrb[0].mxu0 %v311
      %v910 = vpop.f32.mrb[0].mxu0
      %v911 = vadd.f32 0.0, %v910
      %v912 = vpop.f32.mrb[0].mxu0
      %913 = vmatprep.mubr.f32.mxu0 %v344
      %914 = vmatmul.mubr.f32.gmra.mrb[0].mxu0 %v312
      %v915 = vpop.f32.mrb[0].mxu0
      %v916 = vadd.f32 0.0, %v915
      %v917 = vpop.f32.mrb[0].mxu0
      %918 = vmatprep.mubr.f32.mxu0 %v345
      %919 = vmatmul.mubr.f32.gmra.mrb[0].mxu0 %v313
      %v920 = vpop.f32.mrb[0].mxu0
      %v921 = vadd.f32 0.0, %v920
      %v922 = vpop.f32.mrb[0].mxu0
      %923 = vmatprep.mubr.f32.mxu0 %v346
      %924 = vmatmul.mubr.f32.gmra.mrb[0].mxu0 %v314
      %v925 = vpop.f32.mrb[0].mxu0
      %v926 = vadd.f32 0.0, %v925
      %v927 = vpop.f32.mrb[0].mxu0
      %928 = vmatprep.mubr.f32.mxu0 %v347
      %929 = vmatmul.mubr.f32.gmra.mrb[0].mxu0 %v315
      %v930 = vpop.f32.mrb[0].mxu0
      %v931 = vadd.f32 0.0, %v930
      %v932 = vpop.f32.mrb[0].mxu0
      %933 = vmatprep.mubr.f32.mxu0 %v348
      %934 = vmatmul.mubr.f32.gmra.mrb[0].mxu0 %v316
      %v935 = vpop.f32.mrb[0].mxu0
      %v936 = vadd.f32 0.0, %v935
      %v937 = vpop.f32.mrb[0].mxu0
      %938 = vmatprep.mubr.f32.mxu0 %v349
      %939 = vmatmul.mubr.f32.gmra.mrb[0].mxu0 %v317
      %v940 = vpop.f32.mrb[0].mxu0
      %v941 = vadd.f32 0.0, %v940
      %v942 = vpop.f32.mrb[0].mxu0
      %943 = vdwg.mxu0
      %944 = vmatprep.subr.mxu0 0.0
      %945 = vmatpush1.msra.mxu0 %v607
      %946 = vmatprep.subr.mxu0 0.0
      %947 = vmatpush1.msra.mxu0 %v608
      %948 = vmatprep.subr.mxu0 0.0
      %949 = vmatpush1.msra.mxu0 %v609
      %950 = vmatprep.subr.mxu0 0.0
      %951 = vmatpush1.msra.mxu0 %v610
      %952 = vmatprep.subr.mxu0 0.0
      %953 = vmatpush1.msra.mxu0 %v611
      %954 = vmatprep.subr.mxu0 0.0
      %955 = vmatpush1.msra.mxu0 %v612
      %956 = vmatprep.subr.mxu0 0.0
      %957 = vmatpush1.msra.mxu0 %v613
      %958 = vmatprep.subr.mxu0 0.0
      %959 = vmatpush1.msra.mxu0 %v614
      %960 = vmatprep.subr.mxu0 0.0
      %961 = vmatpush1.msra.mxu0 %v615
      %962 = vmatprep.subr.mxu0 0.0
      %963 = vmatpush1.msra.mxu0 %v616
      %964 = vmatprep.subr.mxu0 0.0
      %965 = vmatpush1.msra.mxu0 %v617
      %966 = vmatprep.subr.mxu0 0.0
      %967 = vmatpush1.msra.mxu0 %v618
      %968 = vmatprep.subr.mxu0 0.0
      %969 = vmatpush1.msra.mxu0 %v619
      %970 = vmatprep.subr.mxu0 0.0
      %971 = vmatpush1.msra.mxu0 %v620
      %972 = vmatprep.subr.mxu0 0.0
      %973 = vmatpush1.msra.mxu0 %v621
      %974 = vmatprep.subr.mxu0 0.0
      %975 = vmatpush1.msra.mxu0 %v622
      %976 = vmatprep.subr.mxu0 0.0
      %977 = vmatpush1.msra.mxu0 %v623
      %978 = vmatprep.subr.mxu0 0.0
      %979 = vmatpush1.msra.mxu0 %v624
      %980 = vmatprep.subr.mxu0 0.0
      %981 = vmatpush1.msra.mxu0 %v625
      %982 = vmatprep.subr.mxu0 0.0
      %983 = vmatpush1.msra.mxu0 %v626
      %984 = vmatprep.subr.mxu0 0.0
      %985 = vmatpush1.msra.mxu0 %v627
      %986 = vmatprep.subr.mxu0 0.0
      %987 = vmatpush1.msra.mxu0 %v628
      %988 = vmatprep.subr.mxu0 0.0
      %989 = vmatpush1.msra.mxu0 %v629
      %990 = vmatprep.subr.mxu0 0.0
      %991 = vmatpush1.msra.mxu0 %v630
      %992 = vmatprep.subr.mxu0 0.0
      %993 = vmatpush1.msra.mxu0 %v631
      %994 = vmatprep.subr.mxu0 0.0
      %995 = vmatpush1.msra.mxu0 %v632
      %996 = vmatprep.subr.mxu0 0.0
      %997 = vmatpush1.msra.mxu0 %v633
      %998 = vmatprep.subr.mxu0 0.0
      %999 = vmatpush1.msra.mxu0 %v634
      %1000 = vmatprep.subr.mxu0 0.0
      %1001 = vmatpush1.msra.mxu0 %v635
      %1002 = vmatprep.subr.mxu0 0.0
      %1003 = vmatpush1.msra.mxu0 %v636
      %1004 = vmatprep.subr.mxu0 0.0
      %1005 = vmatpush1.msra.mxu0 %v637
      %1006 = vmatprep.subr.mxu0 0.0
      %1007 = vmatpush1.msra.mxu0 %v638
      %1008 = vmatprep.mubr.f32.mxu0 %v382
      %1009 = vmatmul.mubr.f32.gmra.mrb[0].mxu0 %v350
      %v1010 = vpop.f32.mrb[0].mxu0
      %v1011 = vadd.f32 %v786, %v1010
      %v1012 = vpop.f32.mrb[0].mxu0
      %1013 = vmatprep.mubr.f32.mxu0 %v383
      %1014 = vmatmul.mubr.f32.gmra.mrb[0].mxu0 %v351
      %v1015 = vpop.f32.mrb[0].mxu0
      %v1016 = vadd.f32 %v791, %v1015
      %v1017 = vpop.f32.mrb[0].mxu0
      %1018 = vmatprep.mubr.f32.mxu0 %v384
      %1019 = vmatmul.mubr.f32.gmra.mrb[0].mxu0 %v352
      %v1020 = vpop.f32.mrb[0].mxu0
      %v1021 = vadd.f32 %v796, %v1020
      %v1022 = vpop.f32.mrb[0].mxu0
      %1023 = vmatprep.mubr.f32.mxu0 %v385
      %1024 = vmatmul.mubr.f32.gmra.mrb[0].mxu0 %v353
      %v1025 = vpop.f32.mrb[0].mxu0
      %v1026 = vadd.f32 %v801, %v1025
      %v1027 = vpop.f32.mrb[0].mxu0
      %1028 = vmatprep.mubr.f32.mxu0 %v386
      %1029 = vmatmul.mubr.f32.gmra.mrb[0].mxu0 %v354
      %v1030 = vpop.f32.mrb[0].mxu0
      %v1031 = vadd.f32 %v806, %v1030
      %v1032 = vpop.f32.mrb[0].mxu0
      %1033 = vmatprep.mubr.f32.mxu0 %v387
      %1034 = vmatmul.mubr.f32.gmra.mrb[0].mxu0 %v355
      %v1035 = vpop.f32.mrb[0].mxu0
      %v1036 = vadd.f32 %v811, %v1035
      %v1037 = vpop.f32.mrb[0].mxu0
      %1038 = vmatprep.mubr.f32.mxu0 %v388
      %1039 = vmatmul.mubr.f32.gmra.mrb[0].mxu0 %v356
      %v1040 = vpop.f32.mrb[0].mxu0
      %v1041 = vadd.f32 %v816, %v1040
      %v1042 = vpop.f32.mrb[0].mxu0
      %1043 = vmatprep.mubr.f32.mxu0 %v389
      %1044 = vmatmul.mubr.f32.gmra.mrb[0].mxu0 %v357
      %v1045 = vpop.f32.mrb[0].mxu0
      %v1046 = vadd.f32 %v821, %v1045
      %v1047 = vpop.f32.mrb[0].mxu0
      %1048 = vmatprep.mubr.f32.mxu0 %v390
      %1049 = vmatmul.mubr.f32.gmra.mrb[0].mxu0 %v358
      %v1050 = vpop.f32.mrb[0].mxu0
      %v1051 = vadd.f32 %v826, %v1050
      %v1052 = vpop.f32.mrb[0].mxu0
      %1053 = vmatprep.mubr.f32.mxu0 %v391
      %1054 = vmatmul.mubr.f32.gmra.mrb[0].mxu0 %v359
      %v1055 = vpop.f32.mrb[0].mxu0
      %v1056 = vadd.f32 %v831, %v1055
      %v1057 = vpop.f32.mrb[0].mxu0
      %1058 = vmatprep.mubr.f32.mxu0 %v392
      %1059 = vmatmul.mubr.f32.gmra.mrb[0].mxu0 %v360
      %v1060 = vpop.f32.mrb[0].mxu0
      %v1061 = vadd.f32 %v836, %v1060
      %v1062 = vpop.f32.mrb[0].mxu0
      %1063 = vmatprep.mubr.f32.mxu0 %v393
      %1064 = vmatmul.mubr.f32.gmra.mrb[0].mxu0 %v361
      %v1065 = vpop.f32.mrb[0].mxu0
      %v1066 = vadd.f32 %v841, %v1065
      %v1067 = vpop.f32.mrb[0].mxu0
      %1068 = vmatprep.mubr.f32.mxu0 %v394
      %1069 = vmatmul.mubr.f32.gmra.mrb[0].mxu0 %v362
      %v1070 = vpop.f32.mrb[0].mxu0
      %v1071 = vadd.f32 %v846, %v1070
      %v1072 = vpop.f32.mrb[0].mxu0
      %1073 = vmatprep.mubr.f32.mxu0 %v395
      %1074 = vmatmul.mubr.f32.gmra.mrb[0].mxu0 %v363
      %v1075 = vpop.f32.mrb[0].mxu0
      %v1076 = vadd.f32 %v851, %v1075
      %v1077 = vpop.f32.mrb[0].mxu0
      %1078 = vmatprep.mubr.f32.mxu0 %v396
      %1079 = vmatmul.mubr.f32.gmra.mrb[0].mxu0 %v364
      %v1080 = vpop.f32.mrb[0].mxu0
      %v1081 = vadd.f32 %v856, %v1080
      %v1082 = vpop.f32.mrb[0].mxu0
      %1083 = vmatprep.mubr.f32.mxu0 %v397
      %1084 = vmatmul.mubr.f32.gmra.mrb[0].mxu0 %v365
      %v1085 = vpop.f32.mrb[0].mxu0
      %v1086 = vadd.f32 %v861, %v1085
      %v1087 = vpop.f32.mrb[0].mxu0
      %1088 = vmatprep.mubr.f32.mxu0 %v398
      %1089 = vmatmul.mubr.f32.gmra.mrb[0].mxu0 %v366
      %v1090 = vpop.f32.mrb[0].mxu0
      %v1091 = vadd.f32 %v866, %v1090
      %v1092 = vpop.f32.mrb[0].mxu0
      %1093 = vmatprep.mubr.f32.mxu0 %v399
      %1094 = vmatmul.mubr.f32.gmra.mrb[0].mxu0 %v367
      %v1095 = vpop.f32.mrb[0].mxu0
      %v1096 = vadd.f32 %v871, %v1095
      %v1097 = vpop.f32.mrb[0].mxu0
      %1098 = vmatprep.mubr.f32.mxu0 %v400
      %1099 = vmatmul.mubr.f32.gmra.mrb[0].mxu0 %v368
      %v1100 = vpop.f32.mrb[0].mxu0
      %v1101 = vadd.f32 %v876, %v1100
      %v1102 = vpop.f32.mrb[0].mxu0
      %1103 = vmatprep.mubr.f32.mxu0 %v401
      %1104 = vmatmul.mubr.f32.gmra.mrb[0].mxu0 %v369
      %v1105 = vpop.f32.mrb[0].mxu0
      %v1106 = vadd.f32 %v881, %v1105
      %v1107 = vpop.f32.mrb[0].mxu0
      %1108 = vmatprep.mubr.f32.mxu0 %v402
      %1109 = vmatmul.mubr.f32.gmra.mrb[0].mxu0 %v370
      %v1110 = vpop.f32.mrb[0].mxu0
      %v1111 = vadd.f32 %v886, %v1110
      %v1112 = vpop.f32.mrb[0].mxu0
      %1113 = vmatprep.mubr.f32.mxu0 %v403
      %1114 = vmatmul.mubr.f32.gmra.mrb[0].mxu0 %v371
      %v1115 = vpop.f32.mrb[0].mxu0
      %v1116 = vadd.f32 %v891, %v1115
      %v1117 = vpop.f32.mrb[0].mxu0
      %1118 = vmatprep.mubr.f32.mxu0 %v404
      %1119 = vmatmul.mubr.f32.gmra.mrb[0].mxu0 %v372
      %v1120 = vpop.f32.mrb[0].mxu0
      %v1121 = vadd.f32 %v896, %v1120
      %v1122 = vpop.f32.mrb[0].mxu0
      %1123 = vmatprep.mubr.f32.mxu0 %v405
      %1124 = vmatmul.mubr.f32.gmra.mrb[0].mxu0 %v373
      %v1125 = vpop.f32.mrb[0].mxu0
      %v1126 = vadd.f32 %v901, %v1125
      %v1127 = vpop.f32.mrb[0].mxu0
      %1128 = vmatprep.mubr.f32.mxu0 %v406
      %1129 = vmatmul.mubr.f32.gmra.mrb[0].mxu0 %v374
      %v1130 = vpop.f32.mrb[0].mxu0
      %v1131 = vadd.f32 %v906, %v1130
      %v1132 = vpop.f32.mrb[0].mxu0
      %1133 = vmatprep.mubr.f32.mxu0 %v407
      %1134 = vmatmul.mubr.f32.gmra.mrb[0].mxu0 %v375
      %v1135 = vpop.f32.mrb[0].mxu0
      %v1136 = vadd.f32 %v911, %v1135
      %v1137 = vpop.f32.mrb[0].mxu0
      %1138 = vmatprep.mubr.f32.mxu0 %v408
      %1139 = vmatmul.mubr.f32.gmra.mrb[0].mxu0 %v376
      %v1140 = vpop.f32.mrb[0].mxu0
      %v1141 = vadd.f32 %v916, %v1140
      %v1142 = vpop.f32.mrb[0].mxu0
      %1143 = vmatprep.mubr.f32.mxu0 %v409
      %1144 = vmatmul.mubr.f32.gmra.mrb[0].mxu0 %v377
      %v1145 = vpop.f32.mrb[0].mxu0
      %v1146 = vadd.f32 %v921, %v1145
      %v1147 = vpop.f32.mrb[0].mxu0
      %1148 = vmatprep.mubr.f32.mxu0 %v410
      %1149 = vmatmul.mubr.f32.gmra.mrb[0].mxu0 %v378
      %v1150 = vpop.f32.mrb[0].mxu0
      %v1151 = vadd.f32 %v926, %v1150
      %v1152 = vpop.f32.mrb[0].mxu0
      %1153 = vmatprep.mubr.f32.mxu0 %v411
      %1154 = vmatmul.mubr.f32.gmra.mrb[0].mxu0 %v379
      %v1155 = vpop.f32.mrb[0].mxu0
      %v1156 = vadd.f32 %v931, %v1155
      %v1157 = vpop.f32.mrb[0].mxu0
      %1158 = vmatprep.mubr.f32.mxu0 %v412
      %1159 = vmatmul.mubr.f32.gmra.mrb[0].mxu0 %v380
      %v1160 = vpop.f32.mrb[0].mxu0
      %v1161 = vadd.f32 %v936, %v1160
      %v1162 = vpop.f32.mrb[0].mxu0
      %1163 = vmatprep.mubr.f32.mxu0 %v413
      %1164 = vmatmul.mubr.f32.gmra.mrb[0].mxu0 %v381
      %v1165 = vpop.f32.mrb[0].mxu0
      %v1166 = vadd.f32 %v941, %v1165
      %v1167 = vpop.f32.mrb[0].mxu0
      %1168 = vdwg.mxu0
      %1169 = vmatprep.subr.mxu0 0.0
      %1170 = vmatpush1.msra.mxu0 %v639
      %1171 = vmatprep.subr.mxu0 0.0
      %1172 = vmatpush1.msra.mxu0 %v640
      %1173 = vmatprep.subr.mxu0 0.0
      %1174 = vmatpush1.msra.mxu0 %v641
      %1175 = vmatprep.subr.mxu0 0.0
      %1176 = vmatpush1.msra.mxu0 %v642
      %1177 = vmatprep.subr.mxu0 0.0
      %1178 = vmatpush1.msra.mxu0 %v643
      %1179 = vmatprep.subr.mxu0 0.0
      %1180 = vmatpush1.msra.mxu0 %v644
      %1181 = vmatprep.subr.mxu0 0.0
      %1182 = vmatpush1.msra.mxu0 %v645
      %1183 = vmatprep.subr.mxu0 0.0
      %1184 = vmatpush1.msra.mxu0 %v646
      %1185 = vmatprep.subr.mxu0 0.0
      %1186 = vmatpush1.msra.mxu0 %v647
      %1187 = vmatprep.subr.mxu0 0.0
      %1188 = vmatpush1.msra.mxu0 %v648
      %1189 = vmatprep.subr.mxu0 0.0
      %1190 = vmatpush1.msra.mxu0 %v649
      %1191 = vmatprep.subr.mxu0 0.0
      %1192 = vmatpush1.msra.mxu0 %v650
      %1193 = vmatprep.subr.mxu0 0.0
      %1194 = vmatpush1.msra.mxu0 %v651
      %1195 = vmatprep.subr.mxu0 0.0
      %1196 = vmatpush1.msra.mxu0 %v652
      %1197 = vmatprep.subr.mxu0 0.0
      %1198 = vmatpush1.msra.mxu0 %v653
      %1199 = vmatprep.subr.mxu0 0.0
      %1200 = vmatpush1.msra.mxu0 %v654
      %1201 = vmatprep.subr.mxu0 0.0
      %1202 = vmatpush1.msra.mxu0 %v655
      %1203 = vmatprep.subr.mxu0 0.0
      %1204 = vmatpush1.msra.mxu0 %v656
      %1205 = vmatprep.subr.mxu0 0.0
      %1206 = vmatpush1.msra.mxu0 %v657
      %1207 = vmatprep.subr.mxu0 0.0
      %1208 = vmatpush1.msra.mxu0 %v658
      %1209 = vmatprep.subr.mxu0 0.0
      %1210 = vmatpush1.msra.mxu0 %v659
      %1211 = vmatprep.subr.mxu0 0.0
      %1212 = vmatpush1.msra.mxu0 %v660
      %1213 = vmatprep.subr.mxu0 0.0
      %1214 = vmatpush1.msra.mxu0 %v661
      %1215 = vmatprep.subr.mxu0 0.0
      %1216 = vmatpush1.msra.mxu0 %v662
      %1217 = vmatprep.subr.mxu0 0.0
      %1218 = vmatpush1.msra.mxu0 %v663
      %1219 = vmatprep.subr.mxu0 0.0
      %1220 = vmatpush1.msra.mxu0 %v664
      %1221 = vmatprep.subr.mxu0 0.0
      %1222 = vmatpush1.msra.mxu0 %v665
      %1223 = vmatprep.subr.mxu0 0.0
      %1224 = vmatpush1.msra.mxu0 %v666
      %1225 = vmatprep.subr.mxu0 0.0
      %1226 = vmatpush1.msra.mxu0 %v667
      %1227 = vmatprep.subr.mxu0 0.0
      %1228 = vmatpush1.msra.mxu0 %v668
      %1229 = vmatprep.subr.mxu0 0.0
      %1230 = vmatpush1.msra.mxu0 %v669
      %1231 = vmatprep.subr.mxu0 0.0
      %1232 = vmatpush1.msra.mxu0 %v670
      %1233 = vmatprep.mubr.f32.mxu0 %v446
      %1234 = vmatmul.mubr.f32.gmra.mrb[0].mxu0 %v414
      %v1235 = vpop.f32.mrb[0].mxu0
      %v1236 = vadd.f32 %v1011, %v1235
      %v1237 = vpop.f32.mrb[0].mxu0
      %1238 = vmatprep.mubr.f32.mxu0 %v447
      %1239 = vmatmul.mubr.f32.gmra.mrb[0].mxu0 %v415
      %v1240 = vpop.f32.mrb[0].mxu0
      %v1241 = vadd.f32 %v1016, %v1240
      %v1242 = vpop.f32.mrb[0].mxu0
      %1243 = vmatprep.mubr.f32.mxu0 %v448
      %1244 = vmatmul.mubr.f32.gmra.mrb[0].mxu0 %v416
      %v1245 = vpop.f32.mrb[0].mxu0
      %v1246 = vadd.f32 %v1021, %v1245
      %v1247 = vpop.f32.mrb[0].mxu0
      %1248 = vmatprep.mubr.f32.mxu0 %v449
      %1249 = vmatmul.mubr.f32.gmra.mrb[0].mxu0 %v417
      %v1250 = vpop.f32.mrb[0].mxu0
      %v1251 = vadd.f32 %v1026, %v1250
      %v1252 = vpop.f32.mrb[0].mxu0
      %1253 = vmatprep.mubr.f32.mxu0 %v450
      %1254 = vmatmul.mubr.f32.gmra.mrb[0].mxu0 %v418
      %v1255 = vpop.f32.mrb[0].mxu0
      %v1256 = vadd.f32 %v1031, %v1255
      %v1257 = vpop.f32.mrb[0].mxu0
      %1258 = vmatprep.mubr.f32.mxu0 %v451
      %1259 = vmatmul.mubr.f32.gmra.mrb[0].mxu0 %v419
      %v1260 = vpop.f32.mrb[0].mxu0
      %v1261 = vadd.f32 %v1036, %v1260
      %v1262 = vpop.f32.mrb[0].mxu0
      %1263 = vmatprep.mubr.f32.mxu0 %v452
      %1264 = vmatmul.mubr.f32.gmra.mrb[0].mxu0 %v420
      %v1265 = vpop.f32.mrb[0].mxu0
      %v1266 = vadd.f32 %v1041, %v1265
      %v1267 = vpop.f32.mrb[0].mxu0
      %1268 = vmatprep.mubr.f32.mxu0 %v453
      %1269 = vmatmul.mubr.f32.gmra.mrb[0].mxu0 %v421
      %v1270 = vpop.f32.mrb[0].mxu0
      %v1271 = vadd.f32 %v1046, %v1270
      %v1272 = vpop.f32.mrb[0].mxu0
      %1273 = vmatprep.mubr.f32.mxu0 %v454
      %1274 = vmatmul.mubr.f32.gmra.mrb[0].mxu0 %v422
      %v1275 = vpop.f32.mrb[0].mxu0
      %v1276 = vadd.f32 %v1051, %v1275
      %v1277 = vpop.f32.mrb[0].mxu0
      %1278 = vmatprep.mubr.f32.mxu0 %v455
      %1279 = vmatmul.mubr.f32.gmra.mrb[0].mxu0 %v423
      %v1280 = vpop.f32.mrb[0].mxu0
      %v1281 = vadd.f32 %v1056, %v1280
      %v1282 = vpop.f32.mrb[0].mxu0
      %1283 = vmatprep.mubr.f32.mxu0 %v456
      %1284 = vmatmul.mubr.f32.gmra.mrb[0].mxu0 %v424
      %v1285 = vpop.f32.mrb[0].mxu0
      %v1286 = vadd.f32 %v1061, %v1285
      %v1287 = vpop.f32.mrb[0].mxu0
      %1288 = vmatprep.mubr.f32.mxu0 %v457
      %1289 = vmatmul.mubr.f32.gmra.mrb[0].mxu0 %v425
      %v1290 = vpop.f32.mrb[0].mxu0
      %v1291 = vadd.f32 %v1066, %v1290
      %v1292 = vpop.f32.mrb[0].mxu0
      %1293 = vmatprep.mubr.f32.mxu0 %v458
      %1294 = vmatmul.mubr.f32.gmra.mrb[0].mxu0 %v426
      %v1295 = vpop.f32.mrb[0].mxu0
      %v1296 = vadd.f32 %v1071, %v1295
      %v1297 = vpop.f32.mrb[0].mxu0
      %1298 = vmatprep.mubr.f32.mxu0 %v459
      %1299 = vmatmul.mubr.f32.gmra.mrb[0].mxu0 %v427
      %v1300 = vpop.f32.mrb[0].mxu0
      %v1301 = vadd.f32 %v1076, %v1300
      %v1302 = vpop.f32.mrb[0].mxu0
      %1303 = vmatprep.mubr.f32.mxu0 %v460
      %1304 = vmatmul.mubr.f32.gmra.mrb[0].mxu0 %v428
      %v1305 = vpop.f32.mrb[0].mxu0
      %v1306 = vadd.f32 %v1081, %v1305
      %v1307 = vpop.f32.mrb[0].mxu0
      %1308 = vmatprep.mubr.f32.mxu0 %v461
      %1309 = vmatmul.mubr.f32.gmra.mrb[0].mxu0 %v429
      %v1310 = vpop.f32.mrb[0].mxu0
      %v1311 = vadd.f32 %v1086, %v1310
      %v1312 = vpop.f32.mrb[0].mxu0
      %1313 = vmatprep.mubr.f32.mxu0 %v462
      %1314 = vmatmul.mubr.f32.gmra.mrb[0].mxu0 %v430
      %v1315 = vpop.f32.mrb[0].mxu0
      %v1316 = vadd.f32 %v1091, %v1315
      %v1317 = vpop.f32.mrb[0].mxu0
      %1318 = vmatprep.mubr.f32.mxu0 %v463
      %1319 = vmatmul.mubr.f32.gmra.mrb[0].mxu0 %v431
      %v1320 = vpop.f32.mrb[0].mxu0
      %v1321 = vadd.f32 %v1096, %v1320
      %v1322 = vpop.f32.mrb[0].mxu0
      %1323 = vmatprep.mubr.f32.mxu0 %v464
      %1324 = vmatmul.mubr.f32.gmra.mrb[0].mxu0 %v432
      %v1325 = vpop.f32.mrb[0].mxu0
      %v1326 = vadd.f32 %v1101, %v1325
      %v1327 = vpop.f32.mrb[0].mxu0
      %1328 = vmatprep.mubr.f32.mxu0 %v465
      %1329 = vmatmul.mubr.f32.gmra.mrb[0].mxu0 %v433
      %v1330 = vpop.f32.mrb[0].mxu0
      %v1331 = vadd.f32 %v1106, %v1330
      %v1332 = vpop.f32.mrb[0].mxu0
      %1333 = vmatprep.mubr.f32.mxu0 %v466
      %1334 = vmatmul.mubr.f32.gmra.mrb[0].mxu0 %v434
      %v1335 = vpop.f32.mrb[0].mxu0
      %v1336 = vadd.f32 %v1111, %v1335
      %v1337 = vpop.f32.mrb[0].mxu0
      %1338 = vmatprep.mubr.f32.mxu0 %v467
      %1339 = vmatmul.mubr.f32.gmra.mrb[0].mxu0 %v435
      %v1340 = vpop.f32.mrb[0].mxu0
      %v1341 = vadd.f32 %v1116, %v1340
      %v1342 = vpop.f32.mrb[0].mxu0
      %1343 = vmatprep.mubr.f32.mxu0 %v468
      %1344 = vmatmul.mubr.f32.gmra.mrb[0].mxu0 %v436
      %v1345 = vpop.f32.mrb[0].mxu0
      %v1346 = vadd.f32 %v1121, %v1345
      %v1347 = vpop.f32.mrb[0].mxu0
      %1348 = vmatprep.mubr.f32.mxu0 %v469
      %1349 = vmatmul.mubr.f32.gmra.mrb[0].mxu0 %v437
      %v1350 = vpop.f32.mrb[0].mxu0
      %v1351 = vadd.f32 %v1126, %v1350
      %v1352 = vpop.f32.mrb[0].mxu0
      %1353 = vmatprep.mubr.f32.mxu0 %v470
      %1354 = vmatmul.mubr.f32.gmra.mrb[0].mxu0 %v438
      %v1355 = vpop.f32.mrb[0].mxu0
      %v1356 = vadd.f32 %v1131, %v1355
      %v1357 = vpop.f32.mrb[0].mxu0
      %1358 = vmatprep.mubr.f32.mxu0 %v471
      %1359 = vmatmul.mubr.f32.gmra.mrb[0].mxu0 %v439
      %v1360 = vpop.f32.mrb[0].mxu0
      %v1361 = vadd.f32 %v1136, %v1360
      %v1362 = vpop.f32.mrb[0].mxu0
      %1363 = vmatprep.mubr.f32.mxu0 %v472
      %1364 = vmatmul.mubr.f32.gmra.mrb[0].mxu0 %v440
      %v1365 = vpop.f32.mrb[0].mxu0
      %v1366 = vadd.f32 %v1141, %v1365
      %v1367 = vpop.f32.mrb[0].mxu0
      %1368 = vmatprep.mubr.f32.mxu0 %v473
      %1369 = vmatmul.mubr.f32.gmra.mrb[0].mxu0 %v441
      %v1370 = vpop.f32.mrb[0].mxu0
      %v1371 = vadd.f32 %v1146, %v1370
      %v1372 = vpop.f32.mrb[0].mxu0
      %1373 = vmatprep.mubr.f32.mxu0 %v474
      %1374 = vmatmul.mubr.f32.gmra.mrb[0].mxu0 %v442
      %v1375 = vpop.f32.mrb[0].mxu0
      %v1376 = vadd.f32 %v1151, %v1375
      %v1377 = vpop.f32.mrb[0].mxu0
      %1378 = vmatprep.mubr.f32.mxu0 %v475
      %1379 = vmatmul.mubr.f32.gmra.mrb[0].mxu0 %v443
      %v1380 = vpop.f32.mrb[0].mxu0
      %v1381 = vadd.f32 %v1156, %v1380
      %v1382 = vpop.f32.mrb[0].mxu0
      %1383 = vmatprep.mubr.f32.mxu0 %v476
      %1384 = vmatmul.mubr.f32.gmra.mrb[0].mxu0 %v444
      %v1385 = vpop.f32.mrb[0].mxu0
      %v1386 = vadd.f32 %v1161, %v1385
      %v1387 = vpop.f32.mrb[0].mxu0
      %1388 = vmatprep.mubr.f32.mxu0 %v477
      %1389 = vmatmul.mubr.f32.gmra.mrb[0].mxu0 %v445
      %v1390 = vpop.f32.mrb[0].mxu0
      %v1391 = vadd.f32 %v1166, %v1390
      %v1392 = vpop.f32.mrb[0].mxu0
      %1393 = vdwg.mxu0
      %1394 = vmatprep.subr.mxu0 0.0
      %1395 = vmatpush1.msra.mxu0 %v671
      %1396 = vmatprep.subr.mxu0 0.0
      %1397 = vmatpush1.msra.mxu0 %v672
      %1398 = vmatprep.subr.mxu0 0.0
      %1399 = vmatpush1.msra.mxu0 %v673
      %1400 = vmatprep.subr.mxu0 0.0
      %1401 = vmatpush1.msra.mxu0 %v674
      %1402 = vmatprep.subr.mxu0 0.0
      %1403 = vmatpush1.msra.mxu0 %v675
      %1404 = vmatprep.subr.mxu0 0.0
      %1405 = vmatpush1.msra.mxu0 %v676
      %1406 = vmatprep.subr.mxu0 0.0
      %1407 = vmatpush1.msra.mxu0 %v677
      %1408 = vmatprep.subr.mxu0 0.0
      %1409 = vmatpush1.msra.mxu0 %v678
      %1410 = vmatprep.subr.mxu0 0.0
      %1411 = vmatpush1.msra.mxu0 %v679
      %1412 = vmatprep.subr.mxu0 0.0
      %1413 = vmatpush1.msra.mxu0 %v680
      %1414 = vmatprep.subr.mxu0 0.0
      %1415 = vmatpush1.msra.mxu0 %v681
      %1416 = vmatprep.subr.mxu0 0.0
      %1417 = vmatpush1.msra.mxu0 %v682
      %1418 = vmatprep.subr.mxu0 0.0
      %1419 = vmatpush1.msra.mxu0 %v683
      %1420 = vmatprep.subr.mxu0 0.0
      %1421 = vmatpush1.msra.mxu0 %v684
      %1422 = vmatprep.subr.mxu0 0.0
      %1423 = vmatpush1.msra.mxu0 %v685
      %1424 = vmatprep.subr.mxu0 0.0
      %1425 = vmatpush1.msra.mxu0 %v686
      %1426 = vmatprep.subr.mxu0 0.0
      %1427 = vmatpush1.msra.mxu0 %v687
      %1428 = vmatprep.subr.mxu0 0.0
      %1429 = vmatpush1.msra.mxu0 %v688
      %1430 = vmatprep.subr.mxu0 0.0
      %1431 = vmatpush1.msra.mxu0 %v689
      %1432 = vmatprep.subr.mxu0 0.0
      %1433 = vmatpush1.msra.mxu0 %v690
      %1434 = vmatprep.subr.mxu0 0.0
      %1435 = vmatpush1.msra.mxu0 %v691
      %1436 = vmatprep.subr.mxu0 0.0
      %1437 = vmatpush1.msra.mxu0 %v692
      %1438 = vmatprep.subr.mxu0 0.0
      %1439 = vmatpush1.msra.mxu0 %v693
      %1440 = vmatprep.subr.mxu0 0.0
      %1441 = vmatpush1.msra.mxu0 %v694
      %1442 = vmatprep.subr.mxu0 0.0
      %1443 = vmatpush1.msra.mxu0 %v695
      %1444 = vmatprep.subr.mxu0 0.0
      %1445 = vmatpush1.msra.mxu0 %v696
      %1446 = vmatprep.subr.mxu0 0.0
      %1447 = vmatpush1.msra.mxu0 %v697
      %1448 = vmatprep.subr.mxu0 0.0
      %1449 = vmatpush1.msra.mxu0 %v698
      %1450 = vmatprep.subr.mxu0 0.0
      %1451 = vmatpush1.msra.mxu0 %v699
      %1452 = vmatprep.subr.mxu0 0.0
      %1453 = vmatpush1.msra.mxu0 %v700
      %1454 = vmatprep.subr.mxu0 0.0
      %1455 = vmatpush1.msra.mxu0 %v701
      %1456 = vmatprep.subr.mxu0 0.0
      %1457 = vmatpush1.msra.mxu0 %v702
      %1458 = vmatprep.mubr.f32.mxu0 %v511
      %1459 = vmatmul.mubr.f32.gmra.mrb[0].mxu0 %v479
      %v1460 = vpop.f32.mrb[0].mxu0
      %v1461 = vadd.f32 %v1236, %v1460
      %v1462 = vpop.f32.mrb[0].mxu0
      %1463 = vmatprep.mubr.f32.mxu0 %v512
      %1464 = vmatmul.mubr.f32.gmra.mrb[0].mxu0 %v480
      %v1465 = vpop.f32.mrb[0].mxu0
      %v1466 = vadd.f32 %v1241, %v1465
      %v1467 = vpop.f32.mrb[0].mxu0
      %1468 = vmatprep.mubr.f32.mxu0 %v513
      %1469 = vmatmul.mubr.f32.gmra.mrb[0].mxu0 %v481
      %v1470 = vpop.f32.mrb[0].mxu0
      %v1471 = vadd.f32 %v1246, %v1470
      %v1472 = vpop.f32.mrb[0].mxu0
      %1473 = vmatprep.mubr.f32.mxu0 %v514
      %1474 = vmatmul.mubr.f32.gmra.mrb[0].mxu0 %v482
      %v1475 = vpop.f32.mrb[0].mxu0
      %v1476 = vadd.f32 %v1251, %v1475
      %v1477 = vpop.f32.mrb[0].mxu0
      %1478 = vmatprep.mubr.f32.mxu0 %v515
      %1479 = vmatmul.mubr.f32.gmra.mrb[0].mxu0 %v483
      %v1480 = vpop.f32.mrb[0].mxu0
      %v1481 = vadd.f32 %v1256, %v1480
      %v1482 = vpop.f32.mrb[0].mxu0
      %1483 = vmatprep.mubr.f32.mxu0 %v516
      %1484 = vmatmul.mubr.f32.gmra.mrb[0].mxu0 %v484
      %v1485 = vpop.f32.mrb[0].mxu0
      %v1486 = vadd.f32 %v1261, %v1485
      %v1487 = vpop.f32.mrb[0].mxu0
      %1488 = vmatprep.mubr.f32.mxu0 %v517
      %1489 = vmatmul.mubr.f32.gmra.mrb[0].mxu0 %v485
      %v1490 = vpop.f32.mrb[0].mxu0
      %v1491 = vadd.f32 %v1266, %v1490
      %v1492 = vpop.f32.mrb[0].mxu0
      %1493 = vmatprep.mubr.f32.mxu0 %v518
      %1494 = vmatmul.mubr.f32.gmra.mrb[0].mxu0 %v486
      %v1495 = vpop.f32.mrb[0].mxu0
      %v1496 = vadd.f32 %v1271, %v1495
      %v1497 = vpop.f32.mrb[0].mxu0
      %1498 = vmatprep.mubr.f32.mxu0 %v519
      %1499 = vmatmul.mubr.f32.gmra.mrb[0].mxu0 %v487
      %v1500 = vpop.f32.mrb[0].mxu0
      %v1501 = vadd.f32 %v1276, %v1500
      %v1502 = vpop.f32.mrb[0].mxu0
      %1503 = vmatprep.mubr.f32.mxu0 %v520
      %1504 = vmatmul.mubr.f32.gmra.mrb[0].mxu0 %v488
      %v1505 = vpop.f32.mrb[0].mxu0
      %v1506 = vadd.f32 %v1281, %v1505
      %v1507 = vpop.f32.mrb[0].mxu0
      %1508 = vmatprep.mubr.f32.mxu0 %v521
      %1509 = vmatmul.mubr.f32.gmra.mrb[0].mxu0 %v489
      %v1510 = vpop.f32.mrb[0].mxu0
      %v1511 = vadd.f32 %v1286, %v1510
      %v1512 = vpop.f32.mrb[0].mxu0
      %1513 = vmatprep.mubr.f32.mxu0 %v522
      %1514 = vmatmul.mubr.f32.gmra.mrb[0].mxu0 %v490
      %v1515 = vpop.f32.mrb[0].mxu0
      %v1516 = vadd.f32 %v1291, %v1515
      %v1517 = vpop.f32.mrb[0].mxu0
      %1518 = vmatprep.mubr.f32.mxu0 %v523
      %1519 = vmatmul.mubr.f32.gmra.mrb[0].mxu0 %v491
      %v1520 = vpop.f32.mrb[0].mxu0
      %v1521 = vadd.f32 %v1296, %v1520
      %v1522 = vpop.f32.mrb[0].mxu0
      %1523 = vmatprep.mubr.f32.mxu0 %v524
      %1524 = vmatmul.mubr.f32.gmra.mrb[0].mxu0 %v492
      %v1525 = vpop.f32.mrb[0].mxu0
      %v1526 = vadd.f32 %v1301, %v1525
      %v1527 = vpop.f32.mrb[0].mxu0
      %1528 = vmatprep.mubr.f32.mxu0 %v525
      %1529 = vmatmul.mubr.f32.gmra.mrb[0].mxu0 %v493
      %v1530 = vpop.f32.mrb[0].mxu0
      %v1531 = vadd.f32 %v1306, %v1530
      %v1532 = vpop.f32.mrb[0].mxu0
      %1533 = vmatprep.mubr.f32.mxu0 %v526
      %1534 = vmatmul.mubr.f32.gmra.mrb[0].mxu0 %v494
      %v1535 = vpop.f32.mrb[0].mxu0
      %v1536 = vadd.f32 %v1311, %v1535
      %v1537 = vpop.f32.mrb[0].mxu0
      %1538 = vmatprep.mubr.f32.mxu0 %v527
      %1539 = vmatmul.mubr.f32.gmra.mrb[0].mxu0 %v495
      %v1540 = vpop.f32.mrb[0].mxu0
      %v1541 = vadd.f32 %v1316, %v1540
      %v1542 = vpop.f32.mrb[0].mxu0
      %1543 = vmatprep.mubr.f32.mxu0 %v528
      %1544 = vmatmul.mubr.f32.gmra.mrb[0].mxu0 %v496
      %v1545 = vpop.f32.mrb[0].mxu0
      %v1546 = vadd.f32 %v1321, %v1545
      %v1547 = vpop.f32.mrb[0].mxu0
      %1548 = vmatprep.mubr.f32.mxu0 %v529
      %1549 = vmatmul.mubr.f32.gmra.mrb[0].mxu0 %v497
      %v1550 = vpop.f32.mrb[0].mxu0
      %v1551 = vadd.f32 %v1326, %v1550
      %v1552 = vpop.f32.mrb[0].mxu0
      %1553 = vmatprep.mubr.f32.mxu0 %v530
      %1554 = vmatmul.mubr.f32.gmra.mrb[0].mxu0 %v498
      %v1555 = vpop.f32.mrb[0].mxu0
      %v1556 = vadd.f32 %v1331, %v1555
      %v1557 = vpop.f32.mrb[0].mxu0
      %1558 = vmatprep.mubr.f32.mxu0 %v531
      %1559 = vmatmul.mubr.f32.gmra.mrb[0].mxu0 %v499
      %v1560 = vpop.f32.mrb[0].mxu0
      %v1561 = vadd.f32 %v1336, %v1560
      %v1562 = vpop.f32.mrb[0].mxu0
      %1563 = vmatprep.mubr.f32.mxu0 %v532
      %1564 = vmatmul.mubr.f32.gmra.mrb[0].mxu0 %v500
      %v1565 = vpop.f32.mrb[0].mxu0
      %v1566 = vadd.f32 %v1341, %v1565
      %v1567 = vpop.f32.mrb[0].mxu0
      %1568 = vmatprep.mubr.f32.mxu0 %v533
      %1569 = vmatmul.mubr.f32.gmra.mrb[0].mxu0 %v501
      %v1570 = vpop.f32.mrb[0].mxu0
      %v1571 = vadd.f32 %v1346, %v1570
      %v1572 = vpop.f32.mrb[0].mxu0
      %1573 = vmatprep.mubr.f32.mxu0 %v534
      %1574 = vmatmul.mubr.f32.gmra.mrb[0].mxu0 %v502
      %v1575 = vpop.f32.mrb[0].mxu0
      %v1576 = vadd.f32 %v1351, %v1575
      %v1577 = vpop.f32.mrb[0].mxu0
      %1578 = vmatprep.mubr.f32.mxu0 %v535
      %1579 = vmatmul.mubr.f32.gmra.mrb[0].mxu0 %v503
      %v1580 = vpop.f32.mrb[0].mxu0
      %v1581 = vadd.f32 %v1356, %v1580
      %v1582 = vpop.f32.mrb[0].mxu0
      %1583 = vmatprep.mubr.f32.mxu0 %v536
      %1584 = vmatmul.mubr.f32.gmra.mrb[0].mxu0 %v504
      %v1585 = vpop.f32.mrb[0].mxu0
      %v1586 = vadd.f32 %v1361, %v1585
      %v1587 = vpop.f32.mrb[0].mxu0
      %1588 = vmatprep.mubr.f32.mxu0 %v537
      %1589 = vmatmul.mubr.f32.gmra.mrb[0].mxu0 %v505
      %v1590 = vpop.f32.mrb[0].mxu0
      %v1591 = vadd.f32 %v1366, %v1590
      %v1592 = vpop.f32.mrb[0].mxu0
      %1593 = vmatprep.mubr.f32.mxu0 %v538
      %1594 = vmatmul.mubr.f32.gmra.mrb[0].mxu0 %v506
      %v1595 = vpop.f32.mrb[0].mxu0
      %v1596 = vadd.f32 %v1371, %v1595
      %v1597 = vpop.f32.mrb[0].mxu0
      %1598 = vmatprep.mubr.f32.mxu0 %v539
      %1599 = vmatmul.mubr.f32.gmra.mrb[0].mxu0 %v507
      %v1600 = vpop.f32.mrb[0].mxu0
      %v1601 = vadd.f32 %v1376, %v1600
      %v1602 = vpop.f32.mrb[0].mxu0
      %1603 = vmatprep.mubr.f32.mxu0 %v540
      %1604 = vmatmul.mubr.f32.gmra.mrb[0].mxu0 %v508
      %v1605 = vpop.f32.mrb[0].mxu0
      %v1606 = vadd.f32 %v1381, %v1605
      %v1607 = vpop.f32.mrb[0].mxu0
      %1608 = vmatprep.mubr.f32.mxu0 %v541
      %1609 = vmatmul.mubr.f32.gmra.mrb[0].mxu0 %v509
      %v1610 = vpop.f32.mrb[0].mxu0
      %v1611 = vadd.f32 %v1386, %v1610
      %v1612 = vpop.f32.mrb[0].mxu0
      %1613 = vmatprep.mubr.f32.mxu0 %v542
      %1614 = vmatmul.mubr.f32.gmra.mrb[0].mxu0 %v510
      %v1615 = vpop.f32.mrb[0].mxu0
      %v1616 = vadd.f32 %v1391, %v1615
      %v1617 = vpop.f32.mrb[0].mxu0
      %1618 = vdwg.mxu0
      %1619 = vmatprep.subr.mxu0 0.0
      %1620 = vmatpush1.msra.mxu0 %v703
      %1621 = vmatprep.subr.mxu0 0.0
      %1622 = vmatpush1.msra.mxu0 %v704
      %1623 = vmatprep.subr.mxu0 0.0
      %1624 = vmatpush1.msra.mxu0 %v705
      %1625 = vmatprep.subr.mxu0 0.0
      %1626 = vmatpush1.msra.mxu0 %v706
      %1627 = vmatprep.subr.mxu0 0.0
      %1628 = vmatpush1.msra.mxu0 %v707
      %1629 = vmatprep.subr.mxu0 0.0
      %1630 = vmatpush1.msra.mxu0 %v708
      %1631 = vmatprep.subr.mxu0 0.0
      %1632 = vmatpush1.msra.mxu0 %v709
      %1633 = vmatprep.subr.mxu0 0.0
      %1634 = vmatpush1.msra.mxu0 %v710
      %1635 = vmatprep.subr.mxu0 0.0
      %1636 = vmatpush1.msra.mxu0 %v711
      %1637 = vmatprep.subr.mxu0 0.0
      %1638 = vmatpush1.msra.mxu0 %v712
      %1639 = vmatprep.subr.mxu0 0.0
      %1640 = vmatpush1.msra.mxu0 %v713
      %1641 = vmatprep.subr.mxu0 0.0
      %1642 = vmatpush1.msra.mxu0 %v714
      %1643 = vmatprep.subr.mxu0 0.0
      %1644 = vmatpush1.msra.mxu0 %v715
      %1645 = vmatprep.subr.mxu0 0.0
      %1646 = vmatpush1.msra.mxu0 %v716
      %1647 = vmatprep.subr.mxu0 0.0
      %1648 = vmatpush1.msra.mxu0 %v717
      %1649 = vmatprep.subr.mxu0 0.0
      %1650 = vmatpush1.msra.mxu0 %v718
      %1651 = vmatprep.subr.mxu0 0.0
      %1652 = vmatpush1.msra.mxu0 0.0
      %1653 = vmatprep.subr.mxu0 0.0
      %1654 = vmatpush1.msra.mxu0 0.0
      %1655 = vmatprep.subr.mxu0 0.0
      %1656 = vmatpush1.msra.mxu0 0.0
      %1657 = vmatprep.subr.mxu0 0.0
      %1658 = vmatpush1.msra.mxu0 0.0
      %1659 = vmatprep.subr.mxu0 0.0
      %1660 = vmatpush1.msra.mxu0 0.0
      %1661 = vmatprep.subr.mxu0 0.0
      %1662 = vmatpush1.msra.mxu0 0.0
      %1663 = vmatprep.subr.mxu0 0.0
      %1664 = vmatpush1.msra.mxu0 0.0
      %1665 = vmatprep.subr.mxu0 0.0
      %1666 = vmatpush1.msra.mxu0 0.0
      %1667 = vmatprep.subr.mxu0 0.0
      %1668 = vmatpush1.msra.mxu0 0.0
      %1669 = vmatprep.subr.mxu0 0.0
      %1670 = vmatpush1.msra.mxu0 0.0
      %1671 = vmatprep.subr.mxu0 0.0
      %1672 = vmatpush1.msra.mxu0 0.0
      %1673 = vmatprep.subr.mxu0 0.0
      %1674 = vmatpush1.msra.mxu0 0.0
      %1675 = vmatprep.subr.mxu0 0.0
      %1676 = vmatpush1.msra.mxu0 0.0
      %1677 = vmatprep.subr.mxu0 0.0
      %1678 = vmatpush1.msra.mxu0 0.0
      %1679 = vmatprep.subr.mxu0 0.0
      %1680 = vmatpush1.msra.mxu0 0.0
      %1681 = vmatprep.subr.mxu0 0.0
      %1682 = vmatpush1.msra.mxu0 0.0
      %1683 = vmatprep.mubr.f32.mxu0 0.0
      %1684 = vmatmul.mubr.f32.gmra.mrb[0].mxu0 %v543
      %v1685 = vpop.f32.mrb[0].mxu0
      %v1686 = vadd.f32 %v1461, %v1685
      %v1687 = vpop.f32.mrb[0].mxu0
      %1688 = vmatprep.mubr.f32.mxu0 0.0
      %1689 = vmatmul.mubr.f32.gmra.mrb[0].mxu0 %v544
      %v1690 = vpop.f32.mrb[0].mxu0
      %v1691 = vadd.f32 %v1466, %v1690
      %v1692 = vpop.f32.mrb[0].mxu0
      %1693 = vmatprep.mubr.f32.mxu0 0.0
      %1694 = vmatmul.mubr.f32.gmra.mrb[0].mxu0 %v545
      %v1695 = vpop.f32.mrb[0].mxu0
      %v1696 = vadd.f32 %v1471, %v1695
      %v1697 = vpop.f32.mrb[0].mxu0
      %1698 = vmatprep.mubr.f32.mxu0 0.0
      %1699 = vmatmul.mubr.f32.gmra.mrb[0].mxu0 %v546
      %v1700 = vpop.f32.mrb[0].mxu0
      %v1701 = vadd.f32 %v1476, %v1700
      %v1702 = vpop.f32.mrb[0].mxu0
      %1703 = vmatprep.mubr.f32.mxu0 0.0
      %1704 = vmatmul.mubr.f32.gmra.mrb[0].mxu0 %v547
      %v1705 = vpop.f32.mrb[0].mxu0
      %v1706 = vadd.f32 %v1481, %v1705
      %v1707 = vpop.f32.mrb[0].mxu0
      %1708 = vmatprep.mubr.f32.mxu0 0.0
      %1709 = vmatmul.mubr.f32.gmra.mrb[0].mxu0 %v548
      %v1710 = vpop.f32.mrb[0].mxu0
      %v1711 = vadd.f32 %v1486, %v1710
      %v1712 = vpop.f32.mrb[0].mxu0
      %1713 = vmatprep.mubr.f32.mxu0 0.0
      %1714 = vmatmul.mubr.f32.gmra.mrb[0].mxu0 %v549
      %v1715 = vpop.f32.mrb[0].mxu0
      %v1716 = vadd.f32 %v1491, %v1715
      %v1717 = vpop.f32.mrb[0].mxu0
      %1718 = vmatprep.mubr.f32.mxu0 0.0
      %1719 = vmatmul.mubr.f32.gmra.mrb[0].mxu0 %v550
      %v1720 = vpop.f32.mrb[0].mxu0
      %v1721 = vadd.f32 %v1496, %v1720
      %v1722 = vpop.f32.mrb[0].mxu0
      %1723 = vmatprep.mubr.f32.mxu0 0.0
      %1724 = vmatmul.mubr.f32.gmra.mrb[0].mxu0 %v551
      %v1725 = vpop.f32.mrb[0].mxu0
      %v1726 = vadd.f32 %v1501, %v1725
      %v1727 = vpop.f32.mrb[0].mxu0
      %1728 = vmatprep.mubr.f32.mxu0 0.0
      %1729 = vmatmul.mubr.f32.gmra.mrb[0].mxu0 %v552
      %v1730 = vpop.f32.mrb[0].mxu0
      %v1731 = vadd.f32 %v1506, %v1730
      %v1732 = vpop.f32.mrb[0].mxu0
      %1733 = vmatprep.mubr.f32.mxu0 0.0
      %1734 = vmatmul.mubr.f32.gmra.mrb[0].mxu0 %v553
      %v1735 = vpop.f32.mrb[0].mxu0
      %v1736 = vadd.f32 %v1511, %v1735
      %v1737 = vpop.f32.mrb[0].mxu0
      %1738 = vmatprep.mubr.f32.mxu0 0.0
      %1739 = vmatmul.mubr.f32.gmra.mrb[0].mxu0 %v554
      %v1740 = vpop.f32.mrb[0].mxu0
      %v1741 = vadd.f32 %v1516, %v1740
      %v1742 = vpop.f32.mrb[0].mxu0
      %1743 = vmatprep.mubr.f32.mxu0 0.0
      %1744 = vmatmul.mubr.f32.gmra.mrb[0].mxu0 %v555
      %v1745 = vpop.f32.mrb[0].mxu0
      %v1746 = vadd.f32 %v1521, %v1745
      %v1747 = vpop.f32.mrb[0].mxu0
      %1748 = vmatprep.mubr.f32.mxu0 0.0
      %1749 = vmatmul.mubr.f32.gmra.mrb[0].mxu0 %v556
      %v1750 = vpop.f32.mrb[0].mxu0
      %v1751 = vadd.f32 %v1526, %v1750
      %v1752 = vpop.f32.mrb[0].mxu0
      %1753 = vmatprep.mubr.f32.mxu0 0.0
      %1754 = vmatmul.mubr.f32.gmra.mrb[0].mxu0 %v557
      %v1755 = vpop.f32.mrb[0].mxu0
      %v1756 = vadd.f32 %v1531, %v1755
      %v1757 = vpop.f32.mrb[0].mxu0
      %1758 = vmatprep.mubr.f32.mxu0 0.0
      %1759 = vmatmul.mubr.f32.gmra.mrb[0].mxu0 %v558
      %v1760 = vpop.f32.mrb[0].mxu0
      %v1761 = vadd.f32 %v1536, %v1760
      %v1762 = vpop.f32.mrb[0].mxu0
      %1763 = vmatprep.mubr.f32.mxu0 0.0
      %1764 = vmatmul.mubr.f32.gmra.mrb[0].mxu0 %v559
      %v1765 = vpop.f32.mrb[0].mxu0
      %v1766 = vadd.f32 %v1541, %v1765
      %v1767 = vpop.f32.mrb[0].mxu0
      %1768 = vmatprep.mubr.f32.mxu0 0.0
      %1769 = vmatmul.mubr.f32.gmra.mrb[0].mxu0 %v560
      %v1770 = vpop.f32.mrb[0].mxu0
      %v1771 = vadd.f32 %v1546, %v1770
      %v1772 = vpop.f32.mrb[0].mxu0
      %1773 = vmatprep.mubr.f32.mxu0 0.0
      %1774 = vmatmul.mubr.f32.gmra.mrb[0].mxu0 %v561
      %v1775 = vpop.f32.mrb[0].mxu0
      %v1776 = vadd.f32 %v1551, %v1775
      %v1777 = vpop.f32.mrb[0].mxu0
      %1778 = vmatprep.mubr.f32.mxu0 0.0
      %1779 = vmatmul.mubr.f32.gmra.mrb[0].mxu0 %v562
      %v1780 = vpop.f32.mrb[0].mxu0
      %v1781 = vadd.f32 %v1556, %v1780
      %v1782 = vpop.f32.mrb[0].mxu0
      %1783 = vmatprep.mubr.f32.mxu0 0.0
      %1784 = vmatmul.mubr.f32.gmra.mrb[0].mxu0 %v563
      %v1785 = vpop.f32.mrb[0].mxu0
      %v1786 = vadd.f32 %v1561, %v1785
      %v1787 = vpop.f32.mrb[0].mxu0
      %1788 = vmatprep.mubr.f32.mxu0 0.0
      %1789 = vmatmul.mubr.f32.gmra.mrb[0].mxu0 %v564
      %v1790 = vpop.f32.mrb[0].mxu0
      %v1791 = vadd.f32 %v1566, %v1790
      %v1792 = vpop.f32.mrb[0].mxu0
      %1793 = vmatprep.mubr.f32.mxu0 0.0
      %1794 = vmatmul.mubr.f32.gmra.mrb[0].mxu0 %v565
      %v1795 = vpop.f32.mrb[0].mxu0
      %v1796 = vadd.f32 %v1571, %v1795
      %v1797 = vpop.f32.mrb[0].mxu0
      %1798 = vmatprep.mubr.f32.mxu0 0.0
      %1799 = vmatmul.mubr.f32.gmra.mrb[0].mxu0 %v566
      %v1800 = vpop.f32.mrb[0].mxu0
      %v1801 = vadd.f32 %v1576, %v1800
      %v1802 = vpop.f32.mrb[0].mxu0
      %1803 = vmatprep.mubr.f32.mxu0 0.0
      %1804 = vmatmul.mubr.f32.gmra.mrb[0].mxu0 %v567
      %v1805 = vpop.f32.mrb[0].mxu0
      %v1806 = vadd.f32 %v1581, %v1805
      %v1807 = vpop.f32.mrb[0].mxu0
      %1808 = vmatprep.mubr.f32.mxu0 0.0
      %1809 = vmatmul.mubr.f32.gmra.mrb[0].mxu0 %v568
      %v1810 = vpop.f32.mrb[0].mxu0
      %v1811 = vadd.f32 %v1586, %v1810
      %v1812 = vpop.f32.mrb[0].mxu0
      %1813 = vmatprep.mubr.f32.mxu0 0.0
      %1814 = vmatmul.mubr.f32.gmra.mrb[0].mxu0 %v569
      %v1815 = vpop.f32.mrb[0].mxu0
      %v1816 = vadd.f32 %v1591, %v1815
      %v1817 = vpop.f32.mrb[0].mxu0
      %1818 = vmatprep.mubr.f32.mxu0 0.0
      %1819 = vmatmul.mubr.f32.gmra.mrb[0].mxu0 %v570
      %v1820 = vpop.f32.mrb[0].mxu0
      %v1821 = vadd.f32 %v1596, %v1820
      %v1822 = vpop.f32.mrb[0].mxu0
      %1823 = vmatprep.mubr.f32.mxu0 0.0
      %1824 = vmatmul.mubr.f32.gmra.mrb[0].mxu0 %v571
      %v1825 = vpop.f32.mrb[0].mxu0
      %v1826 = vadd.f32 %v1601, %v1825
      %v1827 = vpop.f32.mrb[0].mxu0
      %1828 = vmatprep.mubr.f32.mxu0 0.0
      %1829 = vmatmul.mubr.f32.gmra.mrb[0].mxu0 %v572
      %v1830 = vpop.f32.mrb[0].mxu0
      %v1831 = vadd.f32 %v1606, %v1830
      %v1832 = vpop.f32.mrb[0].mxu0
      %1833 = vmatprep.mubr.f32.mxu0 0.0
      %1834 = vmatmul.mubr.f32.gmra.mrb[0].mxu0 %v573
      %v1835 = vpop.f32.mrb[0].mxu0
      %v1836 = vadd.f32 %v1611, %v1835
      %v1837 = vpop.f32.mrb[0].mxu0
      %1838 = vmatprep.mubr.f32.mxu0 0.0
      %1839 = vmatmul.mubr.f32.gmra.mrb[0].mxu0 %v574
      %v1840 = vpop.f32.mrb[0].mxu0
      %v1841 = vadd.f32 %v1616, %v1840
      %v1842 = vpop.f32.mrb[0].mxu0
      %1843 = vdwg.mxu0
      %1844 = vst [vmem:[%s177] sm:$0xff] %v1686
      %1845 = vst [vmem:[%s177 + $0x8] sm:$0xff] %v1691
      %1846 = vst [vmem:[%s177 + $0x10] sm:$0xff] %v1696
      %1847 = vst [vmem:[%s177 + $0x18] sm:$0xff] %v1701
      %1848 = vst [vmem:[%s177 + $0x20] sm:$0xff] %v1706
      %1849 = vst [vmem:[%s177 + $0x28] sm:$0xff] %v1711
      %1850 = vst [vmem:[%s177 + $0x30] sm:$0xff] %v1716
      %1851 = vst [vmem:[%s177 + $0x38] sm:$0xff] %v1721
      %1852 = vst [vmem:[%s177 + $0x40] sm:$0xff] %v1726
      %1853 = vst [vmem:[%s177 + $0x48] sm:$0xff] %v1731
      %1854 = vst [vmem:[%s177 + $0x50] sm:$0xff] %v1736
      %1855 = vst [vmem:[%s177 + $0x58] sm:$0xff] %v1741
      %1856 = vst [vmem:[%s177 + $0x60] sm:$0xff] %v1746
      %1857 = vst [vmem:[%s177 + $0x68] sm:$0xff] %v1751
      %1858 = vst [vmem:[%s177 + $0x70] sm:$0xff] %v1756
      %1859 = vst [vmem:[%s177 + $0x78] sm:$0xff] %v1761
      %1860 = vst [vmem:[%s177 + $0x80] sm:$0xff] %v1766
      %1861 = vst [vmem:[%s177 + $0x88] sm:$0xff] %v1771
      %1862 = vst [vmem:[%s177 + $0x90] sm:$0xff] %v1776
      %1863 = vst [vmem:[%s177 + $0x98] sm:$0xff] %v1781
      %1864 = vst [vmem:[%s177 + $0xa0] sm:$0xff] %v1786
      %1865 = vst [vmem:[%s177 + $0xa8] sm:$0xff] %v1791
      %1866 = vst [vmem:[%s177 + $0xb0] sm:$0xff] %v1796
      %1867 = vst [vmem:[%s177 + $0xb8] sm:$0xff] %v1801
      %1868 = vst [vmem:[%s177 + $0xc0] sm:$0xff] %v1806
      %1869 = vst [vmem:[%s177 + $0xc8] sm:$0xff] %v1811
      %1870 = vst [vmem:[%s177 + $0xd0] sm:$0xff] %v1816
      %1871 = vst [vmem:[%s177 + $0xd8] sm:$0xff] %v1821
      %1872 = vst [vmem:[%s177 + $0xe0] sm:$0xff] %v1826
      %1873 = vst [vmem:[%s177 + $0xe8] sm:$0xff] %v1831
      %1874 = vst [vmem:[%s177 + $0xf0] sm:$0xff] %v1836
      %1875 = vst [vmem:[%s177 + $0xf8] sm:$0xff] %v1841
      %v1876 = vadd.f32 %v1686, %v1691
      %v1877 = vadd.f32 %v1876, %v1696
      %v1878 = vadd.f32 %v1877, %v1701
      %v1879 = vadd.f32 %v1878, %v1706
      %v1880 = vadd.f32 %v1879, %v1711
      %v1881 = vadd.f32 %v1880, %v1716
      %v1882 = vadd.f32 %v1881, %v1721
      %v1883 = vadd.f32 %v1882, %v1726
      %v1884 = vadd.f32 %v1883, %v1731
      %v1885 = vadd.f32 %v1884, %v1736
      %v1886 = vadd.f32 %v1885, %v1741
      %v1887 = vadd.f32 %v1886, %v1746
      %v1888 = vadd.f32 %v1887, %v1751
      %v1889 = vadd.f32 %v1888, %v1756
      %v1890 = vadd.f32 %v1889, %v1761
      %v1891 = vadd.f32 %v1890, %v1766
      %v1892 = vadd.f32 %v1891, %v1771
      %v1893 = vadd.f32 %v1892, %v1776
      %v1894 = vadd.f32 %v1893, %v1781
      %v1895 = vadd.f32 %v1894, %v1786
      %v1896 = vadd.f32 %v1895, %v1791
      %v1897 = vadd.f32 %v1896, %v1796
      %v1898 = vadd.f32 %v1897, %v1801
      %v1899 = vadd.f32 %v1898, %v1806
      %v1900 = vadd.f32 %v1899, %v1811
      %v1901 = vadd.f32 %v1900, %v1816
      %v1902 = vadd.f32 %v1901, %v1821
      %v1903 = vadd.f32 %v1902, %v1826
      %v1904 = vadd.f32 %v1903, %v1831
      %v1905 = vadd.f32 %v1904, %v1836
      %v1906 = vadd.f32 %v1905, %v1841
      %v1907 = vrot.slane %v1906, 4
      %v1908 = vadd.f32 %v1906, %v1907
      %v1909 = vrot.slane %v1908, 2
      %v1910 = vadd.f32 %v1908, %v1909
      %v1911 = vrot.slane %v1910, 1
      %v1912 = vadd.f32 %v1910, %v1911
      %v1913 = vmul.f32 %v1686, %v1686
      %v1914 = vmul.f32 %v1691, %v1691
      %v1915 = vmul.f32 %v1696, %v1696
      %v1916 = vmul.f32 %v1701, %v1701
      %v1917 = vmul.f32 %v1706, %v1706
      %v1918 = vmul.f32 %v1711, %v1711
      %v1919 = vmul.f32 %v1716, %v1716
      %v1920 = vmul.f32 %v1721, %v1721
      %v1921 = vmul.f32 %v1726, %v1726
      %v1922 = vmul.f32 %v1731, %v1731
      %v1923 = vmul.f32 %v1736, %v1736
      %v1924 = vmul.f32 %v1741, %v1741
      %v1925 = vmul.f32 %v1746, %v1746
      %v1926 = vmul.f32 %v1751, %v1751
      %v1927 = vmul.f32 %v1756, %v1756
      %v1928 = vmul.f32 %v1761, %v1761
      %v1929 = vmul.f32 %v1766, %v1766
      %v1930 = vmul.f32 %v1771, %v1771
      %v1931 = vmul.f32 %v1776, %v1776
      %v1932 = vmul.f32 %v1781, %v1781
      %v1933 = vmul.f32 %v1786, %v1786
      %v1934 = vmul.f32 %v1791, %v1791
      %v1935 = vmul.f32 %v1796, %v1796
      %v1936 = vmul.f32 %v1801, %v1801
      %v1937 = vmul.f32 %v1806, %v1806
      %v1938 = vmul.f32 %v1811, %v1811
      %v1939 = vmul.f32 %v1816, %v1816
      %v1940 = vmul.f32 %v1821, %v1821
      %v1941 = vmul.f32 %v1826, %v1826
      %v1942 = vmul.f32 %v1831, %v1831
      %v1943 = vmul.f32 %v1836, %v1836
      %v1944 = vmul.f32 %v1841, %v1841
      %v1945 = vadd.f32 %v1913, %v1914
      %v1946 = vadd.f32 %v1945, %v1915
      %v1947 = vadd.f32 %v1946, %v1916
      %v1948 = vadd.f32 %v1947, %v1917
      %v1949 = vadd.f32 %v1948, %v1918
      %v1950 = vadd.f32 %v1949, %v1919
      %v1951 = vadd.f32 %v1950, %v1920
      %v1952 = vadd.f32 %v1951, %v1921
      %v1953 = vadd.f32 %v1952, %v1922
      %v1954 = vadd.f32 %v1953, %v1923
      %v1955 = vadd.f32 %v1954, %v1924
      %v1956 = vadd.f32 %v1955, %v1925
      %v1957 = vadd.f32 %v1956, %v1926
      %v1958 = vadd.f32 %v1957, %v1927
      %v1959 = vadd.f32 %v1958, %v1928
      %v1960 = vadd.f32 %v1959, %v1929
      %v1961 = vadd.f32 %v1960, %v1930
      %v1962 = vadd.f32 %v1961, %v1931
      %v1963 = vadd.f32 %v1962, %v1932
      %v1964 = vadd.f32 %v1963, %v1933
      %v1965 = vadd.f32 %v1964, %v1934
      %v1966 = vadd.f32 %v1965, %v1935
      %v1967 = vadd.f32 %v1966, %v1936
      %v1968 = vadd.f32 %v1967, %v1937
      %v1969 = vadd.f32 %v1968, %v1938
      %v1970 = vadd.f32 %v1969, %v1939
      %v1971 = vadd.f32 %v1970, %v1940
      %v1972 = vadd.f32 %v1971, %v1941
      %v1973 = vadd.f32 %v1972, %v1942
      %v1974 = vadd.f32 %v1973, %v1943
      %v1975 = vadd.f32 %v1974, %v1944
      %v1976 = vrot.slane %v1975, 4
      %v1977 = vadd.f32 %v1975, %v1976
      %v1978 = vrot.slane %v1977, 2
      %v1979 = vadd.f32 %v1977, %v1978
      %v1980 = vrot.slane %v1979, 1
      %v1981 = vadd.f32 %v1979, %v1980
      %vm1982 = vcmask 1040384
      %v1983 = vsel %vm1982, %v1912, %v1981
      %1984 = vst [vmem:[%s181] sm:$0x3] %v1983
      %p1985 = scmp.lt.s32.totalorder %s15, 1
      %s1986 = scalar_select %p1985, %s15, 1
      %s1987 = smul.addr %s1986, 32
      %s1988 = smul.addr %s1987, 8
      %s1989 = scalar_lea.vmem %s2, %s1988
      %p1990 = scmp.lt.s32.totalorder %s15, 1
      %s1991 = scalar_select %p1990, %s15, 1
      %s1992 = smul.addr %s1991, 2
      %s1993 = scalar_lea.vmem %s3, %s1992
      // Predicated region
      $region29: #{basic_block_forward.3} parent=27 // pred_check
        %p1994 = pneg %p80
      $region30: #{basic_block_forward.3} parent=27 // pred_check_branch
        %1996 = sbr.rel (%p1994) target = $region32
      $region31: #{basic_block_forward.3} parent=27 // pred_region
        _
      $region32: #{basic_block_forward.3} parent=27 // pred_fallthru
        _
      // Predicated region
      $region33: #{basic_block_forward.3} parent=27 // pred_check
        %p1997 = pneg %p106
      $region34: #{basic_block_forward.3} parent=27 // pred_check_branch
        %1999 = sbr.rel (%p1997) target = $region36
      $region35: #{basic_block_forward.3} parent=27 // pred_region
        _
      $region36: #{basic_block_forward.3} parent=27 // pred_fallthru
        _
    $region28: #{basic_block_forward.3} parent=5 // pred_fallthru
      _
    %p2000 = scmp.le.s32.totalorder 2, %s10
    // Predicated region
    $region37: #{basic_block_forward.3} parent=5 // pred_check
      %p2001 = pneg %p2000
    $region38: #{basic_block_forward.3} parent=5 // pred_check_branch
      %2003 = sbr.rel (%p2001) target = $region40
    $region39: #{basic_block_forward.3} parent=5 // pred_region
      %s2004 = ssub.s32 %s10, 2
      // Predicated region
      $region41: #{basic_block_forward.3} parent=39 // pred_check
        %p2005 = pneg %p86
      $region42: #{basic_block_forward.3} parent=39 // pred_check_branch
        %2007 = sbr.rel (%p2005) target = $region44
      $region43: #{basic_block_forward.3} parent=39 // pred_region
        %p2008 = scmp.lt.s32.totalorder %s16, 1
        %s2009 = scalar_select %p2008, %s16, 1
        %s2010 = smul.addr %s2009, 32
        %s2011 = smul.addr %s2010, 8
        %s2012 = scalar_lea.vmem %s2, %s2011
      $region44: #{basic_block_forward.3} parent=39 // pred_fallthru
        _
      // Predicated region
      $region45: #{basic_block_forward.3} parent=39 // pred_check
        %p2013 = pneg %p112
      $region46: #{basic_block_forward.3} parent=39 // pred_check_branch
        %2015 = sbr.rel (%p2013) target = $region48
      $region47: #{basic_block_forward.3} parent=39 // pred_region
        %p2016 = scmp.lt.s32.totalorder %s16, 1
        %s2017 = scalar_select %p2016, %s16, 1
        %s2018 = smul.addr %s2017, 2
        %s2019 = scalar_lea.vmem %s3, %s2018
      $region48: #{basic_block_forward.3} parent=39 // pred_fallthru
        _
    $region40: #{basic_block_forward.3} parent=5 // pred_fallthru
      _
  $region6: #{basic_block_forward.3} parent=0 // loop_footer
    %s14 = sadd.s32 1, %s10
  $region7: #{basic_block_forward.3} parent=0 // loop_footer_branch
    %9 = sbr.rel target = $region3
  $region8: #{basic_block_forward.3} parent=0 // loop_exit
    _

</llo_original>
